<compile_context>
chip_gen: v6e
topology: v6e:2x2x1
jax: 0.10.0
libtpu: 0.0.40
codegen_flags: <defaults>
</compile_context>

<pallas_src>
import functools

import jax
import jax.numpy as jnp
from jax.experimental import pallas as pl
from jax.experimental.pallas import tpu as pltpu

LANES = 128
VMEM_SPEC = pl.BlockSpec(memory_space=pltpu.MemorySpace.VMEM)


# ---------------------------------------------------------------------------
# Fused denoiser kernel
# ---------------------------------------------------------------------------
# W_stack layout (22, 128, 128):            B_stack layout (18, 1, 128):
#   0 encode1         1 encode2               0 t_embed weight row   1 t_embed bias
#   2+6k .. 7+6k conv{k}:                     2 encode1 bias         3 encode2 bias
#     +0 W_src  +1 W_dst  +2 W_rel2           4+4k .. 7+4k conv{k}:
#     +3 W_x    +4 W_agg  +5 W_obj2             +0 rel1 bias (+ folded ones-row)
#   20 decode1       21 decode2                 +1 rel2 bias +2 obj1 bias +3 obj2 bias
#                                             16 decode1 bias  17 decode2 bias
def _ddpm_fused_kernel(x_ref, eps_ref, meta_ref, src_ref, dstc_ref, dstr_ref,
                       batch_ref, w_ref, b_ref, pert_ref, pred_ref):
    f32 = jnp.float32
    n = x_ref.shape[0]
    e = src_ref.shape[0]
    nb = meta_ref.shape[0]

    # One-hot gather/scatter/select matrices, built once in-kernel (iota + compare)
    # and reused by all three interaction-network layers.
    node_iota = jax.lax.broadcasted_iota(jnp.int32, (e, n), 1)
    g_src = (node_iota == src_ref[...]).astype(f32)                  # [E, N] gather senders
    g_dst = (node_iota == dstc_ref[...]).astype(f32)                 # [E, N] gather receivers
    s_recv = (jax.lax.broadcasted_iota(jnp.int32, (n, e), 1)
              == dstr_ref[...]).astype(f32)                          # [N, E] scatter-add
    bsel = (jax.lax.broadcasted_iota(jnp.int32, (n, nb), 1)
            == batch_ref[...]).astype(f32)                           # [N, B] batch select

    # Per-graph meta (t, sqrt(alpha_bar), sqrt(1-alpha_bar)) -> per-node rows.
    meta_n = jnp.dot(bsel, meta_ref[...], preferred_element_type=f32)  # [N, 128]
    t_n = meta_n[:, 0:1]
    sa_n = meta_n[:, 1:2]
    sb_n = meta_n[:, 2:3]

    # Forward diffusion mix (padded lanes of x/eps are zero -> stay zero).
    noisy = x_ref[...] * sa_n + eps_ref[...] * sb_n                  # [N, 128]
    pert_ref[...] = noisy

    # Timestep embedding per node: relu(t * Wt + bt) == relu(Linear(t))[batch_index]
    t_emb = jnp.maximum(t_n * b_ref[0] + b_ref[1], 0.0)              # [N, 128]

    def linear(h, wi, bi, relu):
        y = jnp.dot(h, w_ref[wi], preferred_element_type=f32) + b_ref[bi]
        return jnp.maximum(y, 0.0) if relu else y

    # Encoder (+ fused timestep-embedding add)
    h = linear(noisy, 0, 2, True)                                    # encode1 + relu
    h = linear(h, 1, 3, False) + t_emb                               # encode2 + t_embed

    # TODO(synk): InteractionNetwork was not defined in the reference source; a standard
    # Battaglia-style interaction network (edge MLP on [x_src, x_dst, rel_attr=1] ->
    # receiver scatter-add -> node MLP on [x, agg]) is assumed here.
    def interaction(h, w0, b0, relu_out):
        x_src = jnp.dot(g_src, h, preferred_element_type=f32)        # [E, 128]
        x_dst = jnp.dot(g_dst, h, preferred_element_type=f32)        # [E, 128]
        # rel1 with split weights (concat-free); all-ones rel_attr row folded into bias.
        m = jnp.dot(x_src, w_ref[w0], preferred_element_type=f32)
        m = m + jnp.dot(x_dst, w_ref[w0 + 1], preferred_element_type=f32)
        m = jnp.maximum(m + b_ref[b0], 0.0)                          # [E, 128]
        eff = jnp.dot(m, w_ref[w0 + 2], preferred_element_type=f32) + b_ref[b0 + 1]
        # scatter-add of edge effects onto receiver nodes (dense one-hot matmul on MXU)
        agg = jnp.dot(s_recv, eff, preferred_element_type=f32)       # [N, 128]
        # obj1 with split weights (concat-free)
        o = jnp.dot(h, w_ref[w0 + 3], preferred_element_type=f32)
        o = o + jnp.dot(agg, w_ref[w0 + 4], preferred_element_type=f32)
        o = jnp.maximum(o + b_ref[b0 + 2], 0.0)                      # [N, 128]
        out = jnp.dot(o, w_ref[w0 + 5], preferred_element_type=f32) + b_ref[b0 + 3]
        return jnp.maximum(out, 0.0) if relu_out else out

    h = interaction(h, 2, 4, True)       # conv1 (+ outer relu)
    h = interaction(h, 8, 8, True)       # conv2 (+ outer relu)
    h = interaction(h, 14, 12, False)    # conv3

    # Decoder (decode2 weight zero-padded to 128 output lanes -> lane-dense store)
    h = linear(h, 20, 16, True)
    pred_ref[...] = linear(h, 21, 17, False)


# ---------------------------------------------------------------------------
# Parameter initialization (torch.nn.Linear-style uniform) + packing/padding
# ---------------------------------------------------------------------------
def _init_linear_raw(key, fan_in, fan_out):
    k1, k2 = jax.random.split(key)
    bound = 1.0 / jnp.sqrt(jnp.float32(fan_in))
    w = jax.random.uniform(k1, (fan_in, fan_out), jnp.float32, -bound, bound)
    b = jax.random.uniform(k2, (1, fan_out), jnp.float32, -bound, bound)
    return w, b


def _pad_w(w):
    out = jnp.zeros((LANES, LANES), jnp.float32)
    return out.at[:w.shape[0], :w.shape[1]].set(w)


def _pad_b(b):
    out = jnp.zeros((1, LANES), jnp.float32)
    return out.at[:, :b.shape[1]].set(b)


def init_packed_params(key, in_channels, hidden, out_channels):
    h = hidden
    keys = jax.random.split(key, 8)
    wt, bt = _init_linear_raw(keys[0], 1, h)
    w_e1, b_e1 = _init_linear_raw(keys[1], in_channels, h)
    w_e2, b_e2 = _init_linear_raw(keys[2], h, h)
    convs = []
    for i in range(3):
        ck = jax.random.split(keys[3 + i], 4)
        w_r1, b_r1 = _init_linear_raw(ck[0], 2 * h + 1, 128)
        w_r2, b_r2 = _init_linear_raw(ck[1], 128, 128)
        w_o1, b_o1 = _init_linear_raw(ck[2], h + 128, 128)
        w_o2, b_o2 = _init_linear_raw(ck[3], 128, h)
        convs.append((w_r1, b_r1, w_r2, b_r2, w_o1, b_o1, w_o2, b_o2))
    w_d1, b_d1 = _init_linear_raw(keys[6], h, h)
    w_d2, b_d2 = _init_linear_raw(keys[7], h, out_channels)

    w_list = [_pad_w(w_e1), _pad_w(w_e2)]
    b_list = [_pad_b(wt), _pad_b(bt), _pad_b(b_e1), _pad_b(b_e2)]
    for (w_r1, b_r1, w_r2, b_r2, w_o1, b_o1, w_o2, b_o2) in convs:
        w_a = w_r1[:h]            # multiplies x[src]
        w_b = w_r1[h:2 * h]       # multiplies x[dst]
        w_ones = w_r1[2 * h:]     # rel_attr (all-ones) row -> fold into bias
        w_x = w_o1[:h]            # multiplies node state
        w_agg = w_o1[h:]          # multiplies aggregated effects
        w_list += [_pad_w(w_a), _pad_w(w_b), _pad_w(w_r2),
                   _pad_w(w_x), _pad_w(w_agg), _pad_w(w_o2)]
        b_list += [_pad_b(b_r1 + w_ones), _pad_b(b_r2), _pad_b(b_o1), _pad_b(b_o2)]
    w_list += [_pad_w(w_d1), _pad_w(w_d2)]
    b_list += [_pad_b(b_d1), _pad_b(b_d2)]

    w_stack = jnp.stack(w_list, axis=0)       # [22, 128, 128]
    b_stack = jnp.stack(b_list, axis=0)       # [18, 1, 128]
    return w_stack, b_stack


# ---------------------------------------------------------------------------
# Full forward (RNG + tiny glue + one fused Pallas kernel)
# ---------------------------------------------------------------------------
@functools.partial(jax.jit, static_argnames=("batch_size", "timesteps", "out_channels"))
def ddpm_forward(key, x_zeros, edge_index, batch_index, w_stack, b_stack,
                 sqrt_alpha_bars, sqrt_one_minus_alpha_bars,
                 *, batch_size, timesteps, out_channels):
    kt, ke = jax.random.split(key)
    t = jax.random.randint(kt, (batch_size,), 0, timesteps, dtype=jnp.int32)
    epsilon = jax.random.normal(ke, x_zeros.shape, jnp.float32)

    n, c_in = x_zeros.shape
    x_pad = jnp.zeros((n, LANES), jnp.float32).at[:, :c_in].set(x_zeros)
    eps_pad = jnp.zeros((n, LANES), jnp.float32).at[:, :c_in].set(epsilon)

    # Per-graph meta row: [t, sqrt(alpha_bar_t), sqrt(1 - alpha_bar_t), 0, ...]
    meta = jnp.zeros((batch_size, LANES), jnp.float32)
    meta = meta.at[:, 0].set(t.astype(jnp.float32))
    meta = meta.at[:, 1].set(sqrt_alpha_bars[t])
    meta = meta.at[:, 2].set(sqrt_one_minus_alpha_bars[t])

    src_col = edge_index[0][:, None].astype(jnp.int32)      # [E, 1]
    dst_col = edge_index[1][:, None].astype(jnp.int32)      # [E, 1]
    dst_row = edge_index[1][None, :].astype(jnp.int32)      # [1, E]
    batch_col = batch_index[:, None].astype(jnp.int32)      # [N, 1]

    pert_pad, pred_pad = pl.pallas_call(
        _ddpm_fused_kernel,
        out_shape=(jax.ShapeDtypeStruct((n, LANES), jnp.float32),
                   jax.ShapeDtypeStruct((n, LANES), jnp.float32)),
        in_specs=[VMEM_SPEC] * 9,
        out_specs=(VMEM_SPEC, VMEM_SPEC),
    )(x_pad, eps_pad, meta, src_col, dst_col, dst_row, batch_col, w_stack, b_stack)

    return pert_pad[:, :c_in], epsilon, pred_pad[:, :out_channels]


class DDPM:
    def __init__(self, batch_size, timesteps=1000, beta_min=1e-4, beta_max=0.02, key=None):
        self.batch_size = batch_size
        self.timesteps = timesteps
        self.betas = jnp.linspace(beta_min, beta_max, timesteps, dtype=jnp.float32)
        self.sqrt_betas = jnp.sqrt(self.betas)
        self.alphas = 1.0 - self.betas
        self.sqrt_alphas = jnp.sqrt(self.alphas)
        self.alpha_bars = jnp.cumprod(self.alphas)
        self.sqrt_one_minus_alpha_bars = jnp.sqrt(1.0 - self.alpha_bars)
        self.sqrt_alpha_bars = jnp.sqrt(self.alpha_bars)
        self.in_channels = 2
        self.out_channels = 2
        self.w_stack, self.b_stack = init_packed_params(
            key, in_channels=2, hidden=32, out_channels=2)

    def forward(self, key, x_zeros, edge_index, batch_index):
        return ddpm_forward(
            key, x_zeros, edge_index, batch_index,
            self.w_stack, self.b_stack,
            self.sqrt_alpha_bars, self.sqrt_one_minus_alpha_bars,
            batch_size=self.batch_size, timesteps=self.timesteps,
            out_channels=self.out_channels)


# ---------------------------------------------------------------------------
# Example run
# ---------------------------------------------------------------------------
if __name__ == "__main__":
    key = jax.random.PRNGKey(0)
    k_param, k_x, k_fwd = jax.random.split(key, 3)

    batch_size = 2
    nodes_per_graph = 8
    n_nodes = batch_size * nodes_per_graph                           # 16 nodes
    x_zeros = jax.random.normal(k_x, (n_nodes, 2), jnp.float32)      # data.x  [N, 2]
    batch_index = jnp.repeat(jnp.arange(batch_size, dtype=jnp.int32), nodes_per_graph)

    # bidirectional ring edges within each graph -> edge_index [2, 32]
    senders, receivers = [], []
    for g in range(batch_size):
        base = g * nodes_per_graph
        for i in range(nodes_per_graph):
            a, b = base + i, base + (i + 1) % nodes_per_graph
            senders += [a, b]
            receivers += [b, a]
    edge_index = jnp.array([senders, receivers], dtype=jnp.int32)

    ddpm = DDPM(batch_size=batch_size, key=k_param)
    perturbed_x, epsilon, pred_epsilon = ddpm.forward(k_fwd, x_zeros, edge_index, batch_index)
    jax.block_until_ready((perturbed_x, epsilon, pred_epsilon))

    assert perturbed_x.shape == (n_nodes, 2)
    assert epsilon.shape == (n_nodes, 2)
    assert pred_epsilon.shape == (n_nodes, 2)
    print("KERNEL_OK")
</pallas_src>

<mosaic_0001>
module attributes {stable_mosaic.version = 11 : i64} {
  func.func @_ddpm_fused_kernel(%arg0: memref<16x128xf32, #tpu.memory_space<vmem>>, %arg1: memref<16x128xf32, #tpu.memory_space<vmem>>, %arg2: memref<2x128xf32, #tpu.memory_space<vmem>>, %arg3: memref<32x1xi32, #tpu.memory_space<vmem>>, %arg4: memref<32x1xi32, #tpu.memory_space<vmem>>, %arg5: memref<1x32xi32, #tpu.memory_space<vmem>>, %arg6: memref<16x1xi32, #tpu.memory_space<vmem>>, %arg7: memref<22x128x128xf32, #tpu.memory_space<vmem>>, %arg8: memref<18x1x128xf32, #tpu.memory_space<vmem>>, %arg9: memref<16x128xf32, #tpu.memory_space<vmem>>, %arg10: memref<16x128xf32, #tpu.memory_space<vmem>>) attributes {dimension_semantics = [], scalar_prefetch = 0 : i64, scratch_operands = 0 : i64, tpu.core_type = #tpu.core_type<tc>} {
    %0 = tpu.iota {dimensions = array<i32: 1>} : vector<32x16xi32>
    %c0 = arith.constant 0 : index
    %c0_0 = arith.constant 0 : index
    %1 = vector.load %arg3[%c0, %c0_0] : memref<32x1xi32, #tpu.memory_space<vmem>>, vector<32x1xi32>
    %2 = vector.broadcast %1 : vector<32x1xi32> to vector<32x16xi32>
    %3 = arith.cmpi eq, %0, %2 : vector<32x16xi32>
    %4 = arith.extui %3 : vector<32x16xi1> to vector<32x16xi32>
    %5 = arith.sitofp %4 : vector<32x16xi32> to vector<32x16xf32>
    %c0_1 = arith.constant 0 : index
    %c0_2 = arith.constant 0 : index
    %6 = vector.load %arg4[%c0_1, %c0_2] : memref<32x1xi32, #tpu.memory_space<vmem>>, vector<32x1xi32>
    %7 = vector.broadcast %6 : vector<32x1xi32> to vector<32x16xi32>
    %8 = arith.cmpi eq, %0, %7 : vector<32x16xi32>
    %9 = arith.extui %8 : vector<32x16xi1> to vector<32x16xi32>
    %10 = arith.sitofp %9 : vector<32x16xi32> to vector<32x16xf32>
    %11 = tpu.iota {dimensions = array<i32: 1>} : vector<16x32xi32>
    %c0_3 = arith.constant 0 : index
    %c0_4 = arith.constant 0 : index
    %12 = vector.load %arg5[%c0_3, %c0_4] : memref<1x32xi32, #tpu.memory_space<vmem>>, vector<1x32xi32>
    %13 = vector.broadcast %12 : vector<1x32xi32> to vector<16x32xi32>
    %14 = arith.cmpi eq, %11, %13 : vector<16x32xi32>
    %15 = arith.extui %14 : vector<16x32xi1> to vector<16x32xi32>
    %16 = arith.sitofp %15 : vector<16x32xi32> to vector<16x32xf32>
    %17 = tpu.iota {dimensions = array<i32: 1>} : vector<16x2xi32>
    %c0_5 = arith.constant 0 : index
    %c0_6 = arith.constant 0 : index
    %18 = vector.load %arg6[%c0_5, %c0_6] : memref<16x1xi32, #tpu.memory_space<vmem>>, vector<16x1xi32>
    %19 = vector.broadcast %18 : vector<16x1xi32> to vector<16x2xi32>
    %20 = arith.cmpi eq, %17, %19 : vector<16x2xi32>
    %21 = arith.extui %20 : vector<16x2xi1> to vector<16x2xi32>
    %22 = arith.sitofp %21 : vector<16x2xi32> to vector<16x2xf32>
    %c0_7 = arith.constant 0 : index
    %c0_8 = arith.constant 0 : index
    %23 = vector.load %arg2[%c0_7, %c0_8] : memref<2x128xf32, #tpu.memory_space<vmem>>, vector<2x128xf32>
    %cst = arith.constant dense<0.000000e+00> : vector<16x128xf32>
    %24 = tpu.matmul %22, %23, %cst {dimension_numbers = #tpu.dot_dimension_numbers<[1], [0], [0], [1], [0, 0, 1, 1], [], []>} : vector<16x2xf32>, vector<2x128xf32>, vector<16x128xf32> -> vector<16x128xf32>
    %25 = vector.extract_strided_slice %24 {offsets = [0, 0], sizes = [16, 1], strides = [1, 1]} : vector<16x128xf32> to vector<16x1xf32>
    %26 = vector.extract_strided_slice %24 {offsets = [0, 1], sizes = [16, 1], strides = [1, 1]} : vector<16x128xf32> to vector<16x1xf32>
    %27 = vector.extract_strided_slice %24 {offsets = [0, 2], sizes = [16, 1], strides = [1, 1]} : vector<16x128xf32> to vector<16x1xf32>
    %c0_9 = arith.constant 0 : index
    %c0_10 = arith.constant 0 : index
    %28 = vector.load %arg0[%c0_9, %c0_10] : memref<16x128xf32, #tpu.memory_space<vmem>>, vector<16x128xf32>
    %29 = vector.broadcast %26 : vector<16x1xf32> to vector<16x128xf32>
    %30 = arith.mulf %28, %29 : vector<16x128xf32>
    %c0_11 = arith.constant 0 : index
    %c0_12 = arith.constant 0 : index
    %31 = vector.load %arg1[%c0_11, %c0_12] : memref<16x128xf32, #tpu.memory_space<vmem>>, vector<16x128xf32>
    %32 = vector.broadcast %27 : vector<16x1xf32> to vector<16x128xf32>
    %33 = arith.mulf %31, %32 : vector<16x128xf32>
    %34 = arith.addf %30, %33 : vector<16x128xf32>
    %c0_13 = arith.constant 0 : index
    %c0_14 = arith.constant 0 : index
    %35 = vector.load %arg9[%c0_13, %c0_14] : memref<16x128xf32, #tpu.memory_space<vmem>>, vector<16x128xf32>
    tpu.vector_store %arg9[%c0_13, %c0_14], %34 {strides = array<i32>} : memref<16x128xf32, #tpu.memory_space<vmem>>, vector<16x128xf32>,
    %c0_15 = arith.constant 0 : index
    %c0_16 = arith.constant 0 : index
    %c0_17 = arith.constant 0 : index
    %36 = vector.load %arg8[%c0_15, %c0_16, %c0_17] : memref<18x1x128xf32, #tpu.memory_space<vmem>>, vector<1x1x128xf32>
    %37 = vector.shape_cast %36 : vector<1x1x128xf32> to vector<1x128xf32>
    %38 = vector.broadcast %25 : vector<16x1xf32> to vector<16x128xf32>
    %39 = vector.broadcast %37 : vector<1x128xf32> to vector<16x128xf32>
    %40 = arith.mulf %38, %39 : vector<16x128xf32>
    %c1 = arith.constant 1 : index
    %c0_18 = arith.constant 0 : index
    %c0_19 = arith.constant 0 : index
    %41 = vector.load %arg8[%c1, %c0_18, %c0_19] : memref<18x1x128xf32, #tpu.memory_space<vmem>>, vector<1x1x128xf32>
    %42 = vector.shape_cast %41 : vector<1x1x128xf32> to vector<1x128xf32>
    %43 = vector.broadcast %42 : vector<1x128xf32> to vector<16x128xf32>
    %44 = arith.addf %40, %43 : vector<16x128xf32>
    %cst_20 = arith.constant 0.000000e+00 : f32
    %45 = vector.broadcast %cst_20 : f32 to vector<16x128xf32>
    %46 = arith.maximumf %44, %45 : vector<16x128xf32>
    %c0_21 = arith.constant 0 : index
    %c0_22 = arith.constant 0 : index
    %c0_23 = arith.constant 0 : index
    %47 = vector.load %arg7[%c0_21, %c0_22, %c0_23] : memref<22x128x128xf32, #tpu.memory_space<vmem>>, vector<1x128x128xf32>
    %48 = vector.shape_cast %47 : vector<1x128x128xf32> to vector<128x128xf32>
    %cst_24 = arith.constant dense<0.000000e+00> : vector<16x128xf32>
    %49 = tpu.matmul %34, %48, %cst_24 {dimension_numbers = #tpu.dot_dimension_numbers<[1], [0], [0], [1], [0, 0, 1, 1], [], []>} : vector<16x128xf32>, vector<128x128xf32>, vector<16x128xf32> -> vector<16x128xf32>
    %c2 = arith.constant 2 : index
    %c0_25 = arith.constant 0 : index
    %c0_26 = arith.constant 0 : index
    %50 = vector.load %arg8[%c2, %c0_25, %c0_26] : memref<18x1x128xf32, #tpu.memory_space<vmem>>, vector<1x1x128xf32>
    %51 = vector.shape_cast %50 : vector<1x1x128xf32> to vector<1x128xf32>
    %52 = vector.broadcast %51 : vector<1x128xf32> to vector<16x128xf32>
    %53 = arith.addf %49, %52 : vector<16x128xf32>
    %cst_27 = arith.constant 0.000000e+00 : f32
    %54 = vector.broadcast %cst_27 : f32 to vector<16x128xf32>
    %55 = arith.maximumf %53, %54 : vector<16x128xf32>
    %c1_28 = arith.constant 1 : index
    %c0_29 = arith.constant 0 : index
    %c0_30 = arith.constant 0 : index
    %56 = vector.load %arg7[%c1_28, %c0_29, %c0_30] : memref<22x128x128xf32, #tpu.memory_space<vmem>>, vector<1x128x128xf32>
    %57 = vector.shape_cast %56 : vector<1x128x128xf32> to vector<128x128xf32>
    %cst_31 = arith.constant dense<0.000000e+00> : vector<16x128xf32>
    %58 = tpu.matmul %55, %57, %cst_31 {dimension_numbers = #tpu.dot_dimension_numbers<[1], [0], [0], [1], [0, 0, 1, 1], [], []>} : vector<16x128xf32>, vector<128x128xf32>, vector<16x128xf32> -> vector<16x128xf32>
    %c3 = arith.constant 3 : index
    %c0_32 = arith.constant 0 : index
    %c0_33 = arith.constant 0 : index
    %59 = vector.load %arg8[%c3, %c0_32, %c0_33] : memref<18x1x128xf32, #tpu.memory_space<vmem>>, vector<1x1x128xf32>
    %60 = vector.shape_cast %59 : vector<1x1x128xf32> to vector<1x128xf32>
    %61 = vector.broadcast %60 : vector<1x128xf32> to vector<16x128xf32>
    %62 = arith.addf %58, %61 : vector<16x128xf32>
    %63 = arith.addf %62, %46 : vector<16x128xf32>
    %cst_34 = arith.constant dense<0.000000e+00> : vector<32x128xf32>
    %64 = tpu.matmul %5, %63, %cst_34 {dimension_numbers = #tpu.dot_dimension_numbers<[1], [0], [0], [1], [0, 0, 1, 1], [], []>} : vector<32x16xf32>, vector<16x128xf32>, vector<32x128xf32> -> vector<32x128xf32>
    %cst_35 = arith.constant dense<0.000000e+00> : vector<32x128xf32>
    %65 = tpu.matmul %10, %63, %cst_35 {dimension_numbers = #tpu.dot_dimension_numbers<[1], [0], [0], [1], [0, 0, 1, 1], [], []>} : vector<32x16xf32>, vector<16x128xf32>, vector<32x128xf32> -> vector<32x128xf32>
    %c2_36 = arith.constant 2 : index
    %c0_37 = arith.constant 0 : index
    %c0_38 = arith.constant 0 : index
    %66 = vector.load %arg7[%c2_36, %c0_37, %c0_38] : memref<22x128x128xf32, #tpu.memory_space<vmem>>, vector<1x128x128xf32>
    %67 = vector.shape_cast %66 : vector<1x128x128xf32> to vector<128x128xf32>
    %cst_39 = arith.constant dense<0.000000e+00> : vector<32x128xf32>
    %68 = tpu.matmul %64, %67, %cst_39 {dimension_numbers = #tpu.dot_dimension_numbers<[1], [0], [0], [1], [0, 0, 1, 1], [], []>} : vector<32x128xf32>, vector<128x128xf32>, vector<32x128xf32> -> vector<32x128xf32>
    %c3_40 = arith.constant 3 : index
    %c0_41 = arith.constant 0 : index
    %c0_42 = arith.constant 0 : index
    %69 = vector.load %arg7[%c3_40, %c0_41, %c0_42] : memref<22x128x128xf32, #tpu.memory_space<vmem>>, vector<1x128x128xf32>
    %70 = vector.shape_cast %69 : vector<1x128x128xf32> to vector<128x128xf32>
    %cst_43 = arith.constant dense<0.000000e+00> : vector<32x128xf32>
    %71 = tpu.matmul %65, %70, %cst_43 {dimension_numbers = #tpu.dot_dimension_numbers<[1], [0], [0], [1], [0, 0, 1, 1], [], []>} : vector<32x128xf32>, vector<128x128xf32>, vector<32x128xf32> -> vector<32x128xf32>
    %72 = arith.addf %68, %71 : vector<32x128xf32>
    %c4 = arith.constant 4 : index
    %c0_44 = arith.constant 0 : index
    %c0_45 = arith.constant 0 : index
    %73 = vector.load %arg8[%c4, %c0_44, %c0_45] : memref<18x1x128xf32, #tpu.memory_space<vmem>>, vector<1x1x128xf32>
    %74 = vector.shape_cast %73 : vector<1x1x128xf32> to vector<1x128xf32>
    %75 = vector.broadcast %74 : vector<1x128xf32> to vector<32x128xf32>
    %76 = arith.addf %72, %75 : vector<32x128xf32>
    %cst_46 = arith.constant 0.000000e+00 : f32
    %77 = vector.broadcast %cst_46 : f32 to vector<32x128xf32>
    %78 = arith.maximumf %76, %77 : vector<32x128xf32>
    %c4_47 = arith.constant 4 : index
    %c0_48 = arith.constant 0 : index
    %c0_49 = arith.constant 0 : index
    %79 = vector.load %arg7[%c4_47, %c0_48, %c0_49] : memref<22x128x128xf32, #tpu.memory_space<vmem>>, vector<1x128x128xf32>
    %80 = vector.shape_cast %79 : vector<1x128x128xf32> to vector<128x128xf32>
    %cst_50 = arith.constant dense<0.000000e+00> : vector<32x128xf32>
    %81 = tpu.matmul %78, %80, %cst_50 {dimension_numbers = #tpu.dot_dimension_numbers<[1], [0], [0], [1], [0, 0, 1, 1], [], []>} : vector<32x128xf32>, vector<128x128xf32>, vector<32x128xf32> -> vector<32x128xf32>
    %c5 = arith.constant 5 : index
    %c0_51 = arith.constant 0 : index
    %c0_52 = arith.constant 0 : index
    %82 = vector.load %arg8[%c5, %c0_51, %c0_52] : memref<18x1x128xf32, #tpu.memory_space<vmem>>, vector<1x1x128xf32>
    %83 = vector.shape_cast %82 : vector<1x1x128xf32> to vector<1x128xf32>
    %84 = vector.broadcast %83 : vector<1x128xf32> to vector<32x128xf32>
    %85 = arith.addf %81, %84 : vector<32x128xf32>
    %cst_53 = arith.constant dense<0.000000e+00> : vector<16x128xf32>
    %86 = tpu.matmul %16, %85, %cst_53 {dimension_numbers = #tpu.dot_dimension_numbers<[1], [0], [0], [1], [0, 0, 1, 1], [], []>} : vector<16x32xf32>, vector<32x128xf32>, vector<16x128xf32> -> vector<16x128xf32>
    %c5_54 = arith.constant 5 : index
    %c0_55 = arith.constant 0 : index
    %c0_56 = arith.constant 0 : index
    %87 = vector.load %arg7[%c5_54, %c0_55, %c0_56] : memref<22x128x128xf32, #tpu.memory_space<vmem>>, vector<1x128x128xf32>
    %88 = vector.shape_cast %87 : vector<1x128x128xf32> to vector<128x128xf32>
    %cst_57 = arith.constant dense<0.000000e+00> : vector<16x128xf32>
    %89 = tpu.matmul %63, %88, %cst_57 {dimension_numbers = #tpu.dot_dimension_numbers<[1], [0], [0], [1], [0, 0, 1, 1], [], []>} : vector<16x128xf32>, vector<128x128xf32>, vector<16x128xf32> -> vector<16x128xf32>
    %c6 = arith.constant 6 : index
    %c0_58 = arith.constant 0 : index
    %c0_59 = arith.constant 0 : index
    %90 = vector.load %arg7[%c6, %c0_58, %c0_59] : memref<22x128x128xf32, #tpu.memory_space<vmem>>, vector<1x128x128xf32>
    %91 = vector.shape_cast %90 : vector<1x128x128xf32> to vector<128x128xf32>
    %cst_60 = arith.constant dense<0.000000e+00> : vector<16x128xf32>
    %92 = tpu.matmul %86, %91, %cst_60 {dimension_numbers = #tpu.dot_dimension_numbers<[1], [0], [0], [1], [0, 0, 1, 1], [], []>} : vector<16x128xf32>, vector<128x128xf32>, vector<16x128xf32> -> vector<16x128xf32>
    %93 = arith.addf %89, %92 : vector<16x128xf32>
    %c6_61 = arith.constant 6 : index
    %c0_62 = arith.constant 0 : index
    %c0_63 = arith.constant 0 : index
    %94 = vector.load %arg8[%c6_61, %c0_62, %c0_63] : memref<18x1x128xf32, #tpu.memory_space<vmem>>, vector<1x1x128xf32>
    %95 = vector.shape_cast %94 : vector<1x1x128xf32> to vector<1x128xf32>
    %96 = vector.broadcast %95 : vector<1x128xf32> to vector<16x128xf32>
    %97 = arith.addf %93, %96 : vector<16x128xf32>
    %cst_64 = arith.constant 0.000000e+00 : f32
    %98 = vector.broadcast %cst_64 : f32 to vector<16x128xf32>
    %99 = arith.maximumf %97, %98 : vector<16x128xf32>
    %c7 = arith.constant 7 : index
    %c0_65 = arith.constant 0 : index
    %c0_66 = arith.constant 0 : index
    %100 = vector.load %arg7[%c7, %c0_65, %c0_66] : memref<22x128x128xf32, #tpu.memory_space<vmem>>, vector<1x128x128xf32>
    %101 = vector.shape_cast %100 : vector<1x128x128xf32> to vector<128x128xf32>
    %cst_67 = arith.constant dense<0.000000e+00> : vector<16x128xf32>
    %102 = tpu.matmul %99, %101, %cst_67 {dimension_numbers = #tpu.dot_dimension_numbers<[1], [0], [0], [1], [0, 0, 1, 1], [], []>} : vector<16x128xf32>, vector<128x128xf32>, vector<16x128xf32> -> vector<16x128xf32>
    %c7_68 = arith.constant 7 : index
    %c0_69 = arith.constant 0 : index
    %c0_70 = arith.constant 0 : index
    %103 = vector.load %arg8[%c7_68, %c0_69, %c0_70] : memref<18x1x128xf32, #tpu.memory_space<vmem>>, vector<1x1x128xf32>
    %104 = vector.shape_cast %103 : vector<1x1x128xf32> to vector<1x128xf32>
    %105 = vector.broadcast %104 : vector<1x128xf32> to vector<16x128xf32>
    %106 = arith.addf %102, %105 : vector<16x128xf32>
    %cst_71 = arith.constant 0.000000e+00 : f32
    %107 = vector.broadcast %cst_71 : f32 to vector<16x128xf32>
    %108 = arith.maximumf %106, %107 : vector<16x128xf32>
    %cst_72 = arith.constant dense<0.000000e+00> : vector<32x128xf32>
    %109 = tpu.matmul %5, %108, %cst_72 {dimension_numbers = #tpu.dot_dimension_numbers<[1], [0], [0], [1], [0, 0, 1, 1], [], []>} : vector<32x16xf32>, vector<16x128xf32>, vector<32x128xf32> -> vector<32x128xf32>
    %cst_73 = arith.constant dense<0.000000e+00> : vector<32x128xf32>
    %110 = tpu.matmul %10, %108, %cst_73 {dimension_numbers = #tpu.dot_dimension_numbers<[1], [0], [0], [1], [0, 0, 1, 1], [], []>} : vector<32x16xf32>, vector<16x128xf32>, vector<32x128xf32> -> vector<32x128xf32>
    %c8 = arith.constant 8 : index
    %c0_74 = arith.constant 0 : index
    %c0_75 = arith.constant 0 : index
    %111 = vector.load %arg7[%c8, %c0_74, %c0_75] : memref<22x128x128xf32, #tpu.memory_space<vmem>>, vector<1x128x128xf32>
    %112 = vector.shape_cast %111 : vector<1x128x128xf32> to vector<128x128xf32>
    %cst_76 = arith.constant dense<0.000000e+00> : vector<32x128xf32>
    %113 = tpu.matmul %109, %112, %cst_76 {dimension_numbers = #tpu.dot_dimension_numbers<[1], [0], [0], [1], [0, 0, 1, 1], [], []>} : vector<32x128xf32>, vector<128x128xf32>, vector<32x128xf32> -> vector<32x128xf32>
    %c9 = arith.constant 9 : index
    %c0_77 = arith.constant 0 : index
    %c0_78 = arith.constant 0 : index
    %114 = vector.load %arg7[%c9, %c0_77, %c0_78] : memref<22x128x128xf32, #tpu.memory_space<vmem>>, vector<1x128x128xf32>
    %115 = vector.shape_cast %114 : vector<1x128x128xf32> to vector<128x128xf32>
    %cst_79 = arith.constant dense<0.000000e+00> : vector<32x128xf32>
    %116 = tpu.matmul %110, %115, %cst_79 {dimension_numbers = #tpu.dot_dimension_numbers<[1], [0], [0], [1], [0, 0, 1, 1], [], []>} : vector<32x128xf32>, vector<128x128xf32>, vector<32x128xf32> -> vector<32x128xf32>
    %117 = arith.addf %113, %116 : vector<32x128xf32>
    %c8_80 = arith.constant 8 : index
    %c0_81 = arith.constant 0 : index
    %c0_82 = arith.constant 0 : index
    %118 = vector.load %arg8[%c8_80, %c0_81, %c0_82] : memref<18x1x128xf32, #tpu.memory_space<vmem>>, vector<1x1x128xf32>
    %119 = vector.shape_cast %118 : vector<1x1x128xf32> to vector<1x128xf32>
    %120 = vector.broadcast %119 : vector<1x128xf32> to vector<32x128xf32>
    %121 = arith.addf %117, %120 : vector<32x128xf32>
    %cst_83 = arith.constant 0.000000e+00 : f32
    %122 = vector.broadcast %cst_83 : f32 to vector<32x128xf32>
    %123 = arith.maximumf %121, %122 : vector<32x128xf32>
    %c10 = arith.constant 10 : index
    %c0_84 = arith.constant 0 : index
    %c0_85 = arith.constant 0 : index
    %124 = vector.load %arg7[%c10, %c0_84, %c0_85] : memref<22x128x128xf32, #tpu.memory_space<vmem>>, vector<1x128x128xf32>
    %125 = vector.shape_cast %124 : vector<1x128x128xf32> to vector<128x128xf32>
    %cst_86 = arith.constant dense<0.000000e+00> : vector<32x128xf32>
    %126 = tpu.matmul %123, %125, %cst_86 {dimension_numbers = #tpu.dot_dimension_numbers<[1], [0], [0], [1], [0, 0, 1, 1], [], []>} : vector<32x128xf32>, vector<128x128xf32>, vector<32x128xf32> -> vector<32x128xf32>
    %c9_87 = arith.constant 9 : index
    %c0_88 = arith.constant 0 : index
    %c0_89 = arith.constant 0 : index
    %127 = vector.load %arg8[%c9_87, %c0_88, %c0_89] : memref<18x1x128xf32, #tpu.memory_space<vmem>>, vector<1x1x128xf32>
    %128 = vector.shape_cast %127 : vector<1x1x128xf32> to vector<1x128xf32>
    %129 = vector.broadcast %128 : vector<1x128xf32> to vector<32x128xf32>
    %130 = arith.addf %126, %129 : vector<32x128xf32>
    %cst_90 = arith.constant dense<0.000000e+00> : vector<16x128xf32>
    %131 = tpu.matmul %16, %130, %cst_90 {dimension_numbers = #tpu.dot_dimension_numbers<[1], [0], [0], [1], [0, 0, 1, 1], [], []>} : vector<16x32xf32>, vector<32x128xf32>, vector<16x128xf32> -> vector<16x128xf32>
    %c11 = arith.constant 11 : index
    %c0_91 = arith.constant 0 : index
    %c0_92 = arith.constant 0 : index
    %132 = vector.load %arg7[%c11, %c0_91, %c0_92] : memref<22x128x128xf32, #tpu.memory_space<vmem>>, vector<1x128x128xf32>
    %133 = vector.shape_cast %132 : vector<1x128x128xf32> to vector<128x128xf32>
    %cst_93 = arith.constant dense<0.000000e+00> : vector<16x128xf32>
    %134 = tpu.matmul %108, %133, %cst_93 {dimension_numbers = #tpu.dot_dimension_numbers<[1], [0], [0], [1], [0, 0, 1, 1], [], []>} : vector<16x128xf32>, vector<128x128xf32>, vector<16x128xf32> -> vector<16x128xf32>
    %c12 = arith.constant 12 : index
    %c0_94 = arith.constant 0 : index
    %c0_95 = arith.constant 0 : index
    %135 = vector.load %arg7[%c12, %c0_94, %c0_95] : memref<22x128x128xf32, #tpu.memory_space<vmem>>, vector<1x128x128xf32>
    %136 = vector.shape_cast %135 : vector<1x128x128xf32> to vector<128x128xf32>
    %cst_96 = arith.constant dense<0.000000e+00> : vector<16x128xf32>
    %137 = tpu.matmul %131, %136, %cst_96 {dimension_numbers = #tpu.dot_dimension_numbers<[1], [0], [0], [1], [0, 0, 1, 1], [], []>} : vector<16x128xf32>, vector<128x128xf32>, vector<16x128xf32> -> vector<16x128xf32>
    %138 = arith.addf %134, %137 : vector<16x128xf32>
    %c10_97 = arith.constant 10 : index
    %c0_98 = arith.constant 0 : index
    %c0_99 = arith.constant 0 : index
    %139 = vector.load %arg8[%c10_97, %c0_98, %c0_99] : memref<18x1x128xf32, #tpu.memory_space<vmem>>, vector<1x1x128xf32>
    %140 = vector.shape_cast %139 : vector<1x1x128xf32> to vector<1x128xf32>
    %141 = vector.broadcast %140 : vector<1x128xf32> to vector<16x128xf32>
    %142 = arith.addf %138, %141 : vector<16x128xf32>
    %cst_100 = arith.constant 0.000000e+00 : f32
    %143 = vector.broadcast %cst_100 : f32 to vector<16x128xf32>
    %144 = arith.maximumf %142, %143 : vector<16x128xf32>
    %c13 = arith.constant 13 : index
    %c0_101 = arith.constant 0 : index
    %c0_102 = arith.constant 0 : index
    %145 = vector.load %arg7[%c13, %c0_101, %c0_102] : memref<22x128x128xf32, #tpu.memory_space<vmem>>, vector<1x128x128xf32>
    %146 = vector.shape_cast %145 : vector<1x128x128xf32> to vector<128x128xf32>
    %cst_103 = arith.constant dense<0.000000e+00> : vector<16x128xf32>
    %147 = tpu.matmul %144, %146, %cst_103 {dimension_numbers = #tpu.dot_dimension_numbers<[1], [0], [0], [1], [0, 0, 1, 1], [], []>} : vector<16x128xf32>, vector<128x128xf32>, vector<16x128xf32> -> vector<16x128xf32>
    %c11_104 = arith.constant 11 : index
    %c0_105 = arith.constant 0 : index
    %c0_106 = arith.constant 0 : index
    %148 = vector.load %arg8[%c11_104, %c0_105, %c0_106] : memref<18x1x128xf32, #tpu.memory_space<vmem>>, vector<1x1x128xf32>
    %149 = vector.shape_cast %148 : vector<1x1x128xf32> to vector<1x128xf32>
    %150 = vector.broadcast %149 : vector<1x128xf32> to vector<16x128xf32>
    %151 = arith.addf %147, %150 : vector<16x128xf32>
    %cst_107 = arith.constant 0.000000e+00 : f32
    %152 = vector.broadcast %cst_107 : f32 to vector<16x128xf32>
    %153 = arith.maximumf %151, %152 : vector<16x128xf32>
    %cst_108 = arith.constant dense<0.000000e+00> : vector<32x128xf32>
    %154 = tpu.matmul %5, %153, %cst_108 {dimension_numbers = #tpu.dot_dimension_numbers<[1], [0], [0], [1], [0, 0, 1, 1], [], []>} : vector<32x16xf32>, vector<16x128xf32>, vector<32x128xf32> -> vector<32x128xf32>
    %cst_109 = arith.constant dense<0.000000e+00> : vector<32x128xf32>
    %155 = tpu.matmul %10, %153, %cst_109 {dimension_numbers = #tpu.dot_dimension_numbers<[1], [0], [0], [1], [0, 0, 1, 1], [], []>} : vector<32x16xf32>, vector<16x128xf32>, vector<32x128xf32> -> vector<32x128xf32>
    %c14 = arith.constant 14 : index
    %c0_110 = arith.constant 0 : index
    %c0_111 = arith.constant 0 : index
    %156 = vector.load %arg7[%c14, %c0_110, %c0_111] : memref<22x128x128xf32, #tpu.memory_space<vmem>>, vector<1x128x128xf32>
    %157 = vector.shape_cast %156 : vector<1x128x128xf32> to vector<128x128xf32>
    %cst_112 = arith.constant dense<0.000000e+00> : vector<32x128xf32>
    %158 = tpu.matmul %154, %157, %cst_112 {dimension_numbers = #tpu.dot_dimension_numbers<[1], [0], [0], [1], [0, 0, 1, 1], [], []>} : vector<32x128xf32>, vector<128x128xf32>, vector<32x128xf32> -> vector<32x128xf32>
    %c15 = arith.constant 15 : index
    %c0_113 = arith.constant 0 : index
    %c0_114 = arith.constant 0 : index
    %159 = vector.load %arg7[%c15, %c0_113, %c0_114] : memref<22x128x128xf32, #tpu.memory_space<vmem>>, vector<1x128x128xf32>
    %160 = vector.shape_cast %159 : vector<1x128x128xf32> to vector<128x128xf32>
    %cst_115 = arith.constant dense<0.000000e+00> : vector<32x128xf32>
    %161 = tpu.matmul %155, %160, %cst_115 {dimension_numbers = #tpu.dot_dimension_numbers<[1], [0], [0], [1], [0, 0, 1, 1], [], []>} : vector<32x128xf32>, vector<128x128xf32>, vector<32x128xf32> -> vector<32x128xf32>
    %162 = arith.addf %158, %161 : vector<32x128xf32>
    %c12_116 = arith.constant 12 : index
    %c0_117 = arith.constant 0 : index
    %c0_118 = arith.constant 0 : index
    %163 = vector.load %arg8[%c12_116, %c0_117, %c0_118] : memref<18x1x128xf32, #tpu.memory_space<vmem>>, vector<1x1x128xf32>
    %164 = vector.shape_cast %163 : vector<1x1x128xf32> to vector<1x128xf32>
    %165 = vector.broadcast %164 : vector<1x128xf32> to vector<32x128xf32>
    %166 = arith.addf %162, %165 : vector<32x128xf32>
    %cst_119 = arith.constant 0.000000e+00 : f32
    %167 = vector.broadcast %cst_119 : f32 to vector<32x128xf32>
    %168 = arith.maximumf %166, %167 : vector<32x128xf32>
    %c16 = arith.constant 16 : index
    %c0_120 = arith.constant 0 : index
    %c0_121 = arith.constant 0 : index
    %169 = vector.load %arg7[%c16, %c0_120, %c0_121] : memref<22x128x128xf32, #tpu.memory_space<vmem>>, vector<1x128x128xf32>
    %170 = vector.shape_cast %169 : vector<1x128x128xf32> to vector<128x128xf32>
    %cst_122 = arith.constant dense<0.000000e+00> : vector<32x128xf32>
    %171 = tpu.matmul %168, %170, %cst_122 {dimension_numbers = #tpu.dot_dimension_numbers<[1], [0], [0], [1], [0, 0, 1, 1], [], []>} : vector<32x128xf32>, vector<128x128xf32>, vector<32x128xf32> -> vector<32x128xf32>
    %c13_123 = arith.constant 13 : index
    %c0_124 = arith.constant 0 : index
    %c0_125 = arith.constant 0 : index
    %172 = vector.load %arg8[%c13_123, %c0_124, %c0_125] : memref<18x1x128xf32, #tpu.memory_space<vmem>>, vector<1x1x128xf32>
    %173 = vector.shape_cast %172 : vector<1x1x128xf32> to vector<1x128xf32>
    %174 = vector.broadcast %173 : vector<1x128xf32> to vector<32x128xf32>
    %175 = arith.addf %171, %174 : vector<32x128xf32>
    %cst_126 = arith.constant dense<0.000000e+00> : vector<16x128xf32>
    %176 = tpu.matmul %16, %175, %cst_126 {dimension_numbers = #tpu.dot_dimension_numbers<[1], [0], [0], [1], [0, 0, 1, 1], [], []>} : vector<16x32xf32>, vector<32x128xf32>, vector<16x128xf32> -> vector<16x128xf32>
    %c17 = arith.constant 17 : index
    %c0_127 = arith.constant 0 : index
    %c0_128 = arith.constant 0 : index
    %177 = vector.load %arg7[%c17, %c0_127, %c0_128] : memref<22x128x128xf32, #tpu.memory_space<vmem>>, vector<1x128x128xf32>
    %178 = vector.shape_cast %177 : vector<1x128x128xf32> to vector<128x128xf32>
    %cst_129 = arith.constant dense<0.000000e+00> : vector<16x128xf32>
    %179 = tpu.matmul %153, %178, %cst_129 {dimension_numbers = #tpu.dot_dimension_numbers<[1], [0], [0], [1], [0, 0, 1, 1], [], []>} : vector<16x128xf32>, vector<128x128xf32>, vector<16x128xf32> -> vector<16x128xf32>
    %c18 = arith.constant 18 : index
    %c0_130 = arith.constant 0 : index
    %c0_131 = arith.constant 0 : index
    %180 = vector.load %arg7[%c18, %c0_130, %c0_131] : memref<22x128x128xf32, #tpu.memory_space<vmem>>, vector<1x128x128xf32>
    %181 = vector.shape_cast %180 : vector<1x128x128xf32> to vector<128x128xf32>
    %cst_132 = arith.constant dense<0.000000e+00> : vector<16x128xf32>
    %182 = tpu.matmul %176, %181, %cst_132 {dimension_numbers = #tpu.dot_dimension_numbers<[1], [0], [0], [1], [0, 0, 1, 1], [], []>} : vector<16x128xf32>, vector<128x128xf32>, vector<16x128xf32> -> vector<16x128xf32>
    %183 = arith.addf %179, %182 : vector<16x128xf32>
    %c14_133 = arith.constant 14 : index
    %c0_134 = arith.constant 0 : index
    %c0_135 = arith.constant 0 : index
    %184 = vector.load %arg8[%c14_133, %c0_134, %c0_135] : memref<18x1x128xf32, #tpu.memory_space<vmem>>, vector<1x1x128xf32>
    %185 = vector.shape_cast %184 : vector<1x1x128xf32> to vector<1x128xf32>
    %186 = vector.broadcast %185 : vector<1x128xf32> to vector<16x128xf32>
    %187 = arith.addf %183, %186 : vector<16x128xf32>
    %cst_136 = arith.constant 0.000000e+00 : f32
    %188 = vector.broadcast %cst_136 : f32 to vector<16x128xf32>
    %189 = arith.maximumf %187, %188 : vector<16x128xf32>
    %c19 = arith.constant 19 : index
    %c0_137 = arith.constant 0 : index
    %c0_138 = arith.constant 0 : index
    %190 = vector.load %arg7[%c19, %c0_137, %c0_138] : memref<22x128x128xf32, #tpu.memory_space<vmem>>, vector<1x128x128xf32>
    %191 = vector.shape_cast %190 : vector<1x128x128xf32> to vector<128x128xf32>
    %cst_139 = arith.constant dense<0.000000e+00> : vector<16x128xf32>
    %192 = tpu.matmul %189, %191, %cst_139 {dimension_numbers = #tpu.dot_dimension_numbers<[1], [0], [0], [1], [0, 0, 1, 1], [], []>} : vector<16x128xf32>, vector<128x128xf32>, vector<16x128xf32> -> vector<16x128xf32>
    %c15_140 = arith.constant 15 : index
    %c0_141 = arith.constant 0 : index
    %c0_142 = arith.constant 0 : index
    %193 = vector.load %arg8[%c15_140, %c0_141, %c0_142] : memref<18x1x128xf32, #tpu.memory_space<vmem>>, vector<1x1x128xf32>
    %194 = vector.shape_cast %193 : vector<1x1x128xf32> to vector<1x128xf32>
    %195 = vector.broadcast %194 : vector<1x128xf32> to vector<16x128xf32>
    %196 = arith.addf %192, %195 : vector<16x128xf32>
    %c20 = arith.constant 20 : index
    %c0_143 = arith.constant 0 : index
    %c0_144 = arith.constant 0 : index
    %197 = vector.load %arg7[%c20, %c0_143, %c0_144] : memref<22x128x128xf32, #tpu.memory_space<vmem>>, vector<1x128x128xf32>
    %198 = vector.shape_cast %197 : vector<1x128x128xf32> to vector<128x128xf32>
    %cst_145 = arith.constant dense<0.000000e+00> : vector<16x128xf32>
    %199 = tpu.matmul %196, %198, %cst_145 {dimension_numbers = #tpu.dot_dimension_numbers<[1], [0], [0], [1], [0, 0, 1, 1], [], []>} : vector<16x128xf32>, vector<128x128xf32>, vector<16x128xf32> -> vector<16x128xf32>
    %c16_146 = arith.constant 16 : index
    %c0_147 = arith.constant 0 : index
    %c0_148 = arith.constant 0 : index
    %200 = vector.load %arg8[%c16_146, %c0_147, %c0_148] : memref<18x1x128xf32, #tpu.memory_space<vmem>>, vector<1x1x128xf32>
    %201 = vector.shape_cast %200 : vector<1x1x128xf32> to vector<1x128xf32>
    %202 = vector.broadcast %201 : vector<1x128xf32> to vector<16x128xf32>
    %203 = arith.addf %199, %202 : vector<16x128xf32>
    %cst_149 = arith.constant 0.000000e+00 : f32
    %204 = vector.broadcast %cst_149 : f32 to vector<16x128xf32>
    %205 = arith.maximumf %203, %204 : vector<16x128xf32>
    %c21 = arith.constant 21 : index
    %c0_150 = arith.constant 0 : index
    %c0_151 = arith.constant 0 : index
    %206 = vector.load %arg7[%c21, %c0_150, %c0_151] : memref<22x128x128xf32, #tpu.memory_space<vmem>>, vector<1x128x128xf32>
    %207 = vector.shape_cast %206 : vector<1x128x128xf32> to vector<128x128xf32>
    %cst_152 = arith.constant dense<0.000000e+00> : vector<16x128xf32>
    %208 = tpu.matmul %205, %207, %cst_152 {dimension_numbers = #tpu.dot_dimension_numbers<[1], [0], [0], [1], [0, 0, 1, 1], [], []>} : vector<16x128xf32>, vector<128x128xf32>, vector<16x128xf32> -> vector<16x128xf32>
    %c17_153 = arith.constant 17 : index
    %c0_154 = arith.constant 0 : index
    %c0_155 = arith.constant 0 : index
    %209 = vector.load %arg8[%c17_153, %c0_154, %c0_155] : memref<18x1x128xf32, #tpu.memory_space<vmem>>, vector<1x1x128xf32>
    %210 = vector.shape_cast %209 : vector<1x1x128xf32> to vector<1x128xf32>
    %211 = vector.broadcast %210 : vector<1x128xf32> to vector<16x128xf32>
    %212 = arith.addf %208, %211 : vector<16x128xf32>
    %c0_156 = arith.constant 0 : index
    %c0_157 = arith.constant 0 : index
    %213 = vector.load %arg10[%c0_156, %c0_157] : memref<16x128xf32, #tpu.memory_space<vmem>>, vector<16x128xf32>
    tpu.vector_store %arg10[%c0_156, %c0_157], %212 {strides = array<i32>} : memref<16x128xf32, #tpu.memory_space<vmem>>, vector<16x128xf32>,
    return
  }
}

</mosaic_0001>

<llo_original>
// kernel: ddpm_forward.21
$region0: #{ddpm_forward.21}
  #allocation0 [shape = 'u32[]', space=smem, size = 0x4, offset = 0x4, fixed_abs, tag = 'smem constant byte address 0x4 - core index']
  #allocation1 [shape = 'u32[144,128]{1,0:T(1,128)}', space=vmem, size = 0x12000, scoped, tag = 'internal scratch']
  %s0 = inlined_call_operand.vmem [shape: f32[16,128], index: 0, kind: input, shape index: {}]
  %s1 = inlined_call_operand.vmem [shape: f32[16,128], index: 1, kind: input, shape index: {}]
  %s2 = inlined_call_operand.vmem [shape: f32[2,128], index: 2, kind: input, shape index: {}]
  %s3 = inlined_call_operand.vmem [shape: s32[32,1], index: 3, kind: input, shape index: {}]
  %s4 = inlined_call_operand.vmem [shape: s32[32,1], index: 4, kind: input, shape index: {}]
  %s5 = inlined_call_operand.vmem [shape: s32[1,32], index: 5, kind: input, shape index: {}]
  %s6 = inlined_call_operand.vmem [shape: s32[16,1], index: 6, kind: input, shape index: {}]
  %s7 = inlined_call_operand.hbm [shape: f32[22,128,128], index: 7, kind: input, shape index: {}]
  %s8 = inlined_call_operand.hbm [shape: f32[18,1,128], index: 8, kind: input, shape index: {}]
  %s9 = inlined_call_operand.vmem [shape: f32[16,128], index: 9, kind: output, shape index: {0}]
  %s10 = inlined_call_operand.vmem [shape: f32[16,128], index: 10, kind: output, shape index: {1}]
  %11 = xla_tuple %s9, %s10
  %s12 = sld [smem:[#allocation0]]
  $region62: #{ddpm_forward.21} parent=0
    _
  %s14 = ssub.s32 1, %s12
  %s15 = scalar_select 0, %s14, %s12
  $region1: #{ddpm_forward.21} parent=0
    #allocation2 [shape = 'u8[1441792]{0}', space=vmem, size = 0x160000, scoped, tag = 'input window, operand 7, single buffered']
    #allocation3 [shape = 's32[1]{0}', space=sflag, size = 0x4, scoped, tag = 'scoped memory for ddpm_forward.21']
    #allocation4 [shape = 'u8[9216]{0}', space=vmem, size = 0x2400, scoped, tag = 'input window, operand 8, single buffered']
    #allocation5 [shape = 's32[1]{0}', space=sflag, size = 0x4, scoped, tag = 'scoped memory for ddpm_forward.21']
    %16 = vsyncpa [#allocation3], 0
    %17 = vsyncpa [#allocation5], 0
    // Predicated region
    $region2: #{ddpm_forward.21} parent=1 // pred_check
      _
    $region3: #{ddpm_forward.21} parent=1 // pred_check_branch
      %19 = sbr.rel (0) target = $region5
    $region4: #{ddpm_forward.21} parent=1 // pred_region
      _
    $region5: #{ddpm_forward.21} parent=1 // pred_fallthru
      _
    // Predicated region
    $region6: #{ddpm_forward.21} parent=1 // pred_check
      _
    $region7: #{ddpm_forward.21} parent=1 // pred_check_branch
      %21 = sbr.rel (0) target = $region9
    $region8: #{ddpm_forward.21} parent=1 // pred_region
      _
    $region9: #{ddpm_forward.21} parent=1 // pred_fallthru
      _
    // Predicated region
    $region10: #{ddpm_forward.21} parent=1 // pred_check
      _
    $region11: #{ddpm_forward.21} parent=1 // pred_check_branch
      %23 = sbr.rel (0) target = $region13
    $region12: #{ddpm_forward.21} parent=1 // pred_region
      _
    $region13: #{ddpm_forward.21} parent=1 // pred_fallthru
      _
    // Predicated region
    $region14: #{ddpm_forward.21} parent=1 // pred_check
      _
    $region15: #{ddpm_forward.21} parent=1 // pred_check_branch
      %25 = sbr.rel (0) target = $region17
    $region16: #{ddpm_forward.21} parent=1 // pred_region
      _
    $region17: #{ddpm_forward.21} parent=1 // pred_fallthru
      _
    // Predicated region
    $region18: #{ddpm_forward.21} parent=1 // pred_check
      _
    $region19: #{ddpm_forward.21} parent=1 // pred_check_branch
      %27 = sbr.rel (0) target = $region21
    $region20: #{ddpm_forward.21} parent=1 // pred_region
      _
    $region21: #{ddpm_forward.21} parent=1 // pred_fallthru
      _
    // Predicated region
    $region22: #{ddpm_forward.21} parent=1 // pred_check
      _
    $region23: #{ddpm_forward.21} parent=1 // pred_check_branch
      %29 = sbr.rel (0) target = $region25
    $region24: #{ddpm_forward.21} parent=1 // pred_region
      _
    $region25: #{ddpm_forward.21} parent=1 // pred_fallthru
      _
    // Predicated region
    $region26: #{ddpm_forward.21} parent=1 // pred_check
      _
    $region27: #{ddpm_forward.21} parent=1 // pred_check_branch
      %31 = sbr.rel (0) target = $region29
    $region28: #{ddpm_forward.21} parent=1 // pred_region
      _
    $region29: #{ddpm_forward.21} parent=1 // pred_fallthru
      _
    // Predicated region
    $region30: #{ddpm_forward.21} parent=1 // pred_check
      _
    $region31: #{ddpm_forward.21} parent=1 // pred_check_branch
      %33 = sbr.rel (0) target = $region33
    $region32: #{ddpm_forward.21} parent=1 // pred_region
      %s35 = ssub.s32 45056, 45056
      %36 = vsyncadd [#allocation3], %s35
      %s37 = sshll.u32 [#allocation2], 4
      %s38 = int_to_ptr.vmem [resolvable:$true] %s37
      %43 = dma.hbm_to_vmem [thread:$0]  %s7, 45056, %s38, [#allocation3], 128, 128, 8
    $region33: #{ddpm_forward.21} parent=1 // pred_fallthru
      _
    // Predicated region
    $region34: #{ddpm_forward.21} parent=1 // pred_check
      _
    $region35: #{ddpm_forward.21} parent=1 // pred_check_branch
      %45 = sbr.rel (0) target = $region37
    $region36: #{ddpm_forward.21} parent=1 // pred_region
      %s47 = ssub.s32 288, 288
      %48 = vsyncadd [#allocation5], %s47
      %s49 = sshll.u32 [#allocation4], 4
      %s50 = int_to_ptr.vmem [resolvable:$true] %s49
      %55 = dma.hbm_to_vmem [thread:$0]  %s8, 288, %s50, [#allocation5], 16, 16, 1
    $region37: #{ddpm_forward.21} parent=1 // pred_fallthru
      _
    // Predicated region
    $region38: #{ddpm_forward.21} parent=1 // pred_check
      _
    $region39: #{ddpm_forward.21} parent=1 // pred_check_branch
      %57 = sbr.rel (0) target = $region41
    $region40: #{ddpm_forward.21} parent=1 // pred_region
      %58 = dma.done [#allocation3], 45056
    $region41: #{ddpm_forward.21} parent=1 // pred_fallthru
      _
    // Predicated region
    $region42: #{ddpm_forward.21} parent=1 // pred_check
      _
    $region43: #{ddpm_forward.21} parent=1 // pred_check_branch
      %60 = sbr.rel (0) target = $region45
    $region44: #{ddpm_forward.21} parent=1 // pred_region
      %61 = dma.done [#allocation5], 288
    $region45: #{ddpm_forward.21} parent=1 // pred_fallthru
      _
    %v62 = vlaneseq
    %v63 = vand.u32 %v62, 127
    %v64 = vld [vmem:[%s3] sm:$0xff]
    %v65 = vld [vmem:[%s3 + $0x8] sm:$0xff]
    %v66 = vld [vmem:[%s3 + $0x10] sm:$0xff]
    %v67 = vld [vmem:[%s3 + $0x18] sm:$0xff]
    %68 = vset.pattern.permute.xlu0 0
    %69 = vperm.xlu0 %68, %v64
    %v70 = vpop.permute.xlu0 %69
    %71 = vset.pattern.permute.xlu0 0
    %72 = vperm.xlu0 %71, %v65
    %v73 = vpop.permute.xlu0 %72
    %74 = vset.pattern.permute.xlu0 0
    %75 = vperm.xlu0 %74, %v66
    %v76 = vpop.permute.xlu0 %75
    %77 = vset.pattern.permute.xlu0 0
    %78 = vperm.xlu0 %77, %v67
    %v79 = vpop.permute.xlu0 %78
    %vm80 = vcmp.eq.s32.totalorder %v63, %v70
    %vm81 = vcmp.eq.s32.totalorder %v63, %v73
    %vm82 = vcmp.eq.s32.totalorder %v63, %v76
    %vm83 = vcmp.eq.s32.totalorder %v63, %v79
    %v84 = vsel %vm80, 1, 0
    %v85 = vsel %vm81, 1, 0
    %v86 = vsel %vm82, 1, 0
    %v87 = vsel %vm83, 1, 0
    %v88 = vcvt.s32.f32 %v84
    %v89 = vcvt.s32.f32 %v85
    %v90 = vcvt.s32.f32 %v86
    %v91 = vcvt.s32.f32 %v87
    %v92 = vld [vmem:[%s4] sm:$0xff]
    %v93 = vld [vmem:[%s4 + $0x8] sm:$0xff]
    %v94 = vld [vmem:[%s4 + $0x10] sm:$0xff]
    %v95 = vld [vmem:[%s4 + $0x18] sm:$0xff]
    %96 = vset.pattern.permute.xlu0 0
    %97 = vperm.xlu0 %96, %v92
    %v98 = vpop.permute.xlu0 %97
    %99 = vset.pattern.permute.xlu0 0
    %100 = vperm.xlu0 %99, %v93
    %v101 = vpop.permute.xlu0 %100
    %102 = vset.pattern.permute.xlu0 0
    %103 = vperm.xlu0 %102, %v94
    %v104 = vpop.permute.xlu0 %103
    %105 = vset.pattern.permute.xlu0 0
    %106 = vperm.xlu0 %105, %v95
    %v107 = vpop.permute.xlu0 %106
    %vm108 = vcmp.eq.s32.totalorder %v63, %v98
    %vm109 = vcmp.eq.s32.totalorder %v63, %v101
    %vm110 = vcmp.eq.s32.totalorder %v63, %v104
    %vm111 = vcmp.eq.s32.totalorder %v63, %v107
    %v112 = vsel %vm108, 1, 0
    %v113 = vsel %vm109, 1, 0
    %v114 = vsel %vm110, 1, 0
    %v115 = vsel %vm111, 1, 0
    %v116 = vcvt.s32.f32 %v112
    %v117 = vcvt.s32.f32 %v113
    %v118 = vcvt.s32.f32 %v114
    %v119 = vcvt.s32.f32 %v115
    %v120 = vld [vmem:[%s5] sm:$0x1]
    %v121 = vlaneseq
    %v122 = vshrl.u32 %v121, 7
    %v123 = vsub.s32 0, %v122
    %v124 = vrot.slane %v120, %v123
    %vm125 = vcmp.eq.s32.totalorder %v63, %v124
    %v126 = vsel %vm125, 1, 0
    %v127 = vcvt.s32.f32 %v126
    %v128 = vld [vmem:[%s6] sm:$0xff]
    %v129 = vld [vmem:[%s6 + $0x8] sm:$0xff]
    %130 = vset.pattern.permute.xlu0 0
    %131 = vperm.xlu0 %130, %v128
    %v132 = vpop.permute.xlu0 %131
    %133 = vset.pattern.permute.xlu0 0
    %134 = vperm.xlu0 %133, %v129
    %v135 = vpop.permute.xlu0 %134
    %vm136 = vcmp.eq.s32.totalorder %v63, %v132
    %vm137 = vcmp.eq.s32.totalorder %v63, %v135
    %v138 = vsel %vm136, 1, 0
    %v139 = vsel %vm137, 1, 0
    %v140 = vcvt.s32.f32 %v138
    %v141 = vcvt.s32.f32 %v139
    %v142 = vld [vmem:[%s2] sm:$0x3]
    %vm143 = vcmask 15360
    %v145 = vsel %vm143, %v140, 0
    %v148 = vsel %vm143, %v141, 0
    %vm150 = vcmask 1041408
    %v152 = vsel %vm150, %v142, 0
    %154 = vmatprep.subr.mxu0 0.0
    %155 = vmatpush1.msra.mxu0 0.0
    %156 = vmatprep.subr.mxu0 0.0
    %157 = vmatpush1.msra.mxu0 0.0
    %158 = vmatprep.subr.mxu0 0.0
    %159 = vmatpush1.msra.mxu0 0.0
    %160 = vmatprep.subr.mxu0 0.0
    %161 = vmatpush1.msra.mxu0 0.0
    %162 = vmatprep.subr.mxu0 0.0
    %163 = vmatpush1.msra.mxu0 0.0
    %164 = vmatprep.subr.mxu0 0.0
    %165 = vmatpush1.msra.mxu0 0.0
    %166 = vmatprep.subr.mxu0 0.0
    %167 = vmatpush1.msra.mxu0 0.0
    %168 = vmatprep.subr.mxu0 0.0
    %169 = vmatpush1.msra.mxu0 0.0
    %170 = vmatprep.subr.mxu0 0.0
    %171 = vmatpush1.msra.mxu0 0.0
    %172 = vmatprep.subr.mxu0 0.0
    %173 = vmatpush1.msra.mxu0 0.0
    %174 = vmatprep.subr.mxu0 0.0
    %175 = vmatpush1.msra.mxu0 0.0
    %176 = vmatprep.subr.mxu0 0.0
    %177 = vmatpush1.msra.mxu0 0.0
    %178 = vmatprep.subr.mxu0 0.0
    %179 = vmatpush1.msra.mxu0 0.0
    %180 = vmatprep.subr.mxu0 0.0
    %181 = vmatpush1.msra.mxu0 0.0
    %182 = vmatprep.subr.mxu0 0.0
    %183 = vmatpush1.msra.mxu0 0.0
    %184 = vmatprep.subr.mxu0 0.0
    %185 = vmatpush1.msra.mxu0 %v152
    %186 = vmatprep.subr.mxu0 0.0
    %187 = vmatpush2.msra.mxu0 0.0
    %188 = vmatprep.subr.mxu0 0.0
    %189 = vmatpush2.msra.mxu0 0.0
    %190 = vmatprep.subr.mxu0 0.0
    %191 = vmatpush2.msra.mxu0 0.0
    %192 = vmatprep.subr.mxu0 0.0
    %193 = vmatpush2.msra.mxu0 0.0
    %194 = vmatprep.subr.mxu0 0.0
    %195 = vmatpush2.msra.mxu0 0.0
    %196 = vmatprep.subr.mxu0 0.0
    %197 = vmatpush2.msra.mxu0 0.0
    %198 = vmatprep.subr.mxu0 0.0
    %199 = vmatpush2.msra.mxu0 0.0
    %200 = vmatprep.subr.mxu0 0.0
    %201 = vmatpush2.msra.mxu0 0.0
    %202 = vmatprep.subr.mxu0 0.0
    %203 = vmatpush2.msra.mxu0 0.0
    %204 = vmatprep.subr.mxu0 0.0
    %205 = vmatpush2.msra.mxu0 0.0
    %206 = vmatprep.subr.mxu0 0.0
    %207 = vmatpush2.msra.mxu0 0.0
    %208 = vmatprep.subr.mxu0 0.0
    %209 = vmatpush2.msra.mxu0 0.0
    %210 = vmatprep.subr.mxu0 0.0
    %211 = vmatpush2.msra.mxu0 0.0
    %212 = vmatprep.subr.mxu0 0.0
    %213 = vmatpush2.msra.mxu0 0.0
    %214 = vmatprep.subr.mxu0 0.0
    %215 = vmatpush2.msra.mxu0 0.0
    %216 = vmatprep.subr.mxu0 0.0
    %217 = vmatpush2.msra.mxu0 0.0
    %218 = vmatprep.mubr.f32.mxu0 0.0
    %219 = vmatmul.mubr.f32.gmra.mxu0 %v145
    %v220 = vpop.f32.mrf.mxu0
    %v221 = vadd.f32 0.0, %v220
    %v222 = vpop.f32.mrf.mxu0
    %223 = vmatprep.mubr.f32.mxu0 0.0
    %224 = vmatmul.mubr.f32.gmra.mxu0 %v148
    %v225 = vpop.f32.mrf.mxu0
    %v226 = vadd.f32 0.0, %v225
    %v227 = vpop.f32.mrf.mxu0
    %228 = vdwg.mxu0
    %v229 = vld [vmem:[%s0] sm:$0xff]
    %v230 = vld [vmem:[%s0 + $0x8] sm:$0xff]
    %232 = vset.pattern.permute.xlu0 1
    %233 = vperm.xlu0 %232, %v221
    %v234 = vpop.permute.xlu0 %233
    %237 = vset.pattern.permute.xlu0 1
    %238 = vperm.xlu0 %237, %v226
    %v239 = vpop.permute.xlu0 %238
    %v241 = vmul.f32 %v229, %v234
    %v242 = vmul.f32 %v230, %v239
    %v243 = vld [vmem:[%s1] sm:$0xff]
    %v244 = vld [vmem:[%s1 + $0x8] sm:$0xff]
    %245 = vset.pattern.permute.xlu0 2
    %246 = vperm.xlu0 %245, %v221
    %v247 = vpop.permute.xlu0 %246
    %249 = vset.pattern.permute.xlu0 2
    %250 = vperm.xlu0 %249, %v226
    %v251 = vpop.permute.xlu0 %250
    %v253 = vmul.f32 %v243, %v247
    %v254 = vmul.f32 %v244, %v251
    %v255 = vadd.f32 %v241, %v253
    %v256 = vadd.f32 %v242, %v254
    %257 = vst [vmem:[%s9] sm:$0xff] %v255
    %258 = vst [vmem:[%s9 + $0x8] sm:$0xff] %v256
    %v259 = vld [vmem:[#allocation4] sm:$0x1]
    %260 = vset.pattern.permute.xlu0 0
    %261 = vperm.xlu0 %260, %v221
    %v262 = vpop.permute.xlu0 %261
    %264 = vset.pattern.permute.xlu0 0
    %265 = vperm.xlu0 %264, %v226
    %v266 = vpop.permute.xlu0 %265
    %v269 = vlaneseq
    %v270 = vshrl.u32 %v269, 7
    %v271 = vsub.s32 0, %v270
    %v272 = vrot.slane %v259, %v271
    %v274 = vmul.f32 %v262, %v272
    %v275 = vmul.f32 %v266, %v272
    %s276 = scalar_lea.vmem [#allocation4], 1
    %v277 = vld [vmem:[%s276] sm:$0x1]
    %v279 = vlaneseq
    %v280 = vshrl.u32 %v279, 7
    %v281 = vsub.s32 0, %v280
    %v282 = vrot.slane %v277, %v281
    %v284 = vadd.f32 %v274, %v282
    %v285 = vadd.f32 %v275, %v282
    %v286 = vmax.f32 %v284, 0.0
    %v287 = vmax.f32 %v285, 0.0
    %v288 = vld [vmem:[#allocation2] sm:$0xff]
    %v289 = vld [vmem:[#allocation2 + $0x8] sm:$0xff]
    %v290 = vld [vmem:[#allocation2 + $0x10] sm:$0xff]
    %v291 = vld [vmem:[#allocation2 + $0x18] sm:$0xff]
    %v292 = vld [vmem:[#allocation2 + $0x20] sm:$0xff]
    %v293 = vld [vmem:[#allocation2 + $0x28] sm:$0xff]
    %v294 = vld [vmem:[#allocation2 + $0x30] sm:$0xff]
    %v295 = vld [vmem:[#allocation2 + $0x38] sm:$0xff]
    %v296 = vld [vmem:[#allocation2 + $0x40] sm:$0xff]
    %v297 = vld [vmem:[#allocation2 + $0x48] sm:$0xff]
    %v298 = vld [vmem:[#allocation2 + $0x50] sm:$0xff]
    %v299 = vld [vmem:[#allocation2 + $0x58] sm:$0xff]
    %v300 = vld [vmem:[#allocation2 + $0x60] sm:$0xff]
    %v301 = vld [vmem:[#allocation2 + $0x68] sm:$0xff]
    %v302 = vld [vmem:[#allocation2 + $0x70] sm:$0xff]
    %v303 = vld [vmem:[#allocation2 + $0x78] sm:$0xff]
    %s304 = scalar_lea.vmem [#allocation4], 2
    %v305 = vld [vmem:[%s304] sm:$0x1]
    %v307 = vlaneseq
    %v308 = vshrl.u32 %v307, 7
    %v309 = vsub.s32 0, %v308
    %v310 = vrot.slane %v305, %v309
    %312 = vmatprep.subr.mxu0 0.0
    %313 = vmatpush1.msra.mxu0 %v303
    %314 = vmatprep.subr.mxu0 0.0
    %315 = vmatpush1.msra.mxu0 %v302
    %316 = vmatprep.subr.mxu0 0.0
    %317 = vmatpush1.msra.mxu0 %v301
    %318 = vmatprep.subr.mxu0 0.0
    %319 = vmatpush1.msra.mxu0 %v300
    %320 = vmatprep.subr.mxu0 0.0
    %321 = vmatpush1.msra.mxu0 %v299
    %322 = vmatprep.subr.mxu0 0.0
    %323 = vmatpush1.msra.mxu0 %v298
    %324 = vmatprep.subr.mxu0 0.0
    %325 = vmatpush1.msra.mxu0 %v297
    %326 = vmatprep.subr.mxu0 0.0
    %327 = vmatpush1.msra.mxu0 %v296
    %328 = vmatprep.subr.mxu0 0.0
    %329 = vmatpush1.msra.mxu0 %v295
    %330 = vmatprep.subr.mxu0 0.0
    %331 = vmatpush1.msra.mxu0 %v294
    %332 = vmatprep.subr.mxu0 0.0
    %333 = vmatpush1.msra.mxu0 %v293
    %334 = vmatprep.subr.mxu0 0.0
    %335 = vmatpush1.msra.mxu0 %v292
    %336 = vmatprep.subr.mxu0 0.0
    %337 = vmatpush1.msra.mxu0 %v291
    %338 = vmatprep.subr.mxu0 0.0
    %339 = vmatpush1.msra.mxu0 %v290
    %340 = vmatprep.subr.mxu0 0.0
    %341 = vmatpush1.msra.mxu0 %v289
    %342 = vmatprep.subr.mxu0 0.0
    %343 = vmatpush1.msra.mxu0 %v288
    %344 = vmatprep.subr.mxu0 0.0
    %345 = vmatpush2.msra.mxu0 0.0
    %346 = vmatprep.subr.mxu0 0.0
    %347 = vmatpush2.msra.mxu0 0.0
    %348 = vmatprep.subr.mxu0 0.0
    %349 = vmatpush2.msra.mxu0 0.0
    %350 = vmatprep.subr.mxu0 0.0
    %351 = vmatpush2.msra.mxu0 0.0
    %352 = vmatprep.subr.mxu0 0.0
    %353 = vmatpush2.msra.mxu0 0.0
    %354 = vmatprep.subr.mxu0 0.0
    %355 = vmatpush2.msra.mxu0 0.0
    %356 = vmatprep.subr.mxu0 0.0
    %357 = vmatpush2.msra.mxu0 0.0
    %358 = vmatprep.subr.mxu0 0.0
    %359 = vmatpush2.msra.mxu0 0.0
    %360 = vmatprep.subr.mxu0 0.0
    %361 = vmatpush2.msra.mxu0 0.0
    %362 = vmatprep.subr.mxu0 0.0
    %363 = vmatpush2.msra.mxu0 0.0
    %364 = vmatprep.subr.mxu0 0.0
    %365 = vmatpush2.msra.mxu0 0.0
    %366 = vmatprep.subr.mxu0 0.0
    %367 = vmatpush2.msra.mxu0 0.0
    %368 = vmatprep.subr.mxu0 0.0
    %369 = vmatpush2.msra.mxu0 0.0
    %370 = vmatprep.subr.mxu0 0.0
    %371 = vmatpush2.msra.mxu0 0.0
    %372 = vmatprep.subr.mxu0 0.0
    %373 = vmatpush2.msra.mxu0 0.0
    %374 = vmatprep.subr.mxu0 0.0
    %375 = vmatpush2.msra.mxu0 0.0
    %376 = vmatprep.mubr.f32.mxu0 0.0
    %377 = vmatmul.mubr.f32.gmra.mxu0 %v255
    %v378 = vpop.f32.mrf.mxu0
    %v379 = vadd.f32 %v310, %v378
    %v380 = vpop.f32.mrf.mxu0
    %381 = vmatprep.mubr.f32.mxu0 0.0
    %382 = vmatmul.mubr.f32.gmra.mxu0 %v256
    %v383 = vpop.f32.mrf.mxu0
    %v384 = vadd.f32 %v310, %v383
    %v385 = vpop.f32.mrf.mxu0
    %386 = vdwg.mxu0
    %v387 = vmax.f32 %v379, 0.0
    %v388 = vmax.f32 %v384, 0.0
    %s389 = scalar_lea.vmem [#allocation2], 128
    %v390 = vld [vmem:[%s389] sm:$0xff]
    %v391 = vld [vmem:[%s389 + $0x8] sm:$0xff]
    %v392 = vld [vmem:[%s389 + $0x10] sm:$0xff]
    %v393 = vld [vmem:[%s389 + $0x18] sm:$0xff]
    %v394 = vld [vmem:[%s389 + $0x20] sm:$0xff]
    %v395 = vld [vmem:[%s389 + $0x28] sm:$0xff]
    %v396 = vld [vmem:[%s389 + $0x30] sm:$0xff]
    %v397 = vld [vmem:[%s389 + $0x38] sm:$0xff]
    %v398 = vld [vmem:[%s389 + $0x40] sm:$0xff]
    %v399 = vld [vmem:[%s389 + $0x48] sm:$0xff]
    %v400 = vld [vmem:[%s389 + $0x50] sm:$0xff]
    %v401 = vld [vmem:[%s389 + $0x58] sm:$0xff]
    %v402 = vld [vmem:[%s389 + $0x60] sm:$0xff]
    %v403 = vld [vmem:[%s389 + $0x68] sm:$0xff]
    %v404 = vld [vmem:[%s389 + $0x70] sm:$0xff]
    %v405 = vld [vmem:[%s389 + $0x78] sm:$0xff]
    %s406 = scalar_lea.vmem [#allocation4], 3
    %v407 = vld [vmem:[%s406] sm:$0x1]
    %v409 = vlaneseq
    %v410 = vshrl.u32 %v409, 7
    %v411 = vsub.s32 0, %v410
    %v412 = vrot.slane %v407, %v411
    %414 = vmatprep.subr.mxu0 0.0
    %415 = vmatpush1.msra.mxu0 %v405
    %416 = vmatprep.subr.mxu0 0.0
    %417 = vmatpush1.msra.mxu0 %v404
    %418 = vmatprep.subr.mxu0 0.0
    %419 = vmatpush1.msra.mxu0 %v403
    %420 = vmatprep.subr.mxu0 0.0
    %421 = vmatpush1.msra.mxu0 %v402
    %422 = vmatprep.subr.mxu0 0.0
    %423 = vmatpush1.msra.mxu0 %v401
    %424 = vmatprep.subr.mxu0 0.0
    %425 = vmatpush1.msra.mxu0 %v400
    %426 = vmatprep.subr.mxu0 0.0
    %427 = vmatpush1.msra.mxu0 %v399
    %428 = vmatprep.subr.mxu0 0.0
    %429 = vmatpush1.msra.mxu0 %v398
    %430 = vmatprep.subr.mxu0 0.0
    %431 = vmatpush1.msra.mxu0 %v397
    %432 = vmatprep.subr.mxu0 0.0
    %433 = vmatpush1.msra.mxu0 %v396
    %434 = vmatprep.subr.mxu0 0.0
    %435 = vmatpush1.msra.mxu0 %v395
    %436 = vmatprep.subr.mxu0 0.0
    %437 = vmatpush1.msra.mxu0 %v394
    %438 = vmatprep.subr.mxu0 0.0
    %439 = vmatpush1.msra.mxu0 %v393
    %440 = vmatprep.subr.mxu0 0.0
    %441 = vmatpush1.msra.mxu0 %v392
    %442 = vmatprep.subr.mxu0 0.0
    %443 = vmatpush1.msra.mxu0 %v391
    %444 = vmatprep.subr.mxu0 0.0
    %445 = vmatpush1.msra.mxu0 %v390
    %446 = vmatprep.subr.mxu0 0.0
    %447 = vmatpush2.msra.mxu0 0.0
    %448 = vmatprep.subr.mxu0 0.0
    %449 = vmatpush2.msra.mxu0 0.0
    %450 = vmatprep.subr.mxu0 0.0
    %451 = vmatpush2.msra.mxu0 0.0
    %452 = vmatprep.subr.mxu0 0.0
    %453 = vmatpush2.msra.mxu0 0.0
    %454 = vmatprep.subr.mxu0 0.0
    %455 = vmatpush2.msra.mxu0 0.0
    %456 = vmatprep.subr.mxu0 0.0
    %457 = vmatpush2.msra.mxu0 0.0
    %458 = vmatprep.subr.mxu0 0.0
    %459 = vmatpush2.msra.mxu0 0.0
    %460 = vmatprep.subr.mxu0 0.0
    %461 = vmatpush2.msra.mxu0 0.0
    %462 = vmatprep.subr.mxu0 0.0
    %463 = vmatpush2.msra.mxu0 0.0
    %464 = vmatprep.subr.mxu0 0.0
    %465 = vmatpush2.msra.mxu0 0.0
    %466 = vmatprep.subr.mxu0 0.0
    %467 = vmatpush2.msra.mxu0 0.0
    %468 = vmatprep.subr.mxu0 0.0
    %469 = vmatpush2.msra.mxu0 0.0
    %470 = vmatprep.subr.mxu0 0.0
    %471 = vmatpush2.msra.mxu0 0.0
    %472 = vmatprep.subr.mxu0 0.0
    %473 = vmatpush2.msra.mxu0 0.0
    %474 = vmatprep.subr.mxu0 0.0
    %475 = vmatpush2.msra.mxu0 0.0
    %476 = vmatprep.subr.mxu0 0.0
    %477 = vmatpush2.msra.mxu0 0.0
    %478 = vmatprep.mubr.f32.mxu0 0.0
    %479 = vmatmul.mubr.f32.gmra.mxu0 %v387
    %v480 = vpop.f32.mrf.mxu0
    %v481 = vadd.f32 %v412, %v480
    %v482 = vpop.f32.mrf.mxu0
    %483 = vmatprep.mubr.f32.mxu0 0.0
    %484 = vmatmul.mubr.f32.gmra.mxu0 %v388
    %v485 = vpop.f32.mrf.mxu0
    %v486 = vadd.f32 %v412, %v485
    %v487 = vpop.f32.mrf.mxu0
    %488 = vdwg.mxu0
    %v489 = vadd.f32 %v481, %v286
    %v490 = vadd.f32 %v486, %v287
    %vm491 = vcmask 130048
    %v493 = vsel %vm491, %v88, 0
    %v496 = vsel %vm491, %v89, 0
    %v499 = vsel %vm491, %v90, 0
    %v502 = vsel %vm491, %v91, 0
    %504 = vmatprep.subr.mxu0 0.0
    %505 = vmatpush1.msra.mxu0 0.0
    %506 = vmatprep.subr.mxu0 0.0
    %507 = vmatpush1.msra.mxu0 0.0
    %508 = vmatprep.subr.mxu0 0.0
    %509 = vmatpush1.msra.mxu0 0.0
    %510 = vmatprep.subr.mxu0 0.0
    %511 = vmatpush1.msra.mxu0 0.0
    %512 = vmatprep.subr.mxu0 0.0
    %513 = vmatpush1.msra.mxu0 0.0
    %514 = vmatprep.subr.mxu0 0.0
    %515 = vmatpush1.msra.mxu0 0.0
    %516 = vmatprep.subr.mxu0 0.0
    %517 = vmatpush1.msra.mxu0 0.0
    %518 = vmatprep.subr.mxu0 0.0
    %519 = vmatpush1.msra.mxu0 0.0
    %520 = vmatprep.subr.mxu0 0.0
    %521 = vmatpush1.msra.mxu0 0.0
    %522 = vmatprep.subr.mxu0 0.0
    %523 = vmatpush1.msra.mxu0 0.0
    %524 = vmatprep.subr.mxu0 0.0
    %525 = vmatpush1.msra.mxu0 0.0
    %526 = vmatprep.subr.mxu0 0.0
    %527 = vmatpush1.msra.mxu0 0.0
    %528 = vmatprep.subr.mxu0 0.0
    %529 = vmatpush1.msra.mxu0 0.0
    %530 = vmatprep.subr.mxu0 0.0
    %531 = vmatpush1.msra.mxu0 0.0
    %532 = vmatprep.subr.mxu0 0.0
    %533 = vmatpush1.msra.mxu0 %v490
    %534 = vmatprep.subr.mxu0 0.0
    %535 = vmatpush1.msra.mxu0 %v489
    %536 = vmatprep.subr.mxu0 0.0
    %537 = vmatpush2.msra.mxu0 0.0
    %538 = vmatprep.subr.mxu0 0.0
    %539 = vmatpush2.msra.mxu0 0.0
    %540 = vmatprep.subr.mxu0 0.0
    %541 = vmatpush2.msra.mxu0 0.0
    %542 = vmatprep.subr.mxu0 0.0
    %543 = vmatpush2.msra.mxu0 0.0
    %544 = vmatprep.subr.mxu0 0.0
    %545 = vmatpush2.msra.mxu0 0.0
    %546 = vmatprep.subr.mxu0 0.0
    %547 = vmatpush2.msra.mxu0 0.0
    %548 = vmatprep.subr.mxu0 0.0
    %549 = vmatpush2.msra.mxu0 0.0
    %550 = vmatprep.subr.mxu0 0.0
    %551 = vmatpush2.msra.mxu0 0.0
    %552 = vmatprep.subr.mxu0 0.0
    %553 = vmatpush2.msra.mxu0 0.0
    %554 = vmatprep.subr.mxu0 0.0
    %555 = vmatpush2.msra.mxu0 0.0
    %556 = vmatprep.subr.mxu0 0.0
    %557 = vmatpush2.msra.mxu0 0.0
    %558 = vmatprep.subr.mxu0 0.0
    %559 = vmatpush2.msra.mxu0 0.0
    %560 = vmatprep.subr.mxu0 0.0
    %561 = vmatpush2.msra.mxu0 0.0
    %562 = vmatprep.subr.mxu0 0.0
    %563 = vmatpush2.msra.mxu0 0.0
    %564 = vmatprep.subr.mxu0 0.0
    %565 = vmatpush2.msra.mxu0 0.0
    %566 = vmatprep.subr.mxu0 0.0
    %567 = vmatpush2.msra.mxu0 0.0
    %568 = vmatprep.mubr.f32.mxu0 0.0
    %569 = vmatmul.mubr.f32.gmra.mxu0 %v493
    %v570 = vpop.f32.mrf.mxu0
    %v571 = vadd.f32 0.0, %v570
    %v572 = vpop.f32.mrf.mxu0
    %573 = vmatprep.mubr.f32.mxu0 0.0
    %574 = vmatmul.mubr.f32.gmra.mxu0 %v496
    %v575 = vpop.f32.mrf.mxu0
    %v576 = vadd.f32 0.0, %v575
    %v577 = vpop.f32.mrf.mxu0
    %578 = vmatprep.mubr.f32.mxu0 0.0
    %579 = vmatmul.mubr.f32.gmra.mxu0 %v499
    %v580 = vpop.f32.mrf.mxu0
    %v581 = vadd.f32 0.0, %v580
    %v582 = vpop.f32.mrf.mxu0
    %583 = vmatprep.mubr.f32.mxu0 0.0
    %584 = vmatmul.mubr.f32.gmra.mxu0 %v502
    %v585 = vpop.f32.mrf.mxu0
    %v586 = vadd.f32 0.0, %v585
    %v587 = vpop.f32.mrf.mxu0
    %588 = vdwg.mxu0
    %v590 = vsel %vm491, %v116, 0
    %v593 = vsel %vm491, %v117, 0
    %v596 = vsel %vm491, %v118, 0
    %v599 = vsel %vm491, %v119, 0
    %601 = vmatprep.subr.mxu0 0.0
    %602 = vmatpush1.msra.mxu0 0.0
    %603 = vmatprep.subr.mxu0 0.0
    %604 = vmatpush1.msra.mxu0 0.0
    %605 = vmatprep.subr.mxu0 0.0
    %606 = vmatpush1.msra.mxu0 0.0
    %607 = vmatprep.subr.mxu0 0.0
    %608 = vmatpush1.msra.mxu0 0.0
    %609 = vmatprep.subr.mxu0 0.0
    %610 = vmatpush1.msra.mxu0 0.0
    %611 = vmatprep.subr.mxu0 0.0
    %612 = vmatpush1.msra.mxu0 0.0
    %613 = vmatprep.subr.mxu0 0.0
    %614 = vmatpush1.msra.mxu0 0.0
    %615 = vmatprep.subr.mxu0 0.0
    %616 = vmatpush1.msra.mxu0 0.0
    %617 = vmatprep.subr.mxu0 0.0
    %618 = vmatpush1.msra.mxu0 0.0
    %619 = vmatprep.subr.mxu0 0.0
    %620 = vmatpush1.msra.mxu0 0.0
    %621 = vmatprep.subr.mxu0 0.0
    %622 = vmatpush1.msra.mxu0 0.0
    %623 = vmatprep.subr.mxu0 0.0
    %624 = vmatpush1.msra.mxu0 0.0
    %625 = vmatprep.subr.mxu0 0.0
    %626 = vmatpush1.msra.mxu0 0.0
    %627 = vmatprep.subr.mxu0 0.0
    %628 = vmatpush1.msra.mxu0 0.0
    %629 = vmatprep.subr.mxu0 0.0
    %630 = vmatpush1.msra.mxu0 %v490
    %631 = vmatprep.subr.mxu0 0.0
    %632 = vmatpush1.msra.mxu0 %v489
    %633 = vmatprep.subr.mxu0 0.0
    %634 = vmatpush2.msra.mxu0 0.0
    %635 = vmatprep.subr.mxu0 0.0
    %636 = vmatpush2.msra.mxu0 0.0
    %637 = vmatprep.subr.mxu0 0.0
    %638 = vmatpush2.msra.mxu0 0.0
    %639 = vmatprep.subr.mxu0 0.0
    %640 = vmatpush2.msra.mxu0 0.0
    %641 = vmatprep.subr.mxu0 0.0
    %642 = vmatpush2.msra.mxu0 0.0
    %643 = vmatprep.subr.mxu0 0.0
    %644 = vmatpush2.msra.mxu0 0.0
    %645 = vmatprep.subr.mxu0 0.0
    %646 = vmatpush2.msra.mxu0 0.0
    %647 = vmatprep.subr.mxu0 0.0
    %648 = vmatpush2.msra.mxu0 0.0
    %649 = vmatprep.subr.mxu0 0.0
    %650 = vmatpush2.msra.mxu0 0.0
    %651 = vmatprep.subr.mxu0 0.0
    %652 = vmatpush2.msra.mxu0 0.0
    %653 = vmatprep.subr.mxu0 0.0
    %654 = vmatpush2.msra.mxu0 0.0
    %655 = vmatprep.subr.mxu0 0.0
    %656 = vmatpush2.msra.mxu0 0.0
    %657 = vmatprep.subr.mxu0 0.0
    %658 = vmatpush2.msra.mxu0 0.0
    %659 = vmatprep.subr.mxu0 0.0
    %660 = vmatpush2.msra.mxu0 0.0
    %661 = vmatprep.subr.mxu0 0.0
    %662 = vmatpush2.msra.mxu0 0.0
    %663 = vmatprep.subr.mxu0 0.0
    %664 = vmatpush2.msra.mxu0 0.0
    %665 = vmatprep.mubr.f32.mxu0 0.0
    %666 = vmatmul.mubr.f32.gmra.mxu0 %v590
    %v667 = vpop.f32.mrf.mxu0
    %v668 = vadd.f32 0.0, %v667
    %v669 = vpop.f32.mrf.mxu0
    %670 = vmatprep.mubr.f32.mxu0 0.0
    %671 = vmatmul.mubr.f32.gmra.mxu0 %v593
    %v672 = vpop.f32.mrf.mxu0
    %v673 = vadd.f32 0.0, %v672
    %v674 = vpop.f32.mrf.mxu0
    %675 = vmatprep.mubr.f32.mxu0 0.0
    %676 = vmatmul.mubr.f32.gmra.mxu0 %v596
    %v677 = vpop.f32.mrf.mxu0
    %v678 = vadd.f32 0.0, %v677
    %v679 = vpop.f32.mrf.mxu0
    %680 = vmatprep.mubr.f32.mxu0 0.0
    %681 = vmatmul.mubr.f32.gmra.mxu0 %v599
    %v682 = vpop.f32.mrf.mxu0
    %v683 = vadd.f32 0.0, %v682
    %v684 = vpop.f32.mrf.mxu0
    %685 = vdwg.mxu0
    %s686 = scalar_lea.vmem [#allocation2], 256
    %v687 = vld [vmem:[%s686] sm:$0xff]
    %v688 = vld [vmem:[%s686 + $0x8] sm:$0xff]
    %v689 = vld [vmem:[%s686 + $0x10] sm:$0xff]
    %v690 = vld [vmem:[%s686 + $0x18] sm:$0xff]
    %v691 = vld [vmem:[%s686 + $0x20] sm:$0xff]
    %v692 = vld [vmem:[%s686 + $0x28] sm:$0xff]
    %v693 = vld [vmem:[%s686 + $0x30] sm:$0xff]
    %v694 = vld [vmem:[%s686 + $0x38] sm:$0xff]
    %v695 = vld [vmem:[%s686 + $0x40] sm:$0xff]
    %v696 = vld [vmem:[%s686 + $0x48] sm:$0xff]
    %v697 = vld [vmem:[%s686 + $0x50] sm:$0xff]
    %v698 = vld [vmem:[%s686 + $0x58] sm:$0xff]
    %v699 = vld [vmem:[%s686 + $0x60] sm:$0xff]
    %v700 = vld [vmem:[%s686 + $0x68] sm:$0xff]
    %v701 = vld [vmem:[%s686 + $0x70] sm:$0xff]
    %v702 = vld [vmem:[%s686 + $0x78] sm:$0xff]
    %s703 = scalar_lea.vmem [#allocation2], 384
    %v704 = vld [vmem:[%s703] sm:$0xff]
    %v705 = vld [vmem:[%s703 + $0x8] sm:$0xff]
    %v706 = vld [vmem:[%s703 + $0x10] sm:$0xff]
    %v707 = vld [vmem:[%s703 + $0x18] sm:$0xff]
    %v708 = vld [vmem:[%s703 + $0x20] sm:$0xff]
    %v709 = vld [vmem:[%s703 + $0x28] sm:$0xff]
    %v710 = vld [vmem:[%s703 + $0x30] sm:$0xff]
    %v711 = vld [vmem:[%s703 + $0x38] sm:$0xff]
    %v712 = vld [vmem:[%s703 + $0x40] sm:$0xff]
    %v713 = vld [vmem:[%s703 + $0x48] sm:$0xff]
    %v714 = vld [vmem:[%s703 + $0x50] sm:$0xff]
    %v715 = vld [vmem:[%s703 + $0x58] sm:$0xff]
    %v716 = vld [vmem:[%s703 + $0x60] sm:$0xff]
    %v717 = vld [vmem:[%s703 + $0x68] sm:$0xff]
    %v718 = vld [vmem:[%s703 + $0x70] sm:$0xff]
    %v719 = vld [vmem:[%s703 + $0x78] sm:$0xff]
    %720 = vmatprep.subr.mxu0 0.0
    %721 = vmatpush1.msra.mxu0 %v719
    %722 = vmatprep.subr.mxu0 0.0
    %723 = vmatpush1.msra.mxu0 %v718
    %724 = vmatprep.subr.mxu0 0.0
    %725 = vmatpush1.msra.mxu0 %v717
    %726 = vmatprep.subr.mxu0 0.0
    %727 = vmatpush1.msra.mxu0 %v716
    %728 = vmatprep.subr.mxu0 0.0
    %729 = vmatpush1.msra.mxu0 %v715
    %730 = vmatprep.subr.mxu0 0.0
    %731 = vmatpush1.msra.mxu0 %v714
    %732 = vmatprep.subr.mxu0 0.0
    %733 = vmatpush1.msra.mxu0 %v713
    %734 = vmatprep.subr.mxu0 0.0
    %735 = vmatpush1.msra.mxu0 %v712
    %736 = vmatprep.subr.mxu0 0.0
    %737 = vmatpush1.msra.mxu0 %v711
    %738 = vmatprep.subr.mxu0 0.0
    %739 = vmatpush1.msra.mxu0 %v710
    %740 = vmatprep.subr.mxu0 0.0
    %741 = vmatpush1.msra.mxu0 %v709
    %742 = vmatprep.subr.mxu0 0.0
    %743 = vmatpush1.msra.mxu0 %v708
    %744 = vmatprep.subr.mxu0 0.0
    %745 = vmatpush1.msra.mxu0 %v707
    %746 = vmatprep.subr.mxu0 0.0
    %747 = vmatpush1.msra.mxu0 %v706
    %748 = vmatprep.subr.mxu0 0.0
    %749 = vmatpush1.msra.mxu0 %v705
    %750 = vmatprep.subr.mxu0 0.0
    %751 = vmatpush1.msra.mxu0 %v704
    %752 = vmatprep.subr.mxu0 0.0
    %753 = vmatpush2.msra.mxu0 0.0
    %754 = vmatprep.subr.mxu0 0.0
    %755 = vmatpush2.msra.mxu0 0.0
    %756 = vmatprep.subr.mxu0 0.0
    %757 = vmatpush2.msra.mxu0 0.0
    %758 = vmatprep.subr.mxu0 0.0
    %759 = vmatpush2.msra.mxu0 0.0
    %760 = vmatprep.subr.mxu0 0.0
    %761 = vmatpush2.msra.mxu0 0.0
    %762 = vmatprep.subr.mxu0 0.0
    %763 = vmatpush2.msra.mxu0 0.0
    %764 = vmatprep.subr.mxu0 0.0
    %765 = vmatpush2.msra.mxu0 0.0
    %766 = vmatprep.subr.mxu0 0.0
    %767 = vmatpush2.msra.mxu0 0.0
    %768 = vmatprep.subr.mxu0 0.0
    %769 = vmatpush2.msra.mxu0 0.0
    %770 = vmatprep.subr.mxu0 0.0
    %771 = vmatpush2.msra.mxu0 0.0
    %772 = vmatprep.subr.mxu0 0.0
    %773 = vmatpush2.msra.mxu0 0.0
    %774 = vmatprep.subr.mxu0 0.0
    %775 = vmatpush2.msra.mxu0 0.0
    %776 = vmatprep.subr.mxu0 0.0
    %777 = vmatpush2.msra.mxu0 0.0
    %778 = vmatprep.subr.mxu0 0.0
    %779 = vmatpush2.msra.mxu0 0.0
    %780 = vmatprep.subr.mxu0 0.0
    %781 = vmatpush2.msra.mxu0 0.0
    %782 = vmatprep.subr.mxu0 0.0
    %783 = vmatpush2.msra.mxu0 0.0
    %784 = vmatprep.mubr.f32.mxu0 0.0
    %785 = vmatmul.mubr.f32.gmra.mxu0 %v668
    %v786 = vpop.f32.mrf.mxu0
    %v787 = vadd.f32 0.0, %v786
    %v788 = vpop.f32.mrf.mxu0
    %789 = vmatprep.mubr.f32.mxu0 0.0
    %790 = vmatmul.mubr.f32.gmra.mxu0 %v673
    %v791 = vpop.f32.mrf.mxu0
    %v792 = vadd.f32 0.0, %v791
    %v793 = vpop.f32.mrf.mxu0
    %794 = vmatprep.mubr.f32.mxu0 0.0
    %795 = vmatmul.mubr.f32.gmra.mxu0 %v678
    %v796 = vpop.f32.mrf.mxu0
    %v797 = vadd.f32 0.0, %v796
    %v798 = vpop.f32.mrf.mxu0
    %799 = vmatprep.mubr.f32.mxu0 0.0
    %800 = vmatmul.mubr.f32.gmra.mxu0 %v683
    %v801 = vpop.f32.mrf.mxu0
    %v802 = vadd.f32 0.0, %v801
    %v803 = vpop.f32.mrf.mxu0
    %804 = vdwg.mxu0
    %805 = vmatprep.subr.mxu0 0.0
    %806 = vmatpush1.msra.mxu0 %v702
    %807 = vmatprep.subr.mxu0 0.0
    %808 = vmatpush1.msra.mxu0 %v701
    %809 = vmatprep.subr.mxu0 0.0
    %810 = vmatpush1.msra.mxu0 %v700
    %811 = vmatprep.subr.mxu0 0.0
    %812 = vmatpush1.msra.mxu0 %v699
    %813 = vmatprep.subr.mxu0 0.0
    %814 = vmatpush1.msra.mxu0 %v698
    %815 = vmatprep.subr.mxu0 0.0
    %816 = vmatpush1.msra.mxu0 %v697
    %817 = vmatprep.subr.mxu0 0.0
    %818 = vmatpush1.msra.mxu0 %v696
    %819 = vmatprep.subr.mxu0 0.0
    %820 = vmatpush1.msra.mxu0 %v695
    %821 = vmatprep.subr.mxu0 0.0
    %822 = vmatpush1.msra.mxu0 %v694
    %823 = vmatprep.subr.mxu0 0.0
    %824 = vmatpush1.msra.mxu0 %v693
    %825 = vmatprep.subr.mxu0 0.0
    %826 = vmatpush1.msra.mxu0 %v692
    %827 = vmatprep.subr.mxu0 0.0
    %828 = vmatpush1.msra.mxu0 %v691
    %829 = vmatprep.subr.mxu0 0.0
    %830 = vmatpush1.msra.mxu0 %v690
    %831 = vmatprep.subr.mxu0 0.0
    %832 = vmatpush1.msra.mxu0 %v689
    %833 = vmatprep.subr.mxu0 0.0
    %834 = vmatpush1.msra.mxu0 %v688
    %835 = vmatprep.subr.mxu0 0.0
    %836 = vmatpush1.msra.mxu0 %v687
    %837 = vmatprep.subr.mxu0 0.0
    %838 = vmatpush2.msra.mxu0 0.0
    %839 = vmatprep.subr.mxu0 0.0
    %840 = vmatpush2.msra.mxu0 0.0
    %841 = vmatprep.subr.mxu0 0.0
    %842 = vmatpush2.msra.mxu0 0.0
    %843 = vmatprep.subr.mxu0 0.0
    %844 = vmatpush2.msra.mxu0 0.0
    %845 = vmatprep.subr.mxu0 0.0
    %846 = vmatpush2.msra.mxu0 0.0
    %847 = vmatprep.subr.mxu0 0.0
    %848 = vmatpush2.msra.mxu0 0.0
    %849 = vmatprep.subr.mxu0 0.0
    %850 = vmatpush2.msra.mxu0 0.0
    %851 = vmatprep.subr.mxu0 0.0
    %852 = vmatpush2.msra.mxu0 0.0
    %853 = vmatprep.subr.mxu0 0.0
    %854 = vmatpush2.msra.mxu0 0.0
    %855 = vmatprep.subr.mxu0 0.0
    %856 = vmatpush2.msra.mxu0 0.0
    %857 = vmatprep.subr.mxu0 0.0
    %858 = vmatpush2.msra.mxu0 0.0
    %859 = vmatprep.subr.mxu0 0.0
    %860 = vmatpush2.msra.mxu0 0.0
    %861 = vmatprep.subr.mxu0 0.0
    %862 = vmatpush2.msra.mxu0 0.0
    %863 = vmatprep.subr.mxu0 0.0
    %864 = vmatpush2.msra.mxu0 0.0
    %865 = vmatprep.subr.mxu0 0.0
    %866 = vmatpush2.msra.mxu0 0.0
    %867 = vmatprep.subr.mxu0 0.0
    %868 = vmatpush2.msra.mxu0 0.0
    %869 = vmatprep.mubr.f32.mxu0 0.0
    %870 = vmatmul.mubr.f32.gmra.mxu0 %v571
    %v871 = vpop.f32.mrf.mxu0
    %v872 = vadd.f32 %v787, %v871
    %v873 = vpop.f32.mrf.mxu0
    %874 = vmatprep.mubr.f32.mxu0 0.0
    %875 = vmatmul.mubr.f32.gmra.mxu0 %v576
    %v876 = vpop.f32.mrf.mxu0
    %v877 = vadd.f32 %v792, %v876
    %v878 = vpop.f32.mrf.mxu0
    %879 = vmatprep.mubr.f32.mxu0 0.0
    %880 = vmatmul.mubr.f32.gmra.mxu0 %v581
    %v881 = vpop.f32.mrf.mxu0
    %v882 = vadd.f32 %v797, %v881
    %v883 = vpop.f32.mrf.mxu0
    %884 = vmatprep.mubr.f32.mxu0 0.0
    %885 = vmatmul.mubr.f32.gmra.mxu0 %v586
    %v886 = vpop.f32.mrf.mxu0
    %v887 = vadd.f32 %v802, %v886
    %v888 = vpop.f32.mrf.mxu0
    %889 = vdwg.mxu0
    %s890 = scalar_lea.vmem [#allocation4], 4
    %v891 = vld [vmem:[%s890] sm:$0x1]
    %v893 = vlaneseq
    %v894 = vshrl.u32 %v893, 7
    %v895 = vsub.s32 0, %v894
    %v896 = vrot.slane %v891, %v895
    %v898 = vadd.f32 %v872, %v896
    %v899 = vadd.f32 %v877, %v896
    %v900 = vadd.f32 %v882, %v896
    %v901 = vadd.f32 %v887, %v896
    %v902 = vmax.f32 %v898, 0.0
    %v903 = vmax.f32 %v899, 0.0
    %v904 = vmax.f32 %v900, 0.0
    %v905 = vmax.f32 %v901, 0.0
    %s906 = scalar_lea.vmem [#allocation2], 512
    %v907 = vld [vmem:[%s906] sm:$0xff]
    %v908 = vld [vmem:[%s906 + $0x8] sm:$0xff]
    %v909 = vld [vmem:[%s906 + $0x10] sm:$0xff]
    %v910 = vld [vmem:[%s906 + $0x18] sm:$0xff]
    %v911 = vld [vmem:[%s906 + $0x20] sm:$0xff]
    %v912 = vld [vmem:[%s906 + $0x28] sm:$0xff]
    %v913 = vld [vmem:[%s906 + $0x30] sm:$0xff]
    %v914 = vld [vmem:[%s906 + $0x38] sm:$0xff]
    %v915 = vld [vmem:[%s906 + $0x40] sm:$0xff]
    %v916 = vld [vmem:[%s906 + $0x48] sm:$0xff]
    %v917 = vld [vmem:[%s906 + $0x50] sm:$0xff]
    %v918 = vld [vmem:[%s906 + $0x58] sm:$0xff]
    %v919 = vld [vmem:[%s906 + $0x60] sm:$0xff]
    %v920 = vld [vmem:[%s906 + $0x68] sm:$0xff]
    %v921 = vld [vmem:[%s906 + $0x70] sm:$0xff]
    %v922 = vld [vmem:[%s906 + $0x78] sm:$0xff]
    %s923 = scalar_lea.vmem [#allocation4], 5
    %v924 = vld [vmem:[%s923] sm:$0x1]
    %v926 = vlaneseq
    %v927 = vshrl.u32 %v926, 7
    %v928 = vsub.s32 0, %v927
    %v929 = vrot.slane %v924, %v928
    %931 = vmatprep.subr.mxu0 0.0
    %932 = vmatpush1.msra.mxu0 %v922
    %933 = vmatprep.subr.mxu0 0.0
    %934 = vmatpush1.msra.mxu0 %v921
    %935 = vmatprep.subr.mxu0 0.0
    %936 = vmatpush1.msra.mxu0 %v920
    %937 = vmatprep.subr.mxu0 0.0
    %938 = vmatpush1.msra.mxu0 %v919
    %939 = vmatprep.subr.mxu0 0.0
    %940 = vmatpush1.msra.mxu0 %v918
    %941 = vmatprep.subr.mxu0 0.0
    %942 = vmatpush1.msra.mxu0 %v917
    %943 = vmatprep.subr.mxu0 0.0
    %944 = vmatpush1.msra.mxu0 %v916
    %945 = vmatprep.subr.mxu0 0.0
    %946 = vmatpush1.msra.mxu0 %v915
    %947 = vmatprep.subr.mxu0 0.0
    %948 = vmatpush1.msra.mxu0 %v914
    %949 = vmatprep.subr.mxu0 0.0
    %950 = vmatpush1.msra.mxu0 %v913
    %951 = vmatprep.subr.mxu0 0.0
    %952 = vmatpush1.msra.mxu0 %v912
    %953 = vmatprep.subr.mxu0 0.0
    %954 = vmatpush1.msra.mxu0 %v911
    %955 = vmatprep.subr.mxu0 0.0
    %956 = vmatpush1.msra.mxu0 %v910
    %957 = vmatprep.subr.mxu0 0.0
    %958 = vmatpush1.msra.mxu0 %v909
    %959 = vmatprep.subr.mxu0 0.0
    %960 = vmatpush1.msra.mxu0 %v908
    %961 = vmatprep.subr.mxu0 0.0
    %962 = vmatpush1.msra.mxu0 %v907
    %963 = vmatprep.subr.mxu0 0.0
    %964 = vmatpush2.msra.mxu0 0.0
    %965 = vmatprep.subr.mxu0 0.0
    %966 = vmatpush2.msra.mxu0 0.0
    %967 = vmatprep.subr.mxu0 0.0
    %968 = vmatpush2.msra.mxu0 0.0
    %969 = vmatprep.subr.mxu0 0.0
    %970 = vmatpush2.msra.mxu0 0.0
    %971 = vmatprep.subr.mxu0 0.0
    %972 = vmatpush2.msra.mxu0 0.0
    %973 = vmatprep.subr.mxu0 0.0
    %974 = vmatpush2.msra.mxu0 0.0
    %975 = vmatprep.subr.mxu0 0.0
    %976 = vmatpush2.msra.mxu0 0.0
    %977 = vmatprep.subr.mxu0 0.0
    %978 = vmatpush2.msra.mxu0 0.0
    %979 = vmatprep.subr.mxu0 0.0
    %980 = vmatpush2.msra.mxu0 0.0
    %981 = vmatprep.subr.mxu0 0.0
    %982 = vmatpush2.msra.mxu0 0.0
    %983 = vmatprep.subr.mxu0 0.0
    %984 = vmatpush2.msra.mxu0 0.0
    %985 = vmatprep.subr.mxu0 0.0
    %986 = vmatpush2.msra.mxu0 0.0
    %987 = vmatprep.subr.mxu0 0.0
    %988 = vmatpush2.msra.mxu0 0.0
    %989 = vmatprep.subr.mxu0 0.0
    %990 = vmatpush2.msra.mxu0 0.0
    %991 = vmatprep.subr.mxu0 0.0
    %992 = vmatpush2.msra.mxu0 0.0
    %993 = vmatprep.subr.mxu0 0.0
    %994 = vmatpush2.msra.mxu0 0.0
    %995 = vmatprep.mubr.f32.mxu0 0.0
    %996 = vmatmul.mubr.f32.gmra.mxu0 %v902
    %v997 = vpop.f32.mrf.mxu0
    %v998 = vadd.f32 %v929, %v997
    %v999 = vpop.f32.mrf.mxu0
    %1000 = vmatprep.mubr.f32.mxu0 0.0
    %1001 = vmatmul.mubr.f32.gmra.mxu0 %v903
    %v1002 = vpop.f32.mrf.mxu0
    %v1003 = vadd.f32 %v929, %v1002
    %v1004 = vpop.f32.mrf.mxu0
    %1005 = vmatprep.mubr.f32.mxu0 0.0
    %1006 = vmatmul.mubr.f32.gmra.mxu0 %v904
    %v1007 = vpop.f32.mrf.mxu0
    %v1008 = vadd.f32 %v929, %v1007
    %v1009 = vpop.f32.mrf.mxu0
    %1010 = vmatprep.mubr.f32.mxu0 0.0
    %1011 = vmatmul.mubr.f32.gmra.mxu0 %v905
    %v1012 = vpop.f32.mrf.mxu0
    %v1013 = vadd.f32 %v929, %v1012
    %v1014 = vpop.f32.mrf.mxu0
    %1015 = vdwg.mxu0
    %vm1017 = vcmask 261120
    %v1018 = vsel %vm1017, %v127, 0
    %1020 = vmatprep.subr.mxu0 0.0
    %1021 = vmatpush1.msra.mxu0 0.0
    %1022 = vmatprep.subr.mxu0 0.0
    %1023 = vmatpush1.msra.mxu0 0.0
    %1024 = vmatprep.subr.mxu0 0.0
    %1025 = vmatpush1.msra.mxu0 0.0
    %1026 = vmatprep.subr.mxu0 0.0
    %1027 = vmatpush1.msra.mxu0 0.0
    %1028 = vmatprep.subr.mxu0 0.0
    %1029 = vmatpush1.msra.mxu0 0.0
    %1030 = vmatprep.subr.mxu0 0.0
    %1031 = vmatpush1.msra.mxu0 0.0
    %1032 = vmatprep.subr.mxu0 0.0
    %1033 = vmatpush1.msra.mxu0 0.0
    %1034 = vmatprep.subr.mxu0 0.0
    %1035 = vmatpush1.msra.mxu0 0.0
    %1036 = vmatprep.subr.mxu0 0.0
    %1037 = vmatpush1.msra.mxu0 0.0
    %1038 = vmatprep.subr.mxu0 0.0
    %1039 = vmatpush1.msra.mxu0 0.0
    %1040 = vmatprep.subr.mxu0 0.0
    %1041 = vmatpush1.msra.mxu0 0.0
    %1042 = vmatprep.subr.mxu0 0.0
    %1043 = vmatpush1.msra.mxu0 0.0
    %1044 = vmatprep.subr.mxu0 0.0
    %1045 = vmatpush1.msra.mxu0 %v1013
    %1046 = vmatprep.subr.mxu0 0.0
    %1047 = vmatpush1.msra.mxu0 %v1008
    %1048 = vmatprep.subr.mxu0 0.0
    %1049 = vmatpush1.msra.mxu0 %v1003
    %1050 = vmatprep.subr.mxu0 0.0
    %1051 = vmatpush1.msra.mxu0 %v998
    %1052 = vmatprep.subr.mxu0 0.0
    %1053 = vmatpush2.msra.mxu0 0.0
    %1054 = vmatprep.subr.mxu0 0.0
    %1055 = vmatpush2.msra.mxu0 0.0
    %1056 = vmatprep.subr.mxu0 0.0
    %1057 = vmatpush2.msra.mxu0 0.0
    %1058 = vmatprep.subr.mxu0 0.0
    %1059 = vmatpush2.msra.mxu0 0.0
    %1060 = vmatprep.subr.mxu0 0.0
    %1061 = vmatpush2.msra.mxu0 0.0
    %1062 = vmatprep.subr.mxu0 0.0
    %1063 = vmatpush2.msra.mxu0 0.0
    %1064 = vmatprep.subr.mxu0 0.0
    %1065 = vmatpush2.msra.mxu0 0.0
    %1066 = vmatprep.subr.mxu0 0.0
    %1067 = vmatpush2.msra.mxu0 0.0
    %1068 = vmatprep.subr.mxu0 0.0
    %1069 = vmatpush2.msra.mxu0 0.0
    %1070 = vmatprep.subr.mxu0 0.0
    %1071 = vmatpush2.msra.mxu0 0.0
    %1072 = vmatprep.subr.mxu0 0.0
    %1073 = vmatpush2.msra.mxu0 0.0
    %1074 = vmatprep.subr.mxu0 0.0
    %1075 = vmatpush2.msra.mxu0 0.0
    %1076 = vmatprep.subr.mxu0 0.0
    %1077 = vmatpush2.msra.mxu0 0.0
    %1078 = vmatprep.subr.mxu0 0.0
    %1079 = vmatpush2.msra.mxu0 0.0
    %1080 = vmatprep.subr.mxu0 0.0
    %1081 = vmatpush2.msra.mxu0 0.0
    %1082 = vmatprep.subr.mxu0 0.0
    %1083 = vmatpush2.msra.mxu0 0.0
    %1084 = vmatprep.mubr.f32.mxu0 0.0
    %1085 = vmatmul.mubr.f32.gmra.mxu0 %v1018
    %v1086 = vpop.f32.mrf.mxu0
    %v1087 = vadd.f32 0.0, %v1086
    %v1088 = vpop.f32.mrf.mxu0
    %1089 = vmatprep.mubr.f32.mxu0 0.0
    %1090 = vmatmul.mubr.f32.gmra.mxu0 %v1018
    %v1091 = vpop.f32.mrf.mxu0
    %v1092 = vadd.f32 0.0, %v1091
    %v1093 = vpop.f32.mrf.mxu0
    %1094 = vdwg.mxu0
    %s1095 = scalar_lea.vmem [#allocation2], 640
    %v1096 = vld [vmem:[%s1095] sm:$0xff]
    %v1097 = vld [vmem:[%s1095 + $0x8] sm:$0xff]
    %v1098 = vld [vmem:[%s1095 + $0x10] sm:$0xff]
    %v1099 = vld [vmem:[%s1095 + $0x18] sm:$0xff]
    %v1100 = vld [vmem:[%s1095 + $0x20] sm:$0xff]
    %v1101 = vld [vmem:[%s1095 + $0x28] sm:$0xff]
    %v1102 = vld [vmem:[%s1095 + $0x30] sm:$0xff]
    %v1103 = vld [vmem:[%s1095 + $0x38] sm:$0xff]
    %v1104 = vld [vmem:[%s1095 + $0x40] sm:$0xff]
    %v1105 = vld [vmem:[%s1095 + $0x48] sm:$0xff]
    %v1106 = vld [vmem:[%s1095 + $0x50] sm:$0xff]
    %v1107 = vld [vmem:[%s1095 + $0x58] sm:$0xff]
    %v1108 = vld [vmem:[%s1095 + $0x60] sm:$0xff]
    %v1109 = vld [vmem:[%s1095 + $0x68] sm:$0xff]
    %v1110 = vld [vmem:[%s1095 + $0x70] sm:$0xff]
    %v1111 = vld [vmem:[%s1095 + $0x78] sm:$0xff]
    %s1112 = scalar_lea.vmem [#allocation2], 768
    %v1113 = vld [vmem:[%s1112] sm:$0xff]
    %v1114 = vld [vmem:[%s1112 + $0x8] sm:$0xff]
    %v1115 = vld [vmem:[%s1112 + $0x10] sm:$0xff]
    %v1116 = vld [vmem:[%s1112 + $0x18] sm:$0xff]
    %v1117 = vld [vmem:[%s1112 + $0x20] sm:$0xff]
    %v1118 = vld [vmem:[%s1112 + $0x28] sm:$0xff]
    %v1119 = vld [vmem:[%s1112 + $0x30] sm:$0xff]
    %v1120 = vld [vmem:[%s1112 + $0x38] sm:$0xff]
    %v1121 = vld [vmem:[%s1112 + $0x40] sm:$0xff]
    %v1122 = vld [vmem:[%s1112 + $0x48] sm:$0xff]
    %v1123 = vld [vmem:[%s1112 + $0x50] sm:$0xff]
    %v1124 = vld [vmem:[%s1112 + $0x58] sm:$0xff]
    %v1125 = vld [vmem:[%s1112 + $0x60] sm:$0xff]
    %v1126 = vld [vmem:[%s1112 + $0x68] sm:$0xff]
    %v1127 = vld [vmem:[%s1112 + $0x70] sm:$0xff]
    %v1128 = vld [vmem:[%s1112 + $0x78] sm:$0xff]
    %1129 = vmatprep.subr.mxu0 0.0
    %1130 = vmatpush1.msra.mxu0 %v1128
    %1131 = vmatprep.subr.mxu0 0.0
    %1132 = vmatpush1.msra.mxu0 %v1127
    %1133 = vmatprep.subr.mxu0 0.0
    %1134 = vmatpush1.msra.mxu0 %v1126
    %1135 = vmatprep.subr.mxu0 0.0
    %1136 = vmatpush1.msra.mxu0 %v1125
    %1137 = vmatprep.subr.mxu0 0.0
    %1138 = vmatpush1.msra.mxu0 %v1124
    %1139 = vmatprep.subr.mxu0 0.0
    %1140 = vmatpush1.msra.mxu0 %v1123
    %1141 = vmatprep.subr.mxu0 0.0
    %1142 = vmatpush1.msra.mxu0 %v1122
    %1143 = vmatprep.subr.mxu0 0.0
    %1144 = vmatpush1.msra.mxu0 %v1121
    %1145 = vmatprep.subr.mxu0 0.0
    %1146 = vmatpush1.msra.mxu0 %v1120
    %1147 = vmatprep.subr.mxu0 0.0
    %1148 = vmatpush1.msra.mxu0 %v1119
    %1149 = vmatprep.subr.mxu0 0.0
    %1150 = vmatpush1.msra.mxu0 %v1118
    %1151 = vmatprep.subr.mxu0 0.0
    %1152 = vmatpush1.msra.mxu0 %v1117
    %1153 = vmatprep.subr.mxu0 0.0
    %1154 = vmatpush1.msra.mxu0 %v1116
    %1155 = vmatprep.subr.mxu0 0.0
    %1156 = vmatpush1.msra.mxu0 %v1115
    %1157 = vmatprep.subr.mxu0 0.0
    %1158 = vmatpush1.msra.mxu0 %v1114
    %1159 = vmatprep.subr.mxu0 0.0
    %1160 = vmatpush1.msra.mxu0 %v1113
    %1161 = vmatprep.subr.mxu0 0.0
    %1162 = vmatpush2.msra.mxu0 0.0
    %1163 = vmatprep.subr.mxu0 0.0
    %1164 = vmatpush2.msra.mxu0 0.0
    %1165 = vmatprep.subr.mxu0 0.0
    %1166 = vmatpush2.msra.mxu0 0.0
    %1167 = vmatprep.subr.mxu0 0.0
    %1168 = vmatpush2.msra.mxu0 0.0
    %1169 = vmatprep.subr.mxu0 0.0
    %1170 = vmatpush2.msra.mxu0 0.0
    %1171 = vmatprep.subr.mxu0 0.0
    %1172 = vmatpush2.msra.mxu0 0.0
    %1173 = vmatprep.subr.mxu0 0.0
    %1174 = vmatpush2.msra.mxu0 0.0
    %1175 = vmatprep.subr.mxu0 0.0
    %1176 = vmatpush2.msra.mxu0 0.0
    %1177 = vmatprep.subr.mxu0 0.0
    %1178 = vmatpush2.msra.mxu0 0.0
    %1179 = vmatprep.subr.mxu0 0.0
    %1180 = vmatpush2.msra.mxu0 0.0
    %1181 = vmatprep.subr.mxu0 0.0
    %1182 = vmatpush2.msra.mxu0 0.0
    %1183 = vmatprep.subr.mxu0 0.0
    %1184 = vmatpush2.msra.mxu0 0.0
    %1185 = vmatprep.subr.mxu0 0.0
    %1186 = vmatpush2.msra.mxu0 0.0
    %1187 = vmatprep.subr.mxu0 0.0
    %1188 = vmatpush2.msra.mxu0 0.0
    %1189 = vmatprep.subr.mxu0 0.0
    %1190 = vmatpush2.msra.mxu0 0.0
    %1191 = vmatprep.subr.mxu0 0.0
    %1192 = vmatpush2.msra.mxu0 0.0
    %1193 = vmatprep.mubr.f32.mxu0 0.0
    %1194 = vmatmul.mubr.f32.gmra.mxu0 %v1087
    %v1195 = vpop.f32.mrf.mxu0
    %v1196 = vadd.f32 0.0, %v1195
    %v1197 = vpop.f32.mrf.mxu0
    %1198 = vmatprep.mubr.f32.mxu0 0.0
    %1199 = vmatmul.mubr.f32.gmra.mxu0 %v1092
    %v1200 = vpop.f32.mrf.mxu0
    %v1201 = vadd.f32 0.0, %v1200
    %v1202 = vpop.f32.mrf.mxu0
    %1203 = vdwg.mxu0
    %1204 = vmatprep.subr.mxu0 0.0
    %1205 = vmatpush1.msra.mxu0 %v1111
    %1206 = vmatprep.subr.mxu0 0.0
    %1207 = vmatpush1.msra.mxu0 %v1110
    %1208 = vmatprep.subr.mxu0 0.0
    %1209 = vmatpush1.msra.mxu0 %v1109
    %1210 = vmatprep.subr.mxu0 0.0
    %1211 = vmatpush1.msra.mxu0 %v1108
    %1212 = vmatprep.subr.mxu0 0.0
    %1213 = vmatpush1.msra.mxu0 %v1107
    %1214 = vmatprep.subr.mxu0 0.0
    %1215 = vmatpush1.msra.mxu0 %v1106
    %1216 = vmatprep.subr.mxu0 0.0
    %1217 = vmatpush1.msra.mxu0 %v1105
    %1218 = vmatprep.subr.mxu0 0.0
    %1219 = vmatpush1.msra.mxu0 %v1104
    %1220 = vmatprep.subr.mxu0 0.0
    %1221 = vmatpush1.msra.mxu0 %v1103
    %1222 = vmatprep.subr.mxu0 0.0
    %1223 = vmatpush1.msra.mxu0 %v1102
    %1224 = vmatprep.subr.mxu0 0.0
    %1225 = vmatpush1.msra.mxu0 %v1101
    %1226 = vmatprep.subr.mxu0 0.0
    %1227 = vmatpush1.msra.mxu0 %v1100
    %1228 = vmatprep.subr.mxu0 0.0
    %1229 = vmatpush1.msra.mxu0 %v1099
    %1230 = vmatprep.subr.mxu0 0.0
    %1231 = vmatpush1.msra.mxu0 %v1098
    %1232 = vmatprep.subr.mxu0 0.0
    %1233 = vmatpush1.msra.mxu0 %v1097
    %1234 = vmatprep.subr.mxu0 0.0
    %1235 = vmatpush1.msra.mxu0 %v1096
    %1236 = vmatprep.subr.mxu0 0.0
    %1237 = vmatpush2.msra.mxu0 0.0
    %1238 = vmatprep.subr.mxu0 0.0
    %1239 = vmatpush2.msra.mxu0 0.0
    %1240 = vmatprep.subr.mxu0 0.0
    %1241 = vmatpush2.msra.mxu0 0.0
    %1242 = vmatprep.subr.mxu0 0.0
    %1243 = vmatpush2.msra.mxu0 0.0
    %1244 = vmatprep.subr.mxu0 0.0
    %1245 = vmatpush2.msra.mxu0 0.0
    %1246 = vmatprep.subr.mxu0 0.0
    %1247 = vmatpush2.msra.mxu0 0.0
    %1248 = vmatprep.subr.mxu0 0.0
    %1249 = vmatpush2.msra.mxu0 0.0
    %1250 = vmatprep.subr.mxu0 0.0
    %1251 = vmatpush2.msra.mxu0 0.0
    %1252 = vmatprep.subr.mxu0 0.0
    %1253 = vmatpush2.msra.mxu0 0.0
    %1254 = vmatprep.subr.mxu0 0.0
    %1255 = vmatpush2.msra.mxu0 0.0
    %1256 = vmatprep.subr.mxu0 0.0
    %1257 = vmatpush2.msra.mxu0 0.0
    %1258 = vmatprep.subr.mxu0 0.0
    %1259 = vmatpush2.msra.mxu0 0.0
    %1260 = vmatprep.subr.mxu0 0.0
    %1261 = vmatpush2.msra.mxu0 0.0
    %1262 = vmatprep.subr.mxu0 0.0
    %1263 = vmatpush2.msra.mxu0 0.0
    %1264 = vmatprep.subr.mxu0 0.0
    %1265 = vmatpush2.msra.mxu0 0.0
    %1266 = vmatprep.subr.mxu0 0.0
    %1267 = vmatpush2.msra.mxu0 0.0
    %1268 = vmatprep.mubr.f32.mxu0 0.0
    %1269 = vmatmul.mubr.f32.gmra.mxu0 %v489
    %v1270 = vpop.f32.mrf.mxu0
    %v1271 = vadd.f32 %v1196, %v1270
    %v1272 = vpop.f32.mrf.mxu0
    %1273 = vmatprep.mubr.f32.mxu0 0.0
    %1274 = vmatmul.mubr.f32.gmra.mxu0 %v490
    %v1275 = vpop.f32.mrf.mxu0
    %v1276 = vadd.f32 %v1201, %v1275
    %v1277 = vpop.f32.mrf.mxu0
    %1278 = vdwg.mxu0
    %s1279 = scalar_lea.vmem [#allocation4], 6
    %v1280 = vld [vmem:[%s1279] sm:$0x1]
    %v1282 = vlaneseq
    %v1283 = vshrl.u32 %v1282, 7
    %v1284 = vsub.s32 0, %v1283
    %v1285 = vrot.slane %v1280, %v1284
    %v1287 = vadd.f32 %v1271, %v1285
    %v1288 = vadd.f32 %v1276, %v1285
    %v1289 = vmax.f32 %v1287, 0.0
    %v1290 = vmax.f32 %v1288, 0.0
    %s1291 = scalar_lea.vmem [#allocation2], 896
    %v1292 = vld [vmem:[%s1291] sm:$0xff]
    %v1293 = vld [vmem:[%s1291 + $0x8] sm:$0xff]
    %v1294 = vld [vmem:[%s1291 + $0x10] sm:$0xff]
    %v1295 = vld [vmem:[%s1291 + $0x18] sm:$0xff]
    %v1296 = vld [vmem:[%s1291 + $0x20] sm:$0xff]
    %v1297 = vld [vmem:[%s1291 + $0x28] sm:$0xff]
    %v1298 = vld [vmem:[%s1291 + $0x30] sm:$0xff]
    %v1299 = vld [vmem:[%s1291 + $0x38] sm:$0xff]
    %v1300 = vld [vmem:[%s1291 + $0x40] sm:$0xff]
    %v1301 = vld [vmem:[%s1291 + $0x48] sm:$0xff]
    %v1302 = vld [vmem:[%s1291 + $0x50] sm:$0xff]
    %v1303 = vld [vmem:[%s1291 + $0x58] sm:$0xff]
    %v1304 = vld [vmem:[%s1291 + $0x60] sm:$0xff]
    %v1305 = vld [vmem:[%s1291 + $0x68] sm:$0xff]
    %v1306 = vld [vmem:[%s1291 + $0x70] sm:$0xff]
    %v1307 = vld [vmem:[%s1291 + $0x78] sm:$0xff]
    %s1308 = scalar_lea.vmem [#allocation4], 7
    %v1309 = vld [vmem:[%s1308] sm:$0x1]
    %v1311 = vlaneseq
    %v1312 = vshrl.u32 %v1311, 7
    %v1313 = vsub.s32 0, %v1312
    %v1314 = vrot.slane %v1309, %v1313
    %1316 = vmatprep.subr.mxu0 0.0
    %1317 = vmatpush1.msra.mxu0 %v1307
    %1318 = vmatprep.subr.mxu0 0.0
    %1319 = vmatpush1.msra.mxu0 %v1306
    %1320 = vmatprep.subr.mxu0 0.0
    %1321 = vmatpush1.msra.mxu0 %v1305
    %1322 = vmatprep.subr.mxu0 0.0
    %1323 = vmatpush1.msra.mxu0 %v1304
    %1324 = vmatprep.subr.mxu0 0.0
    %1325 = vmatpush1.msra.mxu0 %v1303
    %1326 = vmatprep.subr.mxu0 0.0
    %1327 = vmatpush1.msra.mxu0 %v1302
    %1328 = vmatprep.subr.mxu0 0.0
    %1329 = vmatpush1.msra.mxu0 %v1301
    %1330 = vmatprep.subr.mxu0 0.0
    %1331 = vmatpush1.msra.mxu0 %v1300
    %1332 = vmatprep.subr.mxu0 0.0
    %1333 = vmatpush1.msra.mxu0 %v1299
    %1334 = vmatprep.subr.mxu0 0.0
    %1335 = vmatpush1.msra.mxu0 %v1298
    %1336 = vmatprep.subr.mxu0 0.0
    %1337 = vmatpush1.msra.mxu0 %v1297
    %1338 = vmatprep.subr.mxu0 0.0
    %1339 = vmatpush1.msra.mxu0 %v1296
    %1340 = vmatprep.subr.mxu0 0.0
    %1341 = vmatpush1.msra.mxu0 %v1295
    %1342 = vmatprep.subr.mxu0 0.0
    %1343 = vmatpush1.msra.mxu0 %v1294
    %1344 = vmatprep.subr.mxu0 0.0
    %1345 = vmatpush1.msra.mxu0 %v1293
    %1346 = vmatprep.subr.mxu0 0.0
    %1347 = vmatpush1.msra.mxu0 %v1292
    %1348 = vmatprep.subr.mxu0 0.0
    %1349 = vmatpush2.msra.mxu0 0.0
    %1350 = vmatprep.subr.mxu0 0.0
    %1351 = vmatpush2.msra.mxu0 0.0
    %1352 = vmatprep.subr.mxu0 0.0
    %1353 = vmatpush2.msra.mxu0 0.0
    %1354 = vmatprep.subr.mxu0 0.0
    %1355 = vmatpush2.msra.mxu0 0.0
    %1356 = vmatprep.subr.mxu0 0.0
    %1357 = vmatpush2.msra.mxu0 0.0
    %1358 = vmatprep.subr.mxu0 0.0
    %1359 = vmatpush2.msra.mxu0 0.0
    %1360 = vmatprep.subr.mxu0 0.0
    %1361 = vmatpush2.msra.mxu0 0.0
    %1362 = vmatprep.subr.mxu0 0.0
    %1363 = vmatpush2.msra.mxu0 0.0
    %1364 = vmatprep.subr.mxu0 0.0
    %1365 = vmatpush2.msra.mxu0 0.0
    %1366 = vmatprep.subr.mxu0 0.0
    %1367 = vmatpush2.msra.mxu0 0.0
    %1368 = vmatprep.subr.mxu0 0.0
    %1369 = vmatpush2.msra.mxu0 0.0
    %1370 = vmatprep.subr.mxu0 0.0
    %1371 = vmatpush2.msra.mxu0 0.0
    %1372 = vmatprep.subr.mxu0 0.0
    %1373 = vmatpush2.msra.mxu0 0.0
    %1374 = vmatprep.subr.mxu0 0.0
    %1375 = vmatpush2.msra.mxu0 0.0
    %1376 = vmatprep.subr.mxu0 0.0
    %1377 = vmatpush2.msra.mxu0 0.0
    %1378 = vmatprep.subr.mxu0 0.0
    %1379 = vmatpush2.msra.mxu0 0.0
    %1380 = vmatprep.mubr.f32.mxu0 0.0
    %1381 = vmatmul.mubr.f32.gmra.mxu0 %v1289
    %v1382 = vpop.f32.mrf.mxu0
    %v1383 = vadd.f32 %v1314, %v1382
    %v1384 = vpop.f32.mrf.mxu0
    %1385 = vmatprep.mubr.f32.mxu0 0.0
    %1386 = vmatmul.mubr.f32.gmra.mxu0 %v1290
    %v1387 = vpop.f32.mrf.mxu0
    %v1388 = vadd.f32 %v1314, %v1387
    %v1389 = vpop.f32.mrf.mxu0
    %1390 = vdwg.mxu0
    %v1391 = vmax.f32 %v1383, 0.0
    %v1392 = vmax.f32 %v1388, 0.0
    %1393 = vmatprep.subr.mxu0 0.0
    %1394 = vmatpush1.msra.mxu0 0.0
    %1395 = vmatprep.subr.mxu0 0.0
    %1396 = vmatpush1.msra.mxu0 0.0
    %1397 = vmatprep.subr.mxu0 0.0
    %1398 = vmatpush1.msra.mxu0 0.0
    %1399 = vmatprep.subr.mxu0 0.0
    %1400 = vmatpush1.msra.mxu0 0.0
    %1401 = vmatprep.subr.mxu0 0.0
    %1402 = vmatpush1.msra.mxu0 0.0
    %1403 = vmatprep.subr.mxu0 0.0
    %1404 = vmatpush1.msra.mxu0 0.0
    %1405 = vmatprep.subr.mxu0 0.0
    %1406 = vmatpush1.msra.mxu0 0.0
    %1407 = vmatprep.subr.mxu0 0.0
    %1408 = vmatpush1.msra.mxu0 0.0
    %1409 = vmatprep.subr.mxu0 0.0
    %1410 = vmatpush1.msra.mxu0 0.0
    %1411 = vmatprep.subr.mxu0 0.0
    %1412 = vmatpush1.msra.mxu0 0.0
    %1413 = vmatprep.subr.mxu0 0.0
    %1414 = vmatpush1.msra.mxu0 0.0
    %1415 = vmatprep.subr.mxu0 0.0
    %1416 = vmatpush1.msra.mxu0 0.0
    %1417 = vmatprep.subr.mxu0 0.0
    %1418 = vmatpush1.msra.mxu0 0.0
    %1419 = vmatprep.subr.mxu0 0.0
    %1420 = vmatpush1.msra.mxu0 0.0
    %1421 = vmatprep.subr.mxu0 0.0
    %1422 = vmatpush1.msra.mxu0 %v1392
    %1423 = vmatprep.subr.mxu0 0.0
    %1424 = vmatpush1.msra.mxu0 %v1391
    %1425 = vmatprep.subr.mxu0 0.0
    %1426 = vmatpush2.msra.mxu0 0.0
    %1427 = vmatprep.subr.mxu0 0.0
    %1428 = vmatpush2.msra.mxu0 0.0
    %1429 = vmatprep.subr.mxu0 0.0
    %1430 = vmatpush2.msra.mxu0 0.0
    %1431 = vmatprep.subr.mxu0 0.0
    %1432 = vmatpush2.msra.mxu0 0.0
    %1433 = vmatprep.subr.mxu0 0.0
    %1434 = vmatpush2.msra.mxu0 0.0
    %1435 = vmatprep.subr.mxu0 0.0
    %1436 = vmatpush2.msra.mxu0 0.0
    %1437 = vmatprep.subr.mxu0 0.0
    %1438 = vmatpush2.msra.mxu0 0.0
    %1439 = vmatprep.subr.mxu0 0.0
    %1440 = vmatpush2.msra.mxu0 0.0
    %1441 = vmatprep.subr.mxu0 0.0
    %1442 = vmatpush2.msra.mxu0 0.0
    %1443 = vmatprep.subr.mxu0 0.0
    %1444 = vmatpush2.msra.mxu0 0.0
    %1445 = vmatprep.subr.mxu0 0.0
    %1446 = vmatpush2.msra.mxu0 0.0
    %1447 = vmatprep.subr.mxu0 0.0
    %1448 = vmatpush2.msra.mxu0 0.0
    %1449 = vmatprep.subr.mxu0 0.0
    %1450 = vmatpush2.msra.mxu0 0.0
    %1451 = vmatprep.subr.mxu0 0.0
    %1452 = vmatpush2.msra.mxu0 0.0
    %1453 = vmatprep.subr.mxu0 0.0
    %1454 = vmatpush2.msra.mxu0 0.0
    %1455 = vmatprep.subr.mxu0 0.0
    %1456 = vmatpush2.msra.mxu0 0.0
    %1457 = vmatprep.mubr.f32.mxu0 0.0
    %1458 = vmatmul.mubr.f32.gmra.mxu0 %v493
    %v1459 = vpop.f32.mrf.mxu0
    %v1460 = vadd.f32 0.0, %v1459
    %v1461 = vpop.f32.mrf.mxu0
    %1462 = vmatprep.mubr.f32.mxu0 0.0
    %1463 = vmatmul.mubr.f32.gmra.mxu0 %v496
    %v1464 = vpop.f32.mrf.mxu0
    %v1465 = vadd.f32 0.0, %v1464
    %v1466 = vpop.f32.mrf.mxu0
    %1467 = vmatprep.mubr.f32.mxu0 0.0
    %1468 = vmatmul.mubr.f32.gmra.mxu0 %v499
    %v1469 = vpop.f32.mrf.mxu0
    %v1470 = vadd.f32 0.0, %v1469
    %v1471 = vpop.f32.mrf.mxu0
    %1472 = vmatprep.mubr.f32.mxu0 0.0
    %1473 = vmatmul.mubr.f32.gmra.mxu0 %v502
    %v1474 = vpop.f32.mrf.mxu0
    %v1475 = vadd.f32 0.0, %v1474
    %v1476 = vpop.f32.mrf.mxu0
    %1477 = vdwg.mxu0
    %1478 = vmatprep.subr.mxu0 0.0
    %1479 = vmatpush1.msra.mxu0 0.0
    %1480 = vmatprep.subr.mxu0 0.0
    %1481 = vmatpush1.msra.mxu0 0.0
    %1482 = vmatprep.subr.mxu0 0.0
    %1483 = vmatpush1.msra.mxu0 0.0
    %1484 = vmatprep.subr.mxu0 0.0
    %1485 = vmatpush1.msra.mxu0 0.0
    %1486 = vmatprep.subr.mxu0 0.0
    %1487 = vmatpush1.msra.mxu0 0.0
    %1488 = vmatprep.subr.mxu0 0.0
    %1489 = vmatpush1.msra.mxu0 0.0
    %1490 = vmatprep.subr.mxu0 0.0
    %1491 = vmatpush1.msra.mxu0 0.0
    %1492 = vmatprep.subr.mxu0 0.0
    %1493 = vmatpush1.msra.mxu0 0.0
    %1494 = vmatprep.subr.mxu0 0.0
    %1495 = vmatpush1.msra.mxu0 0.0
    %1496 = vmatprep.subr.mxu0 0.0
    %1497 = vmatpush1.msra.mxu0 0.0
    %1498 = vmatprep.subr.mxu0 0.0
    %1499 = vmatpush1.msra.mxu0 0.0
    %1500 = vmatprep.subr.mxu0 0.0
    %1501 = vmatpush1.msra.mxu0 0.0
    %1502 = vmatprep.subr.mxu0 0.0
    %1503 = vmatpush1.msra.mxu0 0.0
    %1504 = vmatprep.subr.mxu0 0.0
    %1505 = vmatpush1.msra.mxu0 0.0
    %1506 = vmatprep.subr.mxu0 0.0
    %1507 = vmatpush1.msra.mxu0 %v1392
    %1508 = vmatprep.subr.mxu0 0.0
    %1509 = vmatpush1.msra.mxu0 %v1391
    %1510 = vmatprep.subr.mxu0 0.0
    %1511 = vmatpush2.msra.mxu0 0.0
    %1512 = vmatprep.subr.mxu0 0.0
    %1513 = vmatpush2.msra.mxu0 0.0
    %1514 = vmatprep.subr.mxu0 0.0
    %1515 = vmatpush2.msra.mxu0 0.0
    %1516 = vmatprep.subr.mxu0 0.0
    %1517 = vmatpush2.msra.mxu0 0.0
    %1518 = vmatprep.subr.mxu0 0.0
    %1519 = vmatpush2.msra.mxu0 0.0
    %1520 = vmatprep.subr.mxu0 0.0
    %1521 = vmatpush2.msra.mxu0 0.0
    %1522 = vmatprep.subr.mxu0 0.0
    %1523 = vmatpush2.msra.mxu0 0.0
    %1524 = vmatprep.subr.mxu0 0.0
    %1525 = vmatpush2.msra.mxu0 0.0
    %1526 = vmatprep.subr.mxu0 0.0
    %1527 = vmatpush2.msra.mxu0 0.0
    %1528 = vmatprep.subr.mxu0 0.0
    %1529 = vmatpush2.msra.mxu0 0.0
    %1530 = vmatprep.subr.mxu0 0.0
    %1531 = vmatpush2.msra.mxu0 0.0
    %1532 = vmatprep.subr.mxu0 0.0
    %1533 = vmatpush2.msra.mxu0 0.0
    %1534 = vmatprep.subr.mxu0 0.0
    %1535 = vmatpush2.msra.mxu0 0.0
    %1536 = vmatprep.subr.mxu0 0.0
    %1537 = vmatpush2.msra.mxu0 0.0
    %1538 = vmatprep.subr.mxu0 0.0
    %1539 = vmatpush2.msra.mxu0 0.0
    %1540 = vmatprep.subr.mxu0 0.0
    %1541 = vmatpush2.msra.mxu0 0.0
    %1542 = vmatprep.mubr.f32.mxu0 0.0
    %1543 = vmatmul.mubr.f32.gmra.mxu0 %v590
    %v1544 = vpop.f32.mrf.mxu0
    %v1545 = vadd.f32 0.0, %v1544
    %v1546 = vpop.f32.mrf.mxu0
    %1547 = vmatprep.mubr.f32.mxu0 0.0
    %1548 = vmatmul.mubr.f32.gmra.mxu0 %v593
    %v1549 = vpop.f32.mrf.mxu0
    %v1550 = vadd.f32 0.0, %v1549
    %v1551 = vpop.f32.mrf.mxu0
    %1552 = vmatprep.mubr.f32.mxu0 0.0
    %1553 = vmatmul.mubr.f32.gmra.mxu0 %v596
    %v1554 = vpop.f32.mrf.mxu0
    %v1555 = vadd.f32 0.0, %v1554
    %v1556 = vpop.f32.mrf.mxu0
    %1557 = vmatprep.mubr.f32.mxu0 0.0
    %1558 = vmatmul.mubr.f32.gmra.mxu0 %v599
    %v1559 = vpop.f32.mrf.mxu0
    %v1560 = vadd.f32 0.0, %v1559
    %v1561 = vpop.f32.mrf.mxu0
    %1562 = vdwg.mxu0
    %s1563 = scalar_lea.vmem [#allocation2], 1024
    %v1564 = vld [vmem:[%s1563] sm:$0xff]
    %v1565 = vld [vmem:[%s1563 + $0x8] sm:$0xff]
    %v1566 = vld [vmem:[%s1563 + $0x10] sm:$0xff]
    %v1567 = vld [vmem:[%s1563 + $0x18] sm:$0xff]
    %v1568 = vld [vmem:[%s1563 + $0x20] sm:$0xff]
    %v1569 = vld [vmem:[%s1563 + $0x28] sm:$0xff]
    %v1570 = vld [vmem:[%s1563 + $0x30] sm:$0xff]
    %v1571 = vld [vmem:[%s1563 + $0x38] sm:$0xff]
    %v1572 = vld [vmem:[%s1563 + $0x40] sm:$0xff]
    %v1573 = vld [vmem:[%s1563 + $0x48] sm:$0xff]
    %v1574 = vld [vmem:[%s1563 + $0x50] sm:$0xff]
    %v1575 = vld [vmem:[%s1563 + $0x58] sm:$0xff]
    %v1576 = vld [vmem:[%s1563 + $0x60] sm:$0xff]
    %v1577 = vld [vmem:[%s1563 + $0x68] sm:$0xff]
    %v1578 = vld [vmem:[%s1563 + $0x70] sm:$0xff]
    %v1579 = vld [vmem:[%s1563 + $0x78] sm:$0xff]
    %s1580 = scalar_lea.vmem [#allocation2], 1152
    %v1581 = vld [vmem:[%s1580] sm:$0xff]
    %v1582 = vld [vmem:[%s1580 + $0x8] sm:$0xff]
    %v1583 = vld [vmem:[%s1580 + $0x10] sm:$0xff]
    %v1584 = vld [vmem:[%s1580 + $0x18] sm:$0xff]
    %v1585 = vld [vmem:[%s1580 + $0x20] sm:$0xff]
    %v1586 = vld [vmem:[%s1580 + $0x28] sm:$0xff]
    %v1587 = vld [vmem:[%s1580 + $0x30] sm:$0xff]
    %v1588 = vld [vmem:[%s1580 + $0x38] sm:$0xff]
    %v1589 = vld [vmem:[%s1580 + $0x40] sm:$0xff]
    %v1590 = vld [vmem:[%s1580 + $0x48] sm:$0xff]
    %v1591 = vld [vmem:[%s1580 + $0x50] sm:$0xff]
    %v1592 = vld [vmem:[%s1580 + $0x58] sm:$0xff]
    %v1593 = vld [vmem:[%s1580 + $0x60] sm:$0xff]
    %v1594 = vld [vmem:[%s1580 + $0x68] sm:$0xff]
    %v1595 = vld [vmem:[%s1580 + $0x70] sm:$0xff]
    %v1596 = vld [vmem:[%s1580 + $0x78] sm:$0xff]
    %1597 = vmatprep.subr.mxu0 0.0
    %1598 = vmatpush1.msra.mxu0 %v1596
    %1599 = vmatprep.subr.mxu0 0.0
    %1600 = vmatpush1.msra.mxu0 %v1595
    %1601 = vmatprep.subr.mxu0 0.0
    %1602 = vmatpush1.msra.mxu0 %v1594
    %1603 = vmatprep.subr.mxu0 0.0
    %1604 = vmatpush1.msra.mxu0 %v1593
    %1605 = vmatprep.subr.mxu0 0.0
    %1606 = vmatpush1.msra.mxu0 %v1592
    %1607 = vmatprep.subr.mxu0 0.0
    %1608 = vmatpush1.msra.mxu0 %v1591
    %1609 = vmatprep.subr.mxu0 0.0
    %1610 = vmatpush1.msra.mxu0 %v1590
    %1611 = vmatprep.subr.mxu0 0.0
    %1612 = vmatpush1.msra.mxu0 %v1589
    %1613 = vmatprep.subr.mxu0 0.0
    %1614 = vmatpush1.msra.mxu0 %v1588
    %1615 = vmatprep.subr.mxu0 0.0
    %1616 = vmatpush1.msra.mxu0 %v1587
    %1617 = vmatprep.subr.mxu0 0.0
    %1618 = vmatpush1.msra.mxu0 %v1586
    %1619 = vmatprep.subr.mxu0 0.0
    %1620 = vmatpush1.msra.mxu0 %v1585
    %1621 = vmatprep.subr.mxu0 0.0
    %1622 = vmatpush1.msra.mxu0 %v1584
    %1623 = vmatprep.subr.mxu0 0.0
    %1624 = vmatpush1.msra.mxu0 %v1583
    %1625 = vmatprep.subr.mxu0 0.0
    %1626 = vmatpush1.msra.mxu0 %v1582
    %1627 = vmatprep.subr.mxu0 0.0
    %1628 = vmatpush1.msra.mxu0 %v1581
    %1629 = vmatprep.subr.mxu0 0.0
    %1630 = vmatpush2.msra.mxu0 0.0
    %1631 = vmatprep.subr.mxu0 0.0
    %1632 = vmatpush2.msra.mxu0 0.0
    %1633 = vmatprep.subr.mxu0 0.0
    %1634 = vmatpush2.msra.mxu0 0.0
    %1635 = vmatprep.subr.mxu0 0.0
    %1636 = vmatpush2.msra.mxu0 0.0
    %1637 = vmatprep.subr.mxu0 0.0
    %1638 = vmatpush2.msra.mxu0 0.0
    %1639 = vmatprep.subr.mxu0 0.0
    %1640 = vmatpush2.msra.mxu0 0.0
    %1641 = vmatprep.subr.mxu0 0.0
    %1642 = vmatpush2.msra.mxu0 0.0
    %1643 = vmatprep.subr.mxu0 0.0
    %1644 = vmatpush2.msra.mxu0 0.0
    %1645 = vmatprep.subr.mxu0 0.0
    %1646 = vmatpush2.msra.mxu0 0.0
    %1647 = vmatprep.subr.mxu0 0.0
    %1648 = vmatpush2.msra.mxu0 0.0
    %1649 = vmatprep.subr.mxu0 0.0
    %1650 = vmatpush2.msra.mxu0 0.0
    %1651 = vmatprep.subr.mxu0 0.0
    %1652 = vmatpush2.msra.mxu0 0.0
    %1653 = vmatprep.subr.mxu0 0.0
    %1654 = vmatpush2.msra.mxu0 0.0
    %1655 = vmatprep.subr.mxu0 0.0
    %1656 = vmatpush2.msra.mxu0 0.0
    %1657 = vmatprep.subr.mxu0 0.0
    %1658 = vmatpush2.msra.mxu0 0.0
    %1659 = vmatprep.subr.mxu0 0.0
    %1660 = vmatpush2.msra.mxu0 0.0
    %1661 = vmatprep.mubr.f32.mxu0 0.0
    %1662 = vmatmul.mubr.f32.gmra.mxu0 %v1545
    %v1663 = vpop.f32.mrf.mxu0
    %v1664 = vadd.f32 0.0, %v1663
    %v1665 = vpop.f32.mrf.mxu0
    %1666 = vmatprep.mubr.f32.mxu0 0.0
    %1667 = vmatmul.mubr.f32.gmra.mxu0 %v1550
    %v1668 = vpop.f32.mrf.mxu0
    %v1669 = vadd.f32 0.0, %v1668
    %v1670 = vpop.f32.mrf.mxu0
    %1671 = vmatprep.mubr.f32.mxu0 0.0
    %1672 = vmatmul.mubr.f32.gmra.mxu0 %v1555
    %v1673 = vpop.f32.mrf.mxu0
    %v1674 = vadd.f32 0.0, %v1673
    %v1675 = vpop.f32.mrf.mxu0
    %1676 = vmatprep.mubr.f32.mxu0 0.0
    %1677 = vmatmul.mubr.f32.gmra.mxu0 %v1560
    %v1678 = vpop.f32.mrf.mxu0
    %v1679 = vadd.f32 0.0, %v1678
    %v1680 = vpop.f32.mrf.mxu0
    %1681 = vdwg.mxu0
    %1682 = vmatprep.subr.mxu0 0.0
    %1683 = vmatpush1.msra.mxu0 %v1579
    %1684 = vmatprep.subr.mxu0 0.0
    %1685 = vmatpush1.msra.mxu0 %v1578
    %1686 = vmatprep.subr.mxu0 0.0
    %1687 = vmatpush1.msra.mxu0 %v1577
    %1688 = vmatprep.subr.mxu0 0.0
    %1689 = vmatpush1.msra.mxu0 %v1576
    %1690 = vmatprep.subr.mxu0 0.0
    %1691 = vmatpush1.msra.mxu0 %v1575
    %1692 = vmatprep.subr.mxu0 0.0
    %1693 = vmatpush1.msra.mxu0 %v1574
    %1694 = vmatprep.subr.mxu0 0.0
    %1695 = vmatpush1.msra.mxu0 %v1573
    %1696 = vmatprep.subr.mxu0 0.0
    %1697 = vmatpush1.msra.mxu0 %v1572
    %1698 = vmatprep.subr.mxu0 0.0
    %1699 = vmatpush1.msra.mxu0 %v1571
    %1700 = vmatprep.subr.mxu0 0.0
    %1701 = vmatpush1.msra.mxu0 %v1570
    %1702 = vmatprep.subr.mxu0 0.0
    %1703 = vmatpush1.msra.mxu0 %v1569
    %1704 = vmatprep.subr.mxu0 0.0
    %1705 = vmatpush1.msra.mxu0 %v1568
    %1706 = vmatprep.subr.mxu0 0.0
    %1707 = vmatpush1.msra.mxu0 %v1567
    %1708 = vmatprep.subr.mxu0 0.0
    %1709 = vmatpush1.msra.mxu0 %v1566
    %1710 = vmatprep.subr.mxu0 0.0
    %1711 = vmatpush1.msra.mxu0 %v1565
    %1712 = vmatprep.subr.mxu0 0.0
    %1713 = vmatpush1.msra.mxu0 %v1564
    %1714 = vmatprep.subr.mxu0 0.0
    %1715 = vmatpush2.msra.mxu0 0.0
    %1716 = vmatprep.subr.mxu0 0.0
    %1717 = vmatpush2.msra.mxu0 0.0
    %1718 = vmatprep.subr.mxu0 0.0
    %1719 = vmatpush2.msra.mxu0 0.0
    %1720 = vmatprep.subr.mxu0 0.0
    %1721 = vmatpush2.msra.mxu0 0.0
    %1722 = vmatprep.subr.mxu0 0.0
    %1723 = vmatpush2.msra.mxu0 0.0
    %1724 = vmatprep.subr.mxu0 0.0
    %1725 = vmatpush2.msra.mxu0 0.0
    %1726 = vmatprep.subr.mxu0 0.0
    %1727 = vmatpush2.msra.mxu0 0.0
    %1728 = vmatprep.subr.mxu0 0.0
    %1729 = vmatpush2.msra.mxu0 0.0
    %1730 = vmatprep.subr.mxu0 0.0
    %1731 = vmatpush2.msra.mxu0 0.0
    %1732 = vmatprep.subr.mxu0 0.0
    %1733 = vmatpush2.msra.mxu0 0.0
    %1734 = vmatprep.subr.mxu0 0.0
    %1735 = vmatpush2.msra.mxu0 0.0
    %1736 = vmatprep.subr.mxu0 0.0
    %1737 = vmatpush2.msra.mxu0 0.0
    %1738 = vmatprep.subr.mxu0 0.0
    %1739 = vmatpush2.msra.mxu0 0.0
    %1740 = vmatprep.subr.mxu0 0.0
    %1741 = vmatpush2.msra.mxu0 0.0
    %1742 = vmatprep.subr.mxu0 0.0
    %1743 = vmatpush2.msra.mxu0 0.0
    %1744 = vmatprep.subr.mxu0 0.0
    %1745 = vmatpush2.msra.mxu0 0.0
    %1746 = vmatprep.mubr.f32.mxu0 0.0
    %1747 = vmatmul.mubr.f32.gmra.mxu0 %v1460
    %v1748 = vpop.f32.mrf.mxu0
    %v1749 = vadd.f32 %v1664, %v1748
    %v1750 = vpop.f32.mrf.mxu0
    %1751 = vmatprep.mubr.f32.mxu0 0.0
    %1752 = vmatmul.mubr.f32.gmra.mxu0 %v1465
    %v1753 = vpop.f32.mrf.mxu0
    %v1754 = vadd.f32 %v1669, %v1753
    %v1755 = vpop.f32.mrf.mxu0
    %1756 = vmatprep.mubr.f32.mxu0 0.0
    %1757 = vmatmul.mubr.f32.gmra.mxu0 %v1470
    %v1758 = vpop.f32.mrf.mxu0
    %v1759 = vadd.f32 %v1674, %v1758
    %v1760 = vpop.f32.mrf.mxu0
    %1761 = vmatprep.mubr.f32.mxu0 0.0
    %1762 = vmatmul.mubr.f32.gmra.mxu0 %v1475
    %v1763 = vpop.f32.mrf.mxu0
    %v1764 = vadd.f32 %v1679, %v1763
    %v1765 = vpop.f32.mrf.mxu0
    %1766 = vdwg.mxu0
    %s1767 = scalar_lea.vmem [#allocation4], 8
    %v1768 = vld [vmem:[%s1767] sm:$0x1]
    %v1770 = vlaneseq
    %v1771 = vshrl.u32 %v1770, 7
    %v1772 = vsub.s32 0, %v1771
    %v1773 = vrot.slane %v1768, %v1772
    %v1775 = vadd.f32 %v1749, %v1773
    %v1776 = vadd.f32 %v1754, %v1773
    %v1777 = vadd.f32 %v1759, %v1773
    %v1778 = vadd.f32 %v1764, %v1773
    %v1779 = vmax.f32 %v1775, 0.0
    %v1780 = vmax.f32 %v1776, 0.0
    %v1781 = vmax.f32 %v1777, 0.0
    %v1782 = vmax.f32 %v1778, 0.0
    %s1783 = scalar_lea.vmem [#allocation2], 1280
    %v1784 = vld [vmem:[%s1783] sm:$0xff]
    %v1785 = vld [vmem:[%s1783 + $0x8] sm:$0xff]
    %v1786 = vld [vmem:[%s1783 + $0x10] sm:$0xff]
    %v1787 = vld [vmem:[%s1783 + $0x18] sm:$0xff]
    %v1788 = vld [vmem:[%s1783 + $0x20] sm:$0xff]
    %v1789 = vld [vmem:[%s1783 + $0x28] sm:$0xff]
    %v1790 = vld [vmem:[%s1783 + $0x30] sm:$0xff]
    %v1791 = vld [vmem:[%s1783 + $0x38] sm:$0xff]
    %v1792 = vld [vmem:[%s1783 + $0x40] sm:$0xff]
    %v1793 = vld [vmem:[%s1783 + $0x48] sm:$0xff]
    %v1794 = vld [vmem:[%s1783 + $0x50] sm:$0xff]
    %v1795 = vld [vmem:[%s1783 + $0x58] sm:$0xff]
    %v1796 = vld [vmem:[%s1783 + $0x60] sm:$0xff]
    %v1797 = vld [vmem:[%s1783 + $0x68] sm:$0xff]
    %v1798 = vld [vmem:[%s1783 + $0x70] sm:$0xff]
    %v1799 = vld [vmem:[%s1783 + $0x78] sm:$0xff]
    %s1800 = scalar_lea.vmem [#allocation4], 9
    %v1801 = vld [vmem:[%s1800] sm:$0x1]
    %v1803 = vlaneseq
    %v1804 = vshrl.u32 %v1803, 7
    %v1805 = vsub.s32 0, %v1804
    %v1806 = vrot.slane %v1801, %v1805
    %1808 = vmatprep.subr.mxu0 0.0
    %1809 = vmatpush1.msra.mxu0 %v1799
    %1810 = vmatprep.subr.mxu0 0.0
    %1811 = vmatpush1.msra.mxu0 %v1798
    %1812 = vmatprep.subr.mxu0 0.0
    %1813 = vmatpush1.msra.mxu0 %v1797
    %1814 = vmatprep.subr.mxu0 0.0
    %1815 = vmatpush1.msra.mxu0 %v1796
    %1816 = vmatprep.subr.mxu0 0.0
    %1817 = vmatpush1.msra.mxu0 %v1795
    %1818 = vmatprep.subr.mxu0 0.0
    %1819 = vmatpush1.msra.mxu0 %v1794
    %1820 = vmatprep.subr.mxu0 0.0
    %1821 = vmatpush1.msra.mxu0 %v1793
    %1822 = vmatprep.subr.mxu0 0.0
    %1823 = vmatpush1.msra.mxu0 %v1792
    %1824 = vmatprep.subr.mxu0 0.0
    %1825 = vmatpush1.msra.mxu0 %v1791
    %1826 = vmatprep.subr.mxu0 0.0
    %1827 = vmatpush1.msra.mxu0 %v1790
    %1828 = vmatprep.subr.mxu0 0.0
    %1829 = vmatpush1.msra.mxu0 %v1789
    %1830 = vmatprep.subr.mxu0 0.0
    %1831 = vmatpush1.msra.mxu0 %v1788
    %1832 = vmatprep.subr.mxu0 0.0
    %1833 = vmatpush1.msra.mxu0 %v1787
    %1834 = vmatprep.subr.mxu0 0.0
    %1835 = vmatpush1.msra.mxu0 %v1786
    %1836 = vmatprep.subr.mxu0 0.0
    %1837 = vmatpush1.msra.mxu0 %v1785
    %1838 = vmatprep.subr.mxu0 0.0
    %1839 = vmatpush1.msra.mxu0 %v1784
    %1840 = vmatprep.subr.mxu0 0.0
    %1841 = vmatpush2.msra.mxu0 0.0
    %1842 = vmatprep.subr.mxu0 0.0
    %1843 = vmatpush2.msra.mxu0 0.0
    %1844 = vmatprep.subr.mxu0 0.0
    %1845 = vmatpush2.msra.mxu0 0.0
    %1846 = vmatprep.subr.mxu0 0.0
    %1847 = vmatpush2.msra.mxu0 0.0
    %1848 = vmatprep.subr.mxu0 0.0
    %1849 = vmatpush2.msra.mxu0 0.0
    %1850 = vmatprep.subr.mxu0 0.0
    %1851 = vmatpush2.msra.mxu0 0.0
    %1852 = vmatprep.subr.mxu0 0.0
    %1853 = vmatpush2.msra.mxu0 0.0
    %1854 = vmatprep.subr.mxu0 0.0
    %1855 = vmatpush2.msra.mxu0 0.0
    %1856 = vmatprep.subr.mxu0 0.0
    %1857 = vmatpush2.msra.mxu0 0.0
    %1858 = vmatprep.subr.mxu0 0.0
    %1859 = vmatpush2.msra.mxu0 0.0
    %1860 = vmatprep.subr.mxu0 0.0
    %1861 = vmatpush2.msra.mxu0 0.0
    %1862 = vmatprep.subr.mxu0 0.0
    %1863 = vmatpush2.msra.mxu0 0.0
    %1864 = vmatprep.subr.mxu0 0.0
    %1865 = vmatpush2.msra.mxu0 0.0
    %1866 = vmatprep.subr.mxu0 0.0
    %1867 = vmatpush2.msra.mxu0 0.0
    %1868 = vmatprep.subr.mxu0 0.0
    %1869 = vmatpush2.msra.mxu0 0.0
    %1870 = vmatprep.subr.mxu0 0.0
    %1871 = vmatpush2.msra.mxu0 0.0
    %1872 = vmatprep.mubr.f32.mxu0 0.0
    %1873 = vmatmul.mubr.f32.gmra.mxu0 %v1779
    %v1874 = vpop.f32.mrf.mxu0
    %v1875 = vadd.f32 %v1806, %v1874
    %v1876 = vpop.f32.mrf.mxu0
    %1877 = vmatprep.mubr.f32.mxu0 0.0
    %1878 = vmatmul.mubr.f32.gmra.mxu0 %v1780
    %v1879 = vpop.f32.mrf.mxu0
    %v1880 = vadd.f32 %v1806, %v1879
    %v1881 = vpop.f32.mrf.mxu0
    %1882 = vmatprep.mubr.f32.mxu0 0.0
    %1883 = vmatmul.mubr.f32.gmra.mxu0 %v1781
    %v1884 = vpop.f32.mrf.mxu0
    %v1885 = vadd.f32 %v1806, %v1884
    %v1886 = vpop.f32.mrf.mxu0
    %1887 = vmatprep.mubr.f32.mxu0 0.0
    %1888 = vmatmul.mubr.f32.gmra.mxu0 %v1782
    %v1889 = vpop.f32.mrf.mxu0
    %v1890 = vadd.f32 %v1806, %v1889
    %v1891 = vpop.f32.mrf.mxu0
    %1892 = vdwg.mxu0
    %1893 = vmatprep.subr.mxu0 0.0
    %1894 = vmatpush1.msra.mxu0 0.0
    %1895 = vmatprep.subr.mxu0 0.0
    %1896 = vmatpush1.msra.mxu0 0.0
    %1897 = vmatprep.subr.mxu0 0.0
    %1898 = vmatpush1.msra.mxu0 0.0
    %1899 = vmatprep.subr.mxu0 0.0
    %1900 = vmatpush1.msra.mxu0 0.0
    %1901 = vmatprep.subr.mxu0 0.0
    %1902 = vmatpush1.msra.mxu0 0.0
    %1903 = vmatprep.subr.mxu0 0.0
    %1904 = vmatpush1.msra.mxu0 0.0
    %1905 = vmatprep.subr.mxu0 0.0
    %1906 = vmatpush1.msra.mxu0 0.0
    %1907 = vmatprep.subr.mxu0 0.0
    %1908 = vmatpush1.msra.mxu0 0.0
    %1909 = vmatprep.subr.mxu0 0.0
    %1910 = vmatpush1.msra.mxu0 0.0
    %1911 = vmatprep.subr.mxu0 0.0
    %1912 = vmatpush1.msra.mxu0 0.0
    %1913 = vmatprep.subr.mxu0 0.0
    %1914 = vmatpush1.msra.mxu0 0.0
    %1915 = vmatprep.subr.mxu0 0.0
    %1916 = vmatpush1.msra.mxu0 0.0
    %1917 = vmatprep.subr.mxu0 0.0
    %1918 = vmatpush1.msra.mxu0 %v1890
    %1919 = vmatprep.subr.mxu0 0.0
    %1920 = vmatpush1.msra.mxu0 %v1885
    %1921 = vmatprep.subr.mxu0 0.0
    %1922 = vmatpush1.msra.mxu0 %v1880
    %1923 = vmatprep.subr.mxu0 0.0
    %1924 = vmatpush1.msra.mxu0 %v1875
    %1925 = vmatprep.subr.mxu0 0.0
    %1926 = vmatpush2.msra.mxu0 0.0
    %1927 = vmatprep.subr.mxu0 0.0
    %1928 = vmatpush2.msra.mxu0 0.0
    %1929 = vmatprep.subr.mxu0 0.0
    %1930 = vmatpush2.msra.mxu0 0.0
    %1931 = vmatprep.subr.mxu0 0.0
    %1932 = vmatpush2.msra.mxu0 0.0
    %1933 = vmatprep.subr.mxu0 0.0
    %1934 = vmatpush2.msra.mxu0 0.0
    %1935 = vmatprep.subr.mxu0 0.0
    %1936 = vmatpush2.msra.mxu0 0.0
    %1937 = vmatprep.subr.mxu0 0.0
    %1938 = vmatpush2.msra.mxu0 0.0
    %1939 = vmatprep.subr.mxu0 0.0
    %1940 = vmatpush2.msra.mxu0 0.0
    %1941 = vmatprep.subr.mxu0 0.0
    %1942 = vmatpush2.msra.mxu0 0.0
    %1943 = vmatprep.subr.mxu0 0.0
    %1944 = vmatpush2.msra.mxu0 0.0
    %1945 = vmatprep.subr.mxu0 0.0
    %1946 = vmatpush2.msra.mxu0 0.0
    %1947 = vmatprep.subr.mxu0 0.0
    %1948 = vmatpush2.msra.mxu0 0.0
    %1949 = vmatprep.subr.mxu0 0.0
    %1950 = vmatpush2.msra.mxu0 0.0
    %1951 = vmatprep.subr.mxu0 0.0
    %1952 = vmatpush2.msra.mxu0 0.0
    %1953 = vmatprep.subr.mxu0 0.0
    %1954 = vmatpush2.msra.mxu0 0.0
    %1955 = vmatprep.subr.mxu0 0.0
    %1956 = vmatpush2.msra.mxu0 0.0
    %1957 = vmatprep.mubr.f32.mxu0 0.0
    %1958 = vmatmul.mubr.f32.gmra.mxu0 %v1018
    %v1959 = vpop.f32.mrf.mxu0
    %v1960 = vadd.f32 0.0, %v1959
    %v1961 = vpop.f32.mrf.mxu0
    %1962 = vmatprep.mubr.f32.mxu0 0.0
    %1963 = vmatmul.mubr.f32.gmra.mxu0 %v1018
    %v1964 = vpop.f32.mrf.mxu0
    %v1965 = vadd.f32 0.0, %v1964
    %v1966 = vpop.f32.mrf.mxu0
    %1967 = vdwg.mxu0
    %s1968 = scalar_lea.vmem [#allocation2], 1408
    %v1969 = vld [vmem:[%s1968] sm:$0xff]
    %v1970 = vld [vmem:[%s1968 + $0x8] sm:$0xff]
    %v1971 = vld [vmem:[%s1968 + $0x10] sm:$0xff]
    %v1972 = vld [vmem:[%s1968 + $0x18] sm:$0xff]
    %v1973 = vld [vmem:[%s1968 + $0x20] sm:$0xff]
    %v1974 = vld [vmem:[%s1968 + $0x28] sm:$0xff]
    %v1975 = vld [vmem:[%s1968 + $0x30] sm:$0xff]
    %v1976 = vld [vmem:[%s1968 + $0x38] sm:$0xff]
    %v1977 = vld [vmem:[%s1968 + $0x40] sm:$0xff]
    %v1978 = vld [vmem:[%s1968 + $0x48] sm:$0xff]
    %v1979 = vld [vmem:[%s1968 + $0x50] sm:$0xff]
    %v1980 = vld [vmem:[%s1968 + $0x58] sm:$0xff]
    %v1981 = vld [vmem:[%s1968 + $0x60] sm:$0xff]
    %v1982 = vld [vmem:[%s1968 + $0x68] sm:$0xff]
    %v1983 = vld [vmem:[%s1968 + $0x70] sm:$0xff]
    %v1984 = vld [vmem:[%s1968 + $0x78] sm:$0xff]
    %s1985 = scalar_lea.vmem [#allocation2], 1536
    %v1986 = vld [vmem:[%s1985] sm:$0xff]
    %v1987 = vld [vmem:[%s1985 + $0x8] sm:$0xff]
    %v1988 = vld [vmem:[%s1985 + $0x10] sm:$0xff]
    %v1989 = vld [vmem:[%s1985 + $0x18] sm:$0xff]
    %v1990 = vld [vmem:[%s1985 + $0x20] sm:$0xff]
    %v1991 = vld [vmem:[%s1985 + $0x28] sm:$0xff]
    %v1992 = vld [vmem:[%s1985 + $0x30] sm:$0xff]
    %v1993 = vld [vmem:[%s1985 + $0x38] sm:$0xff]
    %v1994 = vld [vmem:[%s1985 + $0x40] sm:$0xff]
    %v1995 = vld [vmem:[%s1985 + $0x48] sm:$0xff]
    %v1996 = vld [vmem:[%s1985 + $0x50] sm:$0xff]
    %v1997 = vld [vmem:[%s1985 + $0x58] sm:$0xff]
    %v1998 = vld [vmem:[%s1985 + $0x60] sm:$0xff]
    %v1999 = vld [vmem:[%s1985 + $0x68] sm:$0xff]
    %v2000 = vld [vmem:[%s1985 + $0x70] sm:$0xff]
    %v2001 = vld [vmem:[%s1985 + $0x78] sm:$0xff]
    %2002 = vmatprep.subr.mxu0 0.0
    %2003 = vmatpush1.msra.mxu0 %v2001
    %2004 = vmatprep.subr.mxu0 0.0
    %2005 = vmatpush1.msra.mxu0 %v2000
    %2006 = vmatprep.subr.mxu0 0.0
    %2007 = vmatpush1.msra.mxu0 %v1999
    %2008 = vmatprep.subr.mxu0 0.0
    %2009 = vmatpush1.msra.mxu0 %v1998
    %2010 = vmatprep.subr.mxu0 0.0
    %2011 = vmatpush1.msra.mxu0 %v1997
    %2012 = vmatprep.subr.mxu0 0.0
    %2013 = vmatpush1.msra.mxu0 %v1996
    %2014 = vmatprep.subr.mxu0 0.0
    %2015 = vmatpush1.msra.mxu0 %v1995
    %2016 = vmatprep.subr.mxu0 0.0
    %2017 = vmatpush1.msra.mxu0 %v1994
    %2018 = vmatprep.subr.mxu0 0.0
    %2019 = vmatpush1.msra.mxu0 %v1993
    %2020 = vmatprep.subr.mxu0 0.0
    %2021 = vmatpush1.msra.mxu0 %v1992
    %2022 = vmatprep.subr.mxu0 0.0
    %2023 = vmatpush1.msra.mxu0 %v1991
    %2024 = vmatprep.subr.mxu0 0.0
    %2025 = vmatpush1.msra.mxu0 %v1990
    %2026 = vmatprep.subr.mxu0 0.0
    %2027 = vmatpush1.msra.mxu0 %v1989
    %2028 = vmatprep.subr.mxu0 0.0
    %2029 = vmatpush1.msra.mxu0 %v1988
    %2030 = vmatprep.subr.mxu0 0.0
    %2031 = vmatpush1.msra.mxu0 %v1987
    %2032 = vmatprep.subr.mxu0 0.0
    %2033 = vmatpush1.msra.mxu0 %v1986
    %2034 = vmatprep.subr.mxu0 0.0
    %2035 = vmatpush2.msra.mxu0 0.0
    %2036 = vmatprep.subr.mxu0 0.0
    %2037 = vmatpush2.msra.mxu0 0.0
    %2038 = vmatprep.subr.mxu0 0.0
    %2039 = vmatpush2.msra.mxu0 0.0
    %2040 = vmatprep.subr.mxu0 0.0
    %2041 = vmatpush2.msra.mxu0 0.0
    %2042 = vmatprep.subr.mxu0 0.0
    %2043 = vmatpush2.msra.mxu0 0.0
    %2044 = vmatprep.subr.mxu0 0.0
    %2045 = vmatpush2.msra.mxu0 0.0
    %2046 = vmatprep.subr.mxu0 0.0
    %2047 = vmatpush2.msra.mxu0 0.0
    %2048 = vmatprep.subr.mxu0 0.0
    %2049 = vmatpush2.msra.mxu0 0.0
    %2050 = vmatprep.subr.mxu0 0.0
    %2051 = vmatpush2.msra.mxu0 0.0
    %2052 = vmatprep.subr.mxu0 0.0
    %2053 = vmatpush2.msra.mxu0 0.0
    %2054 = vmatprep.subr.mxu0 0.0
    %2055 = vmatpush2.msra.mxu0 0.0
    %2056 = vmatprep.subr.mxu0 0.0
    %2057 = vmatpush2.msra.mxu0 0.0
    %2058 = vmatprep.subr.mxu0 0.0
    %2059 = vmatpush2.msra.mxu0 0.0
    %2060 = vmatprep.subr.mxu0 0.0
    %2061 = vmatpush2.msra.mxu0 0.0
    %2062 = vmatprep.subr.mxu0 0.0
    %2063 = vmatpush2.msra.mxu0 0.0
    %2064 = vmatprep.subr.mxu0 0.0
    %2065 = vmatpush2.msra.mxu0 0.0
    %2066 = vmatprep.mubr.f32.mxu0 0.0
    %2067 = vmatmul.mubr.f32.gmra.mxu0 %v1960
    %v2068 = vpop.f32.mrf.mxu0
    %v2069 = vadd.f32 0.0, %v2068
    %v2070 = vpop.f32.mrf.mxu0
    %2071 = vmatprep.mubr.f32.mxu0 0.0
    %2072 = vmatmul.mubr.f32.gmra.mxu0 %v1965
    %v2073 = vpop.f32.mrf.mxu0
    %v2074 = vadd.f32 0.0, %v2073
    %v2075 = vpop.f32.mrf.mxu0
    %2076 = vdwg.mxu0
    %2077 = vmatprep.subr.mxu0 0.0
    %2078 = vmatpush1.msra.mxu0 %v1984
    %2079 = vmatprep.subr.mxu0 0.0
    %2080 = vmatpush1.msra.mxu0 %v1983
    %2081 = vmatprep.subr.mxu0 0.0
    %2082 = vmatpush1.msra.mxu0 %v1982
    %2083 = vmatprep.subr.mxu0 0.0
    %2084 = vmatpush1.msra.mxu0 %v1981
    %2085 = vmatprep.subr.mxu0 0.0
    %2086 = vmatpush1.msra.mxu0 %v1980
    %2087 = vmatprep.subr.mxu0 0.0
    %2088 = vmatpush1.msra.mxu0 %v1979
    %2089 = vmatprep.subr.mxu0 0.0
    %2090 = vmatpush1.msra.mxu0 %v1978
    %2091 = vmatprep.subr.mxu0 0.0
    %2092 = vmatpush1.msra.mxu0 %v1977
    %2093 = vmatprep.subr.mxu0 0.0
    %2094 = vmatpush1.msra.mxu0 %v1976
    %2095 = vmatprep.subr.mxu0 0.0
    %2096 = vmatpush1.msra.mxu0 %v1975
    %2097 = vmatprep.subr.mxu0 0.0
    %2098 = vmatpush1.msra.mxu0 %v1974
    %2099 = vmatprep.subr.mxu0 0.0
    %2100 = vmatpush1.msra.mxu0 %v1973
    %2101 = vmatprep.subr.mxu0 0.0
    %2102 = vmatpush1.msra.mxu0 %v1972
    %2103 = vmatprep.subr.mxu0 0.0
    %2104 = vmatpush1.msra.mxu0 %v1971
    %2105 = vmatprep.subr.mxu0 0.0
    %2106 = vmatpush1.msra.mxu0 %v1970
    %2107 = vmatprep.subr.mxu0 0.0
    %2108 = vmatpush1.msra.mxu0 %v1969
    %2109 = vmatprep.subr.mxu0 0.0
    %2110 = vmatpush2.msra.mxu0 0.0
    %2111 = vmatprep.subr.mxu0 0.0
    %2112 = vmatpush2.msra.mxu0 0.0
    %2113 = vmatprep.subr.mxu0 0.0
    %2114 = vmatpush2.msra.mxu0 0.0
    %2115 = vmatprep.subr.mxu0 0.0
    %2116 = vmatpush2.msra.mxu0 0.0
    %2117 = vmatprep.subr.mxu0 0.0
    %2118 = vmatpush2.msra.mxu0 0.0
    %2119 = vmatprep.subr.mxu0 0.0
    %2120 = vmatpush2.msra.mxu0 0.0
    %2121 = vmatprep.subr.mxu0 0.0
    %2122 = vmatpush2.msra.mxu0 0.0
    %2123 = vmatprep.subr.mxu0 0.0
    %2124 = vmatpush2.msra.mxu0 0.0
    %2125 = vmatprep.subr.mxu0 0.0
    %2126 = vmatpush2.msra.mxu0 0.0
    %2127 = vmatprep.subr.mxu0 0.0
    %2128 = vmatpush2.msra.mxu0 0.0
    %2129 = vmatprep.subr.mxu0 0.0
    %2130 = vmatpush2.msra.mxu0 0.0
    %2131 = vmatprep.subr.mxu0 0.0
    %2132 = vmatpush2.msra.mxu0 0.0
    %2133 = vmatprep.subr.mxu0 0.0
    %2134 = vmatpush2.msra.mxu0 0.0
    %2135 = vmatprep.subr.mxu0 0.0
    %2136 = vmatpush2.msra.mxu0 0.0
    %2137 = vmatprep.subr.mxu0 0.0
    %2138 = vmatpush2.msra.mxu0 0.0
    %2139 = vmatprep.subr.mxu0 0.0
    %2140 = vmatpush2.msra.mxu0 0.0
    %2141 = vmatprep.mubr.f32.mxu0 0.0
    %2142 = vmatmul.mubr.f32.gmra.mxu0 %v1391
    %v2143 = vpop.f32.mrf.mxu0
    %v2144 = vadd.f32 %v2069, %v2143
    %v2145 = vpop.f32.mrf.mxu0
    %2146 = vmatprep.mubr.f32.mxu0 0.0
    %2147 = vmatmul.mubr.f32.gmra.mxu0 %v1392
    %v2148 = vpop.f32.mrf.mxu0
    %v2149 = vadd.f32 %v2074, %v2148
    %v2150 = vpop.f32.mrf.mxu0
    %2151 = vdwg.mxu0
    %s2152 = scalar_lea.vmem [#allocation4], 10
    %v2153 = vld [vmem:[%s2152] sm:$0x1]
    %v2155 = vlaneseq
    %v2156 = vshrl.u32 %v2155, 7
    %v2157 = vsub.s32 0, %v2156
    %v2158 = vrot.slane %v2153, %v2157
    %v2160 = vadd.f32 %v2144, %v2158
    %v2161 = vadd.f32 %v2149, %v2158
    %v2162 = vmax.f32 %v2160, 0.0
    %v2163 = vmax.f32 %v2161, 0.0
    %s2164 = scalar_lea.vmem [#allocation2], 1664
    %v2165 = vld [vmem:[%s2164] sm:$0xff]
    %v2166 = vld [vmem:[%s2164 + $0x8] sm:$0xff]
    %v2167 = vld [vmem:[%s2164 + $0x10] sm:$0xff]
    %v2168 = vld [vmem:[%s2164 + $0x18] sm:$0xff]
    %v2169 = vld [vmem:[%s2164 + $0x20] sm:$0xff]
    %v2170 = vld [vmem:[%s2164 + $0x28] sm:$0xff]
    %v2171 = vld [vmem:[%s2164 + $0x30] sm:$0xff]
    %v2172 = vld [vmem:[%s2164 + $0x38] sm:$0xff]
    %v2173 = vld [vmem:[%s2164 + $0x40] sm:$0xff]
    %v2174 = vld [vmem:[%s2164 + $0x48] sm:$0xff]
    %v2175 = vld [vmem:[%s2164 + $0x50] sm:$0xff]
    %v2176 = vld [vmem:[%s2164 + $0x58] sm:$0xff]
    %v2177 = vld [vmem:[%s2164 + $0x60] sm:$0xff]
    %v2178 = vld [vmem:[%s2164 + $0x68] sm:$0xff]
    %v2179 = vld [vmem:[%s2164 + $0x70] sm:$0xff]
    %v2180 = vld [vmem:[%s2164 + $0x78] sm:$0xff]
    %s2181 = scalar_lea.vmem [#allocation4], 11
    %v2182 = vld [vmem:[%s2181] sm:$0x1]
    %v2184 = vlaneseq
    %v2185 = vshrl.u32 %v2184, 7
    %v2186 = vsub.s32 0, %v2185
    %v2187 = vrot.slane %v2182, %v2186
    %2189 = vmatprep.subr.mxu0 0.0
    %2190 = vmatpush1.msra.mxu0 %v2180
    %2191 = vmatprep.subr.mxu0 0.0
    %2192 = vmatpush1.msra.mxu0 %v2179
    %2193 = vmatprep.subr.mxu0 0.0
    %2194 = vmatpush1.msra.mxu0 %v2178
    %2195 = vmatprep.subr.mxu0 0.0
    %2196 = vmatpush1.msra.mxu0 %v2177
    %2197 = vmatprep.subr.mxu0 0.0
    %2198 = vmatpush1.msra.mxu0 %v2176
    %2199 = vmatprep.subr.mxu0 0.0
    %2200 = vmatpush1.msra.mxu0 %v2175
    %2201 = vmatprep.subr.mxu0 0.0
    %2202 = vmatpush1.msra.mxu0 %v2174
    %2203 = vmatprep.subr.mxu0 0.0
    %2204 = vmatpush1.msra.mxu0 %v2173
    %2205 = vmatprep.subr.mxu0 0.0
    %2206 = vmatpush1.msra.mxu0 %v2172
    %2207 = vmatprep.subr.mxu0 0.0
    %2208 = vmatpush1.msra.mxu0 %v2171
    %2209 = vmatprep.subr.mxu0 0.0
    %2210 = vmatpush1.msra.mxu0 %v2170
    %2211 = vmatprep.subr.mxu0 0.0
    %2212 = vmatpush1.msra.mxu0 %v2169
    %2213 = vmatprep.subr.mxu0 0.0
    %2214 = vmatpush1.msra.mxu0 %v2168
    %2215 = vmatprep.subr.mxu0 0.0
    %2216 = vmatpush1.msra.mxu0 %v2167
    %2217 = vmatprep.subr.mxu0 0.0
    %2218 = vmatpush1.msra.mxu0 %v2166
    %2219 = vmatprep.subr.mxu0 0.0
    %2220 = vmatpush1.msra.mxu0 %v2165
    %2221 = vmatprep.subr.mxu0 0.0
    %2222 = vmatpush2.msra.mxu0 0.0
    %2223 = vmatprep.subr.mxu0 0.0
    %2224 = vmatpush2.msra.mxu0 0.0
    %2225 = vmatprep.subr.mxu0 0.0
    %2226 = vmatpush2.msra.mxu0 0.0
    %2227 = vmatprep.subr.mxu0 0.0
    %2228 = vmatpush2.msra.mxu0 0.0
    %2229 = vmatprep.subr.mxu0 0.0
    %2230 = vmatpush2.msra.mxu0 0.0
    %2231 = vmatprep.subr.mxu0 0.0
    %2232 = vmatpush2.msra.mxu0 0.0
    %2233 = vmatprep.subr.mxu0 0.0
    %2234 = vmatpush2.msra.mxu0 0.0
    %2235 = vmatprep.subr.mxu0 0.0
    %2236 = vmatpush2.msra.mxu0 0.0
    %2237 = vmatprep.subr.mxu0 0.0
    %2238 = vmatpush2.msra.mxu0 0.0
    %2239 = vmatprep.subr.mxu0 0.0
    %2240 = vmatpush2.msra.mxu0 0.0
    %2241 = vmatprep.subr.mxu0 0.0
    %2242 = vmatpush2.msra.mxu0 0.0
    %2243 = vmatprep.subr.mxu0 0.0
    %2244 = vmatpush2.msra.mxu0 0.0
    %2245 = vmatprep.subr.mxu0 0.0
    %2246 = vmatpush2.msra.mxu0 0.0
    %2247 = vmatprep.subr.mxu0 0.0
    %2248 = vmatpush2.msra.mxu0 0.0
    %2249 = vmatprep.subr.mxu0 0.0
    %2250 = vmatpush2.msra.mxu0 0.0
    %2251 = vmatprep.subr.mxu0 0.0
    %2252 = vmatpush2.msra.mxu0 0.0
    %2253 = vmatprep.mubr.f32.mxu0 0.0
    %2254 = vmatmul.mubr.f32.gmra.mxu0 %v2162
    %v2255 = vpop.f32.mrf.mxu0
    %v2256 = vadd.f32 %v2187, %v2255
    %v2257 = vpop.f32.mrf.mxu0
    %2258 = vmatprep.mubr.f32.mxu0 0.0
    %2259 = vmatmul.mubr.f32.gmra.mxu0 %v2163
    %v2260 = vpop.f32.mrf.mxu0
    %v2261 = vadd.f32 %v2187, %v2260
    %v2262 = vpop.f32.mrf.mxu0
    %2263 = vdwg.mxu0
    %v2264 = vmax.f32 %v2256, 0.0
    %v2265 = vmax.f32 %v2261, 0.0
    %2266 = vmatprep.subr.mxu0 0.0
    %2267 = vmatpush1.msra.mxu0 0.0
    %2268 = vmatprep.subr.mxu0 0.0
    %2269 = vmatpush1.msra.mxu0 0.0
    %2270 = vmatprep.subr.mxu0 0.0
    %2271 = vmatpush1.msra.mxu0 0.0
    %2272 = vmatprep.subr.mxu0 0.0
    %2273 = vmatpush1.msra.mxu0 0.0
    %2274 = vmatprep.subr.mxu0 0.0
    %2275 = vmatpush1.msra.mxu0 0.0
    %2276 = vmatprep.subr.mxu0 0.0
    %2277 = vmatpush1.msra.mxu0 0.0
    %2278 = vmatprep.subr.mxu0 0.0
    %2279 = vmatpush1.msra.mxu0 0.0
    %2280 = vmatprep.subr.mxu0 0.0
    %2281 = vmatpush1.msra.mxu0 0.0
    %2282 = vmatprep.subr.mxu0 0.0
    %2283 = vmatpush1.msra.mxu0 0.0
    %2284 = vmatprep.subr.mxu0 0.0
    %2285 = vmatpush1.msra.mxu0 0.0
    %2286 = vmatprep.subr.mxu0 0.0
    %2287 = vmatpush1.msra.mxu0 0.0
    %2288 = vmatprep.subr.mxu0 0.0
    %2289 = vmatpush1.msra.mxu0 0.0
    %2290 = vmatprep.subr.mxu0 0.0
    %2291 = vmatpush1.msra.mxu0 0.0
    %2292 = vmatprep.subr.mxu0 0.0
    %2293 = vmatpush1.msra.mxu0 0.0
    %2294 = vmatprep.subr.mxu0 0.0
    %2295 = vmatpush1.msra.mxu0 %v2265
    %2296 = vmatprep.subr.mxu0 0.0
    %2297 = vmatpush1.msra.mxu0 %v2264
    %2298 = vmatprep.subr.mxu0 0.0
    %2299 = vmatpush2.msra.mxu0 0.0
    %2300 = vmatprep.subr.mxu0 0.0
    %2301 = vmatpush2.msra.mxu0 0.0
    %2302 = vmatprep.subr.mxu0 0.0
    %2303 = vmatpush2.msra.mxu0 0.0
    %2304 = vmatprep.subr.mxu0 0.0
    %2305 = vmatpush2.msra.mxu0 0.0
    %2306 = vmatprep.subr.mxu0 0.0
    %2307 = vmatpush2.msra.mxu0 0.0
    %2308 = vmatprep.subr.mxu0 0.0
    %2309 = vmatpush2.msra.mxu0 0.0
    %2310 = vmatprep.subr.mxu0 0.0
    %2311 = vmatpush2.msra.mxu0 0.0
    %2312 = vmatprep.subr.mxu0 0.0
    %2313 = vmatpush2.msra.mxu0 0.0
    %2314 = vmatprep.subr.mxu0 0.0
    %2315 = vmatpush2.msra.mxu0 0.0
    %2316 = vmatprep.subr.mxu0 0.0
    %2317 = vmatpush2.msra.mxu0 0.0
    %2318 = vmatprep.subr.mxu0 0.0
    %2319 = vmatpush2.msra.mxu0 0.0
    %2320 = vmatprep.subr.mxu0 0.0
    %2321 = vmatpush2.msra.mxu0 0.0
    %2322 = vmatprep.subr.mxu0 0.0
    %2323 = vmatpush2.msra.mxu0 0.0
    %2324 = vmatprep.subr.mxu0 0.0
    %2325 = vmatpush2.msra.mxu0 0.0
    %2326 = vmatprep.subr.mxu0 0.0
    %2327 = vmatpush2.msra.mxu0 0.0
    %2328 = vmatprep.subr.mxu0 0.0
    %2329 = vmatpush2.msra.mxu0 0.0
    %2330 = vmatprep.mubr.f32.mxu0 0.0
    %2331 = vmatmul.mubr.f32.gmra.mxu0 %v493
    %v2332 = vpop.f32.mrf.mxu0
    %v2333 = vadd.f32 0.0, %v2332
    %v2334 = vpop.f32.mrf.mxu0
    %2335 = vmatprep.mubr.f32.mxu0 0.0
    %2336 = vmatmul.mubr.f32.gmra.mxu0 %v496
    %v2337 = vpop.f32.mrf.mxu0
    %v2338 = vadd.f32 0.0, %v2337
    %v2339 = vpop.f32.mrf.mxu0
    %2340 = vmatprep.mubr.f32.mxu0 0.0
    %2341 = vmatmul.mubr.f32.gmra.mxu0 %v499
    %v2342 = vpop.f32.mrf.mxu0
    %v2343 = vadd.f32 0.0, %v2342
    %v2344 = vpop.f32.mrf.mxu0
    %2345 = vmatprep.mubr.f32.mxu0 0.0
    %2346 = vmatmul.mubr.f32.gmra.mxu0 %v502
    %v2347 = vpop.f32.mrf.mxu0
    %v2348 = vadd.f32 0.0, %v2347
    %v2349 = vpop.f32.mrf.mxu0
    %2350 = vdwg.mxu0
    %2351 = vmatprep.subr.mxu0 0.0
    %2352 = vmatpush1.msra.mxu0 0.0
    %2353 = vmatprep.subr.mxu0 0.0
    %2354 = vmatpush1.msra.mxu0 0.0
    %2355 = vmatprep.subr.mxu0 0.0
    %2356 = vmatpush1.msra.mxu0 0.0
    %2357 = vmatprep.subr.mxu0 0.0
    %2358 = vmatpush1.msra.mxu0 0.0
    %2359 = vmatprep.subr.mxu0 0.0
    %2360 = vmatpush1.msra.mxu0 0.0
    %2361 = vmatprep.subr.mxu0 0.0
    %2362 = vmatpush1.msra.mxu0 0.0
    %2363 = vmatprep.subr.mxu0 0.0
    %2364 = vmatpush1.msra.mxu0 0.0
    %2365 = vmatprep.subr.mxu0 0.0
    %2366 = vmatpush1.msra.mxu0 0.0
    %2367 = vmatprep.subr.mxu0 0.0
    %2368 = vmatpush1.msra.mxu0 0.0
    %2369 = vmatprep.subr.mxu0 0.0
    %2370 = vmatpush1.msra.mxu0 0.0
    %2371 = vmatprep.subr.mxu0 0.0
    %2372 = vmatpush1.msra.mxu0 0.0
    %2373 = vmatprep.subr.mxu0 0.0
    %2374 = vmatpush1.msra.mxu0 0.0
    %2375 = vmatprep.subr.mxu0 0.0
    %2376 = vmatpush1.msra.mxu0 0.0
    %2377 = vmatprep.subr.mxu0 0.0
    %2378 = vmatpush1.msra.mxu0 0.0
    %2379 = vmatprep.subr.mxu0 0.0
    %2380 = vmatpush1.msra.mxu0 %v2265
    %2381 = vmatprep.subr.mxu0 0.0
    %2382 = vmatpush1.msra.mxu0 %v2264
    %2383 = vmatprep.subr.mxu0 0.0
    %2384 = vmatpush2.msra.mxu0 0.0
    %2385 = vmatprep.subr.mxu0 0.0
    %2386 = vmatpush2.msra.mxu0 0.0
    %2387 = vmatprep.subr.mxu0 0.0
    %2388 = vmatpush2.msra.mxu0 0.0
    %2389 = vmatprep.subr.mxu0 0.0
    %2390 = vmatpush2.msra.mxu0 0.0
    %2391 = vmatprep.subr.mxu0 0.0
    %2392 = vmatpush2.msra.mxu0 0.0
    %2393 = vmatprep.subr.mxu0 0.0
    %2394 = vmatpush2.msra.mxu0 0.0
    %2395 = vmatprep.subr.mxu0 0.0
    %2396 = vmatpush2.msra.mxu0 0.0
    %2397 = vmatprep.subr.mxu0 0.0
    %2398 = vmatpush2.msra.mxu0 0.0
    %2399 = vmatprep.subr.mxu0 0.0
    %2400 = vmatpush2.msra.mxu0 0.0
    %2401 = vmatprep.subr.mxu0 0.0
    %2402 = vmatpush2.msra.mxu0 0.0
    %2403 = vmatprep.subr.mxu0 0.0
    %2404 = vmatpush2.msra.mxu0 0.0
    %2405 = vmatprep.subr.mxu0 0.0
    %2406 = vmatpush2.msra.mxu0 0.0
    %2407 = vmatprep.subr.mxu0 0.0
    %2408 = vmatpush2.msra.mxu0 0.0
    %2409 = vmatprep.subr.mxu0 0.0
    %2410 = vmatpush2.msra.mxu0 0.0
    %2411 = vmatprep.subr.mxu0 0.0
    %2412 = vmatpush2.msra.mxu0 0.0
    %2413 = vmatprep.subr.mxu0 0.0
    %2414 = vmatpush2.msra.mxu0 0.0
    %2415 = vmatprep.mubr.f32.mxu0 0.0
    %2416 = vmatmul.mubr.f32.gmra.mxu0 %v590
    %v2417 = vpop.f32.mrf.mxu0
    %v2418 = vadd.f32 0.0, %v2417
    %v2419 = vpop.f32.mrf.mxu0
    %2420 = vmatprep.mubr.f32.mxu0 0.0
    %2421 = vmatmul.mubr.f32.gmra.mxu0 %v593
    %v2422 = vpop.f32.mrf.mxu0
    %v2423 = vadd.f32 0.0, %v2422
    %v2424 = vpop.f32.mrf.mxu0
    %2425 = vmatprep.mubr.f32.mxu0 0.0
    %2426 = vmatmul.mubr.f32.gmra.mxu0 %v596
    %v2427 = vpop.f32.mrf.mxu0
    %v2428 = vadd.f32 0.0, %v2427
    %v2429 = vpop.f32.mrf.mxu0
    %2430 = vmatprep.mubr.f32.mxu0 0.0
    %2431 = vmatmul.mubr.f32.gmra.mxu0 %v599
    %v2432 = vpop.f32.mrf.mxu0
    %v2433 = vadd.f32 0.0, %v2432
    %v2434 = vpop.f32.mrf.mxu0
    %2435 = vdwg.mxu0
    %s2436 = scalar_lea.vmem [#allocation2], 1792
    %v2437 = vld [vmem:[%s2436] sm:$0xff]
    %v2438 = vld [vmem:[%s2436 + $0x8] sm:$0xff]
    %v2439 = vld [vmem:[%s2436 + $0x10] sm:$0xff]
    %v2440 = vld [vmem:[%s2436 + $0x18] sm:$0xff]
    %v2441 = vld [vmem:[%s2436 + $0x20] sm:$0xff]
    %v2442 = vld [vmem:[%s2436 + $0x28] sm:$0xff]
    %v2443 = vld [vmem:[%s2436 + $0x30] sm:$0xff]
    %v2444 = vld [vmem:[%s2436 + $0x38] sm:$0xff]
    %v2445 = vld [vmem:[%s2436 + $0x40] sm:$0xff]
    %v2446 = vld [vmem:[%s2436 + $0x48] sm:$0xff]
    %v2447 = vld [vmem:[%s2436 + $0x50] sm:$0xff]
    %v2448 = vld [vmem:[%s2436 + $0x58] sm:$0xff]
    %v2449 = vld [vmem:[%s2436 + $0x60] sm:$0xff]
    %v2450 = vld [vmem:[%s2436 + $0x68] sm:$0xff]
    %v2451 = vld [vmem:[%s2436 + $0x70] sm:$0xff]
    %v2452 = vld [vmem:[%s2436 + $0x78] sm:$0xff]
    %s2453 = scalar_lea.vmem [#allocation2], 1920
    %v2454 = vld [vmem:[%s2453] sm:$0xff]
    %v2455 = vld [vmem:[%s2453 + $0x8] sm:$0xff]
    %v2456 = vld [vmem:[%s2453 + $0x10] sm:$0xff]
    %v2457 = vld [vmem:[%s2453 + $0x18] sm:$0xff]
    %v2458 = vld [vmem:[%s2453 + $0x20] sm:$0xff]
    %v2459 = vld [vmem:[%s2453 + $0x28] sm:$0xff]
    %v2460 = vld [vmem:[%s2453 + $0x30] sm:$0xff]
    %v2461 = vld [vmem:[%s2453 + $0x38] sm:$0xff]
    %v2462 = vld [vmem:[%s2453 + $0x40] sm:$0xff]
    %v2463 = vld [vmem:[%s2453 + $0x48] sm:$0xff]
    %v2464 = vld [vmem:[%s2453 + $0x50] sm:$0xff]
    %v2465 = vld [vmem:[%s2453 + $0x58] sm:$0xff]
    %v2466 = vld [vmem:[%s2453 + $0x60] sm:$0xff]
    %v2467 = vld [vmem:[%s2453 + $0x68] sm:$0xff]
    %v2468 = vld [vmem:[%s2453 + $0x70] sm:$0xff]
    %v2469 = vld [vmem:[%s2453 + $0x78] sm:$0xff]
    %2470 = vmatprep.subr.mxu0 0.0
    %2471 = vmatpush1.msra.mxu0 %v2469
    %2472 = vmatprep.subr.mxu0 0.0
    %2473 = vmatpush1.msra.mxu0 %v2468
    %2474 = vmatprep.subr.mxu0 0.0
    %2475 = vmatpush1.msra.mxu0 %v2467
    %2476 = vmatprep.subr.mxu0 0.0
    %2477 = vmatpush1.msra.mxu0 %v2466
    %2478 = vmatprep.subr.mxu0 0.0
    %2479 = vmatpush1.msra.mxu0 %v2465
    %2480 = vmatprep.subr.mxu0 0.0
    %2481 = vmatpush1.msra.mxu0 %v2464
    %2482 = vmatprep.subr.mxu0 0.0
    %2483 = vmatpush1.msra.mxu0 %v2463
    %2484 = vmatprep.subr.mxu0 0.0
    %2485 = vmatpush1.msra.mxu0 %v2462
    %2486 = vmatprep.subr.mxu0 0.0
    %2487 = vmatpush1.msra.mxu0 %v2461
    %2488 = vmatprep.subr.mxu0 0.0
    %2489 = vmatpush1.msra.mxu0 %v2460
    %2490 = vmatprep.subr.mxu0 0.0
    %2491 = vmatpush1.msra.mxu0 %v2459
    %2492 = vmatprep.subr.mxu0 0.0
    %2493 = vmatpush1.msra.mxu0 %v2458
    %2494 = vmatprep.subr.mxu0 0.0
    %2495 = vmatpush1.msra.mxu0 %v2457
    %2496 = vmatprep.subr.mxu0 0.0
    %2497 = vmatpush1.msra.mxu0 %v2456
    %2498 = vmatprep.subr.mxu0 0.0
    %2499 = vmatpush1.msra.mxu0 %v2455
    %2500 = vmatprep.subr.mxu0 0.0
    %2501 = vmatpush1.msra.mxu0 %v2454
    %2502 = vmatprep.subr.mxu0 0.0
    %2503 = vmatpush2.msra.mxu0 0.0
    %2504 = vmatprep.subr.mxu0 0.0
    %2505 = vmatpush2.msra.mxu0 0.0
    %2506 = vmatprep.subr.mxu0 0.0
    %2507 = vmatpush2.msra.mxu0 0.0
    %2508 = vmatprep.subr.mxu0 0.0
    %2509 = vmatpush2.msra.mxu0 0.0
    %2510 = vmatprep.subr.mxu0 0.0
    %2511 = vmatpush2.msra.mxu0 0.0
    %2512 = vmatprep.subr.mxu0 0.0
    %2513 = vmatpush2.msra.mxu0 0.0
    %2514 = vmatprep.subr.mxu0 0.0
    %2515 = vmatpush2.msra.mxu0 0.0
    %2516 = vmatprep.subr.mxu0 0.0
    %2517 = vmatpush2.msra.mxu0 0.0
    %2518 = vmatprep.subr.mxu0 0.0
    %2519 = vmatpush2.msra.mxu0 0.0
    %2520 = vmatprep.subr.mxu0 0.0
    %2521 = vmatpush2.msra.mxu0 0.0
    %2522 = vmatprep.subr.mxu0 0.0
    %2523 = vmatpush2.msra.mxu0 0.0
    %2524 = vmatprep.subr.mxu0 0.0
    %2525 = vmatpush2.msra.mxu0 0.0
    %2526 = vmatprep.subr.mxu0 0.0
    %2527 = vmatpush2.msra.mxu0 0.0
    %2528 = vmatprep.subr.mxu0 0.0
    %2529 = vmatpush2.msra.mxu0 0.0
    %2530 = vmatprep.subr.mxu0 0.0
    %2531 = vmatpush2.msra.mxu0 0.0
    %2532 = vmatprep.subr.mxu0 0.0
    %2533 = vmatpush2.msra.mxu0 0.0
    %2534 = vmatprep.mubr.f32.mxu0 0.0
    %2535 = vmatmul.mubr.f32.gmra.mxu0 %v2418
    %v2536 = vpop.f32.mrf.mxu0
    %v2537 = vadd.f32 0.0, %v2536
    %v2538 = vpop.f32.mrf.mxu0
    %2539 = vmatprep.mubr.f32.mxu0 0.0
    %2540 = vmatmul.mubr.f32.gmra.mxu0 %v2423
    %v2541 = vpop.f32.mrf.mxu0
    %v2542 = vadd.f32 0.0, %v2541
    %v2543 = vpop.f32.mrf.mxu0
    %2544 = vmatprep.mubr.f32.mxu0 0.0
    %2545 = vmatmul.mubr.f32.gmra.mxu0 %v2428
    %v2546 = vpop.f32.mrf.mxu0
    %v2547 = vadd.f32 0.0, %v2546
    %v2548 = vpop.f32.mrf.mxu0
    %2549 = vmatprep.mubr.f32.mxu0 0.0
    %2550 = vmatmul.mubr.f32.gmra.mxu0 %v2433
    %v2551 = vpop.f32.mrf.mxu0
    %v2552 = vadd.f32 0.0, %v2551
    %v2553 = vpop.f32.mrf.mxu0
    %2554 = vdwg.mxu0
    %2555 = vmatprep.subr.mxu0 0.0
    %2556 = vmatpush1.msra.mxu0 %v2452
    %2557 = vmatprep.subr.mxu0 0.0
    %2558 = vmatpush1.msra.mxu0 %v2451
    %2559 = vmatprep.subr.mxu0 0.0
    %2560 = vmatpush1.msra.mxu0 %v2450
    %2561 = vmatprep.subr.mxu0 0.0
    %2562 = vmatpush1.msra.mxu0 %v2449
    %2563 = vmatprep.subr.mxu0 0.0
    %2564 = vmatpush1.msra.mxu0 %v2448
    %2565 = vmatprep.subr.mxu0 0.0
    %2566 = vmatpush1.msra.mxu0 %v2447
    %2567 = vmatprep.subr.mxu0 0.0
    %2568 = vmatpush1.msra.mxu0 %v2446
    %2569 = vmatprep.subr.mxu0 0.0
    %2570 = vmatpush1.msra.mxu0 %v2445
    %2571 = vmatprep.subr.mxu0 0.0
    %2572 = vmatpush1.msra.mxu0 %v2444
    %2573 = vmatprep.subr.mxu0 0.0
    %2574 = vmatpush1.msra.mxu0 %v2443
    %2575 = vmatprep.subr.mxu0 0.0
    %2576 = vmatpush1.msra.mxu0 %v2442
    %2577 = vmatprep.subr.mxu0 0.0
    %2578 = vmatpush1.msra.mxu0 %v2441
    %2579 = vmatprep.subr.mxu0 0.0
    %2580 = vmatpush1.msra.mxu0 %v2440
    %2581 = vmatprep.subr.mxu0 0.0
    %2582 = vmatpush1.msra.mxu0 %v2439
    %2583 = vmatprep.subr.mxu0 0.0
    %2584 = vmatpush1.msra.mxu0 %v2438
    %2585 = vmatprep.subr.mxu0 0.0
    %2586 = vmatpush1.msra.mxu0 %v2437
    %2587 = vmatprep.subr.mxu0 0.0
    %2588 = vmatpush2.msra.mxu0 0.0
    %2589 = vmatprep.subr.mxu0 0.0
    %2590 = vmatpush2.msra.mxu0 0.0
    %2591 = vmatprep.subr.mxu0 0.0
    %2592 = vmatpush2.msra.mxu0 0.0
    %2593 = vmatprep.subr.mxu0 0.0
    %2594 = vmatpush2.msra.mxu0 0.0
    %2595 = vmatprep.subr.mxu0 0.0
    %2596 = vmatpush2.msra.mxu0 0.0
    %2597 = vmatprep.subr.mxu0 0.0
    %2598 = vmatpush2.msra.mxu0 0.0
    %2599 = vmatprep.subr.mxu0 0.0
    %2600 = vmatpush2.msra.mxu0 0.0
    %2601 = vmatprep.subr.mxu0 0.0
    %2602 = vmatpush2.msra.mxu0 0.0
    %2603 = vmatprep.subr.mxu0 0.0
    %2604 = vmatpush2.msra.mxu0 0.0
    %2605 = vmatprep.subr.mxu0 0.0
    %2606 = vmatpush2.msra.mxu0 0.0
    %2607 = vmatprep.subr.mxu0 0.0
    %2608 = vmatpush2.msra.mxu0 0.0
    %2609 = vmatprep.subr.mxu0 0.0
    %2610 = vmatpush2.msra.mxu0 0.0
    %2611 = vmatprep.subr.mxu0 0.0
    %2612 = vmatpush2.msra.mxu0 0.0
    %2613 = vmatprep.subr.mxu0 0.0
    %2614 = vmatpush2.msra.mxu0 0.0
    %2615 = vmatprep.subr.mxu0 0.0
    %2616 = vmatpush2.msra.mxu0 0.0
    %2617 = vmatprep.subr.mxu0 0.0
    %2618 = vmatpush2.msra.mxu0 0.0
    %2619 = vmatprep.mubr.f32.mxu0 0.0
    %2620 = vmatmul.mubr.f32.gmra.mxu0 %v2333
    %v2621 = vpop.f32.mrf.mxu0
    %v2622 = vadd.f32 %v2537, %v2621
    %v2623 = vpop.f32.mrf.mxu0
    %2624 = vmatprep.mubr.f32.mxu0 0.0
    %2625 = vmatmul.mubr.f32.gmra.mxu0 %v2338
    %v2626 = vpop.f32.mrf.mxu0
    %v2627 = vadd.f32 %v2542, %v2626
    %v2628 = vpop.f32.mrf.mxu0
    %2629 = vmatprep.mubr.f32.mxu0 0.0
    %2630 = vmatmul.mubr.f32.gmra.mxu0 %v2343
    %v2631 = vpop.f32.mrf.mxu0
    %v2632 = vadd.f32 %v2547, %v2631
    %v2633 = vpop.f32.mrf.mxu0
    %2634 = vmatprep.mubr.f32.mxu0 0.0
    %2635 = vmatmul.mubr.f32.gmra.mxu0 %v2348
    %v2636 = vpop.f32.mrf.mxu0
    %v2637 = vadd.f32 %v2552, %v2636
    %v2638 = vpop.f32.mrf.mxu0
    %2639 = vdwg.mxu0
    %s2640 = scalar_lea.vmem [#allocation4], 12
    %v2641 = vld [vmem:[%s2640] sm:$0x1]
    %v2643 = vlaneseq
    %v2644 = vshrl.u32 %v2643, 7
    %v2645 = vsub.s32 0, %v2644
    %v2646 = vrot.slane %v2641, %v2645
    %v2648 = vadd.f32 %v2622, %v2646
    %v2649 = vadd.f32 %v2627, %v2646
    %v2650 = vadd.f32 %v2632, %v2646
    %v2651 = vadd.f32 %v2637, %v2646
    %v2652 = vmax.f32 %v2648, 0.0
    %v2653 = vmax.f32 %v2649, 0.0
    %v2654 = vmax.f32 %v2650, 0.0
    %v2655 = vmax.f32 %v2651, 0.0
    %s2656 = scalar_lea.vmem [#allocation2], 2048
    %v2657 = vld [vmem:[%s2656] sm:$0xff]
    %v2658 = vld [vmem:[%s2656 + $0x8] sm:$0xff]
    %v2659 = vld [vmem:[%s2656 + $0x10] sm:$0xff]
    %v2660 = vld [vmem:[%s2656 + $0x18] sm:$0xff]
    %v2661 = vld [vmem:[%s2656 + $0x20] sm:$0xff]
    %v2662 = vld [vmem:[%s2656 + $0x28] sm:$0xff]
    %v2663 = vld [vmem:[%s2656 + $0x30] sm:$0xff]
    %v2664 = vld [vmem:[%s2656 + $0x38] sm:$0xff]
    %v2665 = vld [vmem:[%s2656 + $0x40] sm:$0xff]
    %v2666 = vld [vmem:[%s2656 + $0x48] sm:$0xff]
    %v2667 = vld [vmem:[%s2656 + $0x50] sm:$0xff]
    %v2668 = vld [vmem:[%s2656 + $0x58] sm:$0xff]
    %v2669 = vld [vmem:[%s2656 + $0x60] sm:$0xff]
    %v2670 = vld [vmem:[%s2656 + $0x68] sm:$0xff]
    %v2671 = vld [vmem:[%s2656 + $0x70] sm:$0xff]
    %v2672 = vld [vmem:[%s2656 + $0x78] sm:$0xff]
    %s2673 = scalar_lea.vmem [#allocation4], 13
    %v2674 = vld [vmem:[%s2673] sm:$0x1]
    %v2676 = vlaneseq
    %v2677 = vshrl.u32 %v2676, 7
    %v2678 = vsub.s32 0, %v2677
    %v2679 = vrot.slane %v2674, %v2678
    %2681 = vmatprep.subr.mxu0 0.0
    %2682 = vmatpush1.msra.mxu0 %v2672
    %2683 = vmatprep.subr.mxu0 0.0
    %2684 = vmatpush1.msra.mxu0 %v2671
    %2685 = vmatprep.subr.mxu0 0.0
    %2686 = vmatpush1.msra.mxu0 %v2670
    %2687 = vmatprep.subr.mxu0 0.0
    %2688 = vmatpush1.msra.mxu0 %v2669
    %2689 = vmatprep.subr.mxu0 0.0
    %2690 = vmatpush1.msra.mxu0 %v2668
    %2691 = vmatprep.subr.mxu0 0.0
    %2692 = vmatpush1.msra.mxu0 %v2667
    %2693 = vmatprep.subr.mxu0 0.0
    %2694 = vmatpush1.msra.mxu0 %v2666
    %2695 = vmatprep.subr.mxu0 0.0
    %2696 = vmatpush1.msra.mxu0 %v2665
    %2697 = vmatprep.subr.mxu0 0.0
    %2698 = vmatpush1.msra.mxu0 %v2664
    %2699 = vmatprep.subr.mxu0 0.0
    %2700 = vmatpush1.msra.mxu0 %v2663
    %2701 = vmatprep.subr.mxu0 0.0
    %2702 = vmatpush1.msra.mxu0 %v2662
    %2703 = vmatprep.subr.mxu0 0.0
    %2704 = vmatpush1.msra.mxu0 %v2661
    %2705 = vmatprep.subr.mxu0 0.0
    %2706 = vmatpush1.msra.mxu0 %v2660
    %2707 = vmatprep.subr.mxu0 0.0
    %2708 = vmatpush1.msra.mxu0 %v2659
    %2709 = vmatprep.subr.mxu0 0.0
    %2710 = vmatpush1.msra.mxu0 %v2658
    %2711 = vmatprep.subr.mxu0 0.0
    %2712 = vmatpush1.msra.mxu0 %v2657
    %2713 = vmatprep.subr.mxu0 0.0
    %2714 = vmatpush2.msra.mxu0 0.0
    %2715 = vmatprep.subr.mxu0 0.0
    %2716 = vmatpush2.msra.mxu0 0.0
    %2717 = vmatprep.subr.mxu0 0.0
    %2718 = vmatpush2.msra.mxu0 0.0
    %2719 = vmatprep.subr.mxu0 0.0
    %2720 = vmatpush2.msra.mxu0 0.0
    %2721 = vmatprep.subr.mxu0 0.0
    %2722 = vmatpush2.msra.mxu0 0.0
    %2723 = vmatprep.subr.mxu0 0.0
    %2724 = vmatpush2.msra.mxu0 0.0
    %2725 = vmatprep.subr.mxu0 0.0
    %2726 = vmatpush2.msra.mxu0 0.0
    %2727 = vmatprep.subr.mxu0 0.0
    %2728 = vmatpush2.msra.mxu0 0.0
    %2729 = vmatprep.subr.mxu0 0.0
    %2730 = vmatpush2.msra.mxu0 0.0
    %2731 = vmatprep.subr.mxu0 0.0
    %2732 = vmatpush2.msra.mxu0 0.0
    %2733 = vmatprep.subr.mxu0 0.0
    %2734 = vmatpush2.msra.mxu0 0.0
    %2735 = vmatprep.subr.mxu0 0.0
    %2736 = vmatpush2.msra.mxu0 0.0
    %2737 = vmatprep.subr.mxu0 0.0
    %2738 = vmatpush2.msra.mxu0 0.0
    %2739 = vmatprep.subr.mxu0 0.0
    %2740 = vmatpush2.msra.mxu0 0.0
    %2741 = vmatprep.subr.mxu0 0.0
    %2742 = vmatpush2.msra.mxu0 0.0
    %2743 = vmatprep.subr.mxu0 0.0
    %2744 = vmatpush2.msra.mxu0 0.0
    %2745 = vmatprep.mubr.f32.mxu0 0.0
    %2746 = vmatmul.mubr.f32.gmra.mxu0 %v2652
    %v2747 = vpop.f32.mrf.mxu0
    %v2748 = vadd.f32 %v2679, %v2747
    %v2749 = vpop.f32.mrf.mxu0
    %2750 = vmatprep.mubr.f32.mxu0 0.0
    %2751 = vmatmul.mubr.f32.gmra.mxu0 %v2653
    %v2752 = vpop.f32.mrf.mxu0
    %v2753 = vadd.f32 %v2679, %v2752
    %v2754 = vpop.f32.mrf.mxu0
    %2755 = vmatprep.mubr.f32.mxu0 0.0
    %2756 = vmatmul.mubr.f32.gmra.mxu0 %v2654
    %v2757 = vpop.f32.mrf.mxu0
    %v2758 = vadd.f32 %v2679, %v2757
    %v2759 = vpop.f32.mrf.mxu0
    %2760 = vmatprep.mubr.f32.mxu0 0.0
    %2761 = vmatmul.mubr.f32.gmra.mxu0 %v2655
    %v2762 = vpop.f32.mrf.mxu0
    %v2763 = vadd.f32 %v2679, %v2762
    %v2764 = vpop.f32.mrf.mxu0
    %2765 = vdwg.mxu0
    %2766 = vmatprep.subr.mxu0 0.0
    %2767 = vmatpush1.msra.mxu0 0.0
    %2768 = vmatprep.subr.mxu0 0.0
    %2769 = vmatpush1.msra.mxu0 0.0
    %2770 = vmatprep.subr.mxu0 0.0
    %2771 = vmatpush1.msra.mxu0 0.0
    %2772 = vmatprep.subr.mxu0 0.0
    %2773 = vmatpush1.msra.mxu0 0.0
    %2774 = vmatprep.subr.mxu0 0.0
    %2775 = vmatpush1.msra.mxu0 0.0
    %2776 = vmatprep.subr.mxu0 0.0
    %2777 = vmatpush1.msra.mxu0 0.0
    %2778 = vmatprep.subr.mxu0 0.0
    %2779 = vmatpush1.msra.mxu0 0.0
    %2780 = vmatprep.subr.mxu0 0.0
    %2781 = vmatpush1.msra.mxu0 0.0
    %2782 = vmatprep.subr.mxu0 0.0
    %2783 = vmatpush1.msra.mxu0 0.0
    %2784 = vmatprep.subr.mxu0 0.0
    %2785 = vmatpush1.msra.mxu0 0.0
    %2786 = vmatprep.subr.mxu0 0.0
    %2787 = vmatpush1.msra.mxu0 0.0
    %2788 = vmatprep.subr.mxu0 0.0
    %2789 = vmatpush1.msra.mxu0 0.0
    %2790 = vmatprep.subr.mxu0 0.0
    %2791 = vmatpush1.msra.mxu0 %v2763
    %2792 = vmatprep.subr.mxu0 0.0
    %2793 = vmatpush1.msra.mxu0 %v2758
    %2794 = vmatprep.subr.mxu0 0.0
    %2795 = vmatpush1.msra.mxu0 %v2753
    %2796 = vmatprep.subr.mxu0 0.0
    %2797 = vmatpush1.msra.mxu0 %v2748
    %2798 = vmatprep.subr.mxu0 0.0
    %2799 = vmatpush2.msra.mxu0 0.0
    %2800 = vmatprep.subr.mxu0 0.0
    %2801 = vmatpush2.msra.mxu0 0.0
    %2802 = vmatprep.subr.mxu0 0.0
    %2803 = vmatpush2.msra.mxu0 0.0
    %2804 = vmatprep.subr.mxu0 0.0
    %2805 = vmatpush2.msra.mxu0 0.0
    %2806 = vmatprep.subr.mxu0 0.0
    %2807 = vmatpush2.msra.mxu0 0.0
    %2808 = vmatprep.subr.mxu0 0.0
    %2809 = vmatpush2.msra.mxu0 0.0
    %2810 = vmatprep.subr.mxu0 0.0
    %2811 = vmatpush2.msra.mxu0 0.0
    %2812 = vmatprep.subr.mxu0 0.0
    %2813 = vmatpush2.msra.mxu0 0.0
    %2814 = vmatprep.subr.mxu0 0.0
    %2815 = vmatpush2.msra.mxu0 0.0
    %2816 = vmatprep.subr.mxu0 0.0
    %2817 = vmatpush2.msra.mxu0 0.0
    %2818 = vmatprep.subr.mxu0 0.0
    %2819 = vmatpush2.msra.mxu0 0.0
    %2820 = vmatprep.subr.mxu0 0.0
    %2821 = vmatpush2.msra.mxu0 0.0
    %2822 = vmatprep.subr.mxu0 0.0
    %2823 = vmatpush2.msra.mxu0 0.0
    %2824 = vmatprep.subr.mxu0 0.0
    %2825 = vmatpush2.msra.mxu0 0.0
    %2826 = vmatprep.subr.mxu0 0.0
    %2827 = vmatpush2.msra.mxu0 0.0
    %2828 = vmatprep.subr.mxu0 0.0
    %2829 = vmatpush2.msra.mxu0 0.0
    %2830 = vmatprep.mubr.f32.mxu0 0.0
    %2831 = vmatmul.mubr.f32.gmra.mxu0 %v1018
    %v2832 = vpop.f32.mrf.mxu0
    %v2833 = vadd.f32 0.0, %v2832
    %v2834 = vpop.f32.mrf.mxu0
    %2835 = vmatprep.mubr.f32.mxu0 0.0
    %2836 = vmatmul.mubr.f32.gmra.mxu0 %v1018
    %v2837 = vpop.f32.mrf.mxu0
    %v2838 = vadd.f32 0.0, %v2837
    %v2839 = vpop.f32.mrf.mxu0
    %2840 = vdwg.mxu0
    %s2841 = scalar_lea.vmem [#allocation2], 2176
    %v2842 = vld [vmem:[%s2841] sm:$0xff]
    %v2843 = vld [vmem:[%s2841 + $0x8] sm:$0xff]
    %v2844 = vld [vmem:[%s2841 + $0x10] sm:$0xff]
    %v2845 = vld [vmem:[%s2841 + $0x18] sm:$0xff]
    %v2846 = vld [vmem:[%s2841 + $0x20] sm:$0xff]
    %v2847 = vld [vmem:[%s2841 + $0x28] sm:$0xff]
    %v2848 = vld [vmem:[%s2841 + $0x30] sm:$0xff]
    %v2849 = vld [vmem:[%s2841 + $0x38] sm:$0xff]
    %v2850 = vld [vmem:[%s2841 + $0x40] sm:$0xff]
    %v2851 = vld [vmem:[%s2841 + $0x48] sm:$0xff]
    %v2852 = vld [vmem:[%s2841 + $0x50] sm:$0xff]
    %v2853 = vld [vmem:[%s2841 + $0x58] sm:$0xff]
    %v2854 = vld [vmem:[%s2841 + $0x60] sm:$0xff]
    %v2855 = vld [vmem:[%s2841 + $0x68] sm:$0xff]
    %v2856 = vld [vmem:[%s2841 + $0x70] sm:$0xff]
    %v2857 = vld [vmem:[%s2841 + $0x78] sm:$0xff]
    %s2858 = scalar_lea.vmem [#allocation2], 2304
    %v2859 = vld [vmem:[%s2858] sm:$0xff]
    %v2860 = vld [vmem:[%s2858 + $0x8] sm:$0xff]
    %v2861 = vld [vmem:[%s2858 + $0x10] sm:$0xff]
    %v2862 = vld [vmem:[%s2858 + $0x18] sm:$0xff]
    %v2863 = vld [vmem:[%s2858 + $0x20] sm:$0xff]
    %v2864 = vld [vmem:[%s2858 + $0x28] sm:$0xff]
    %v2865 = vld [vmem:[%s2858 + $0x30] sm:$0xff]
    %v2866 = vld [vmem:[%s2858 + $0x38] sm:$0xff]
    %v2867 = vld [vmem:[%s2858 + $0x40] sm:$0xff]
    %v2868 = vld [vmem:[%s2858 + $0x48] sm:$0xff]
    %v2869 = vld [vmem:[%s2858 + $0x50] sm:$0xff]
    %v2870 = vld [vmem:[%s2858 + $0x58] sm:$0xff]
    %v2871 = vld [vmem:[%s2858 + $0x60] sm:$0xff]
    %v2872 = vld [vmem:[%s2858 + $0x68] sm:$0xff]
    %v2873 = vld [vmem:[%s2858 + $0x70] sm:$0xff]
    %v2874 = vld [vmem:[%s2858 + $0x78] sm:$0xff]
    %2875 = vmatprep.subr.mxu0 0.0
    %2876 = vmatpush1.msra.mxu0 %v2874
    %2877 = vmatprep.subr.mxu0 0.0
    %2878 = vmatpush1.msra.mxu0 %v2873
    %2879 = vmatprep.subr.mxu0 0.0
    %2880 = vmatpush1.msra.mxu0 %v2872
    %2881 = vmatprep.subr.mxu0 0.0
    %2882 = vmatpush1.msra.mxu0 %v2871
    %2883 = vmatprep.subr.mxu0 0.0
    %2884 = vmatpush1.msra.mxu0 %v2870
    %2885 = vmatprep.subr.mxu0 0.0
    %2886 = vmatpush1.msra.mxu0 %v2869
    %2887 = vmatprep.subr.mxu0 0.0
    %2888 = vmatpush1.msra.mxu0 %v2868
    %2889 = vmatprep.subr.mxu0 0.0
    %2890 = vmatpush1.msra.mxu0 %v2867
    %2891 = vmatprep.subr.mxu0 0.0
    %2892 = vmatpush1.msra.mxu0 %v2866
    %2893 = vmatprep.subr.mxu0 0.0
    %2894 = vmatpush1.msra.mxu0 %v2865
    %2895 = vmatprep.subr.mxu0 0.0
    %2896 = vmatpush1.msra.mxu0 %v2864
    %2897 = vmatprep.subr.mxu0 0.0
    %2898 = vmatpush1.msra.mxu0 %v2863
    %2899 = vmatprep.subr.mxu0 0.0
    %2900 = vmatpush1.msra.mxu0 %v2862
    %2901 = vmatprep.subr.mxu0 0.0
    %2902 = vmatpush1.msra.mxu0 %v2861
    %2903 = vmatprep.subr.mxu0 0.0
    %2904 = vmatpush1.msra.mxu0 %v2860
    %2905 = vmatprep.subr.mxu0 0.0
    %2906 = vmatpush1.msra.mxu0 %v2859
    %2907 = vmatprep.subr.mxu0 0.0
    %2908 = vmatpush2.msra.mxu0 0.0
    %2909 = vmatprep.subr.mxu0 0.0
    %2910 = vmatpush2.msra.mxu0 0.0
    %2911 = vmatprep.subr.mxu0 0.0
    %2912 = vmatpush2.msra.mxu0 0.0
    %2913 = vmatprep.subr.mxu0 0.0
    %2914 = vmatpush2.msra.mxu0 0.0
    %2915 = vmatprep.subr.mxu0 0.0
    %2916 = vmatpush2.msra.mxu0 0.0
    %2917 = vmatprep.subr.mxu0 0.0
    %2918 = vmatpush2.msra.mxu0 0.0
    %2919 = vmatprep.subr.mxu0 0.0
    %2920 = vmatpush2.msra.mxu0 0.0
    %2921 = vmatprep.subr.mxu0 0.0
    %2922 = vmatpush2.msra.mxu0 0.0
    %2923 = vmatprep.subr.mxu0 0.0
    %2924 = vmatpush2.msra.mxu0 0.0
    %2925 = vmatprep.subr.mxu0 0.0
    %2926 = vmatpush2.msra.mxu0 0.0
    %2927 = vmatprep.subr.mxu0 0.0
    %2928 = vmatpush2.msra.mxu0 0.0
    %2929 = vmatprep.subr.mxu0 0.0
    %2930 = vmatpush2.msra.mxu0 0.0
    %2931 = vmatprep.subr.mxu0 0.0
    %2932 = vmatpush2.msra.mxu0 0.0
    %2933 = vmatprep.subr.mxu0 0.0
    %2934 = vmatpush2.msra.mxu0 0.0
    %2935 = vmatprep.subr.mxu0 0.0
    %2936 = vmatpush2.msra.mxu0 0.0
    %2937 = vmatprep.subr.mxu0 0.0
    %2938 = vmatpush2.msra.mxu0 0.0
    %2939 = vmatprep.mubr.f32.mxu0 0.0
    %2940 = vmatmul.mubr.f32.gmra.mxu0 %v2833
    %v2941 = vpop.f32.mrf.mxu0
    %v2942 = vadd.f32 0.0, %v2941
    %v2943 = vpop.f32.mrf.mxu0
    %2944 = vmatprep.mubr.f32.mxu0 0.0
    %2945 = vmatmul.mubr.f32.gmra.mxu0 %v2838
    %v2946 = vpop.f32.mrf.mxu0
    %v2947 = vadd.f32 0.0, %v2946
    %v2948 = vpop.f32.mrf.mxu0
    %2949 = vdwg.mxu0
    %2950 = vmatprep.subr.mxu0 0.0
    %2951 = vmatpush1.msra.mxu0 %v2857
    %2952 = vmatprep.subr.mxu0 0.0
    %2953 = vmatpush1.msra.mxu0 %v2856
    %2954 = vmatprep.subr.mxu0 0.0
    %2955 = vmatpush1.msra.mxu0 %v2855
    %2956 = vmatprep.subr.mxu0 0.0
    %2957 = vmatpush1.msra.mxu0 %v2854
    %2958 = vmatprep.subr.mxu0 0.0
    %2959 = vmatpush1.msra.mxu0 %v2853
    %2960 = vmatprep.subr.mxu0 0.0
    %2961 = vmatpush1.msra.mxu0 %v2852
    %2962 = vmatprep.subr.mxu0 0.0
    %2963 = vmatpush1.msra.mxu0 %v2851
    %2964 = vmatprep.subr.mxu0 0.0
    %2965 = vmatpush1.msra.mxu0 %v2850
    %2966 = vmatprep.subr.mxu0 0.0
    %2967 = vmatpush1.msra.mxu0 %v2849
    %2968 = vmatprep.subr.mxu0 0.0
    %2969 = vmatpush1.msra.mxu0 %v2848
    %2970 = vmatprep.subr.mxu0 0.0
    %2971 = vmatpush1.msra.mxu0 %v2847
    %2972 = vmatprep.subr.mxu0 0.0
    %2973 = vmatpush1.msra.mxu0 %v2846
    %2974 = vmatprep.subr.mxu0 0.0
    %2975 = vmatpush1.msra.mxu0 %v2845
    %2976 = vmatprep.subr.mxu0 0.0
    %2977 = vmatpush1.msra.mxu0 %v2844
    %2978 = vmatprep.subr.mxu0 0.0
    %2979 = vmatpush1.msra.mxu0 %v2843
    %2980 = vmatprep.subr.mxu0 0.0
    %2981 = vmatpush1.msra.mxu0 %v2842
    %2982 = vmatprep.subr.mxu0 0.0
    %2983 = vmatpush2.msra.mxu0 0.0
    %2984 = vmatprep.subr.mxu0 0.0
    %2985 = vmatpush2.msra.mxu0 0.0
    %2986 = vmatprep.subr.mxu0 0.0
    %2987 = vmatpush2.msra.mxu0 0.0
    %2988 = vmatprep.subr.mxu0 0.0
    %2989 = vmatpush2.msra.mxu0 0.0
    %2990 = vmatprep.subr.mxu0 0.0
    %2991 = vmatpush2.msra.mxu0 0.0
    %2992 = vmatprep.subr.mxu0 0.0
    %2993 = vmatpush2.msra.mxu0 0.0
    %2994 = vmatprep.subr.mxu0 0.0
    %2995 = vmatpush2.msra.mxu0 0.0
    %2996 = vmatprep.subr.mxu0 0.0
    %2997 = vmatpush2.msra.mxu0 0.0
    %2998 = vmatprep.subr.mxu0 0.0
    %2999 = vmatpush2.msra.mxu0 0.0
    %3000 = vmatprep.subr.mxu0 0.0
    %3001 = vmatpush2.msra.mxu0 0.0
    %3002 = vmatprep.subr.mxu0 0.0
    %3003 = vmatpush2.msra.mxu0 0.0
    %3004 = vmatprep.subr.mxu0 0.0
    %3005 = vmatpush2.msra.mxu0 0.0
    %3006 = vmatprep.subr.mxu0 0.0
    %3007 = vmatpush2.msra.mxu0 0.0
    %3008 = vmatprep.subr.mxu0 0.0
    %3009 = vmatpush2.msra.mxu0 0.0
    %3010 = vmatprep.subr.mxu0 0.0
    %3011 = vmatpush2.msra.mxu0 0.0
    %3012 = vmatprep.subr.mxu0 0.0
    %3013 = vmatpush2.msra.mxu0 0.0
    %3014 = vmatprep.mubr.f32.mxu0 0.0
    %3015 = vmatmul.mubr.f32.gmra.mxu0 %v2264
    %v3016 = vpop.f32.mrf.mxu0
    %v3017 = vadd.f32 %v2942, %v3016
    %v3018 = vpop.f32.mrf.mxu0
    %3019 = vmatprep.mubr.f32.mxu0 0.0
    %3020 = vmatmul.mubr.f32.gmra.mxu0 %v2265
    %v3021 = vpop.f32.mrf.mxu0
    %v3022 = vadd.f32 %v2947, %v3021
    %v3023 = vpop.f32.mrf.mxu0
    %3024 = vdwg.mxu0
    %s3025 = scalar_lea.vmem [#allocation4], 14
    %v3026 = vld [vmem:[%s3025] sm:$0x1]
    %v3028 = vlaneseq
    %v3029 = vshrl.u32 %v3028, 7
    %v3030 = vsub.s32 0, %v3029
    %v3031 = vrot.slane %v3026, %v3030
    %v3033 = vadd.f32 %v3017, %v3031
    %v3034 = vadd.f32 %v3022, %v3031
    %v3035 = vmax.f32 %v3033, 0.0
    %v3036 = vmax.f32 %v3034, 0.0
    %s3037 = scalar_lea.vmem [#allocation2], 2432
    %v3038 = vld [vmem:[%s3037] sm:$0xff]
    %v3039 = vld [vmem:[%s3037 + $0x8] sm:$0xff]
    %v3040 = vld [vmem:[%s3037 + $0x10] sm:$0xff]
    %v3041 = vld [vmem:[%s3037 + $0x18] sm:$0xff]
    %v3042 = vld [vmem:[%s3037 + $0x20] sm:$0xff]
    %v3043 = vld [vmem:[%s3037 + $0x28] sm:$0xff]
    %v3044 = vld [vmem:[%s3037 + $0x30] sm:$0xff]
    %v3045 = vld [vmem:[%s3037 + $0x38] sm:$0xff]
    %v3046 = vld [vmem:[%s3037 + $0x40] sm:$0xff]
    %v3047 = vld [vmem:[%s3037 + $0x48] sm:$0xff]
    %v3048 = vld [vmem:[%s3037 + $0x50] sm:$0xff]
    %v3049 = vld [vmem:[%s3037 + $0x58] sm:$0xff]
    %v3050 = vld [vmem:[%s3037 + $0x60] sm:$0xff]
    %v3051 = vld [vmem:[%s3037 + $0x68] sm:$0xff]
    %v3052 = vld [vmem:[%s3037 + $0x70] sm:$0xff]
    %v3053 = vld [vmem:[%s3037 + $0x78] sm:$0xff]
    %s3054 = scalar_lea.vmem [#allocation4], 15
    %v3055 = vld [vmem:[%s3054] sm:$0x1]
    %v3057 = vlaneseq
    %v3058 = vshrl.u32 %v3057, 7
    %v3059 = vsub.s32 0, %v3058
    %v3060 = vrot.slane %v3055, %v3059
    %3062 = vmatprep.subr.mxu0 0.0
    %3063 = vmatpush1.msra.mxu0 %v3053
    %3064 = vmatprep.subr.mxu0 0.0
    %3065 = vmatpush1.msra.mxu0 %v3052
    %3066 = vmatprep.subr.mxu0 0.0
    %3067 = vmatpush1.msra.mxu0 %v3051
    %3068 = vmatprep.subr.mxu0 0.0
    %3069 = vmatpush1.msra.mxu0 %v3050
    %3070 = vmatprep.subr.mxu0 0.0
    %3071 = vmatpush1.msra.mxu0 %v3049
    %3072 = vmatprep.subr.mxu0 0.0
    %3073 = vmatpush1.msra.mxu0 %v3048
    %3074 = vmatprep.subr.mxu0 0.0
    %3075 = vmatpush1.msra.mxu0 %v3047
    %3076 = vmatprep.subr.mxu0 0.0
    %3077 = vmatpush1.msra.mxu0 %v3046
    %3078 = vmatprep.subr.mxu0 0.0
    %3079 = vmatpush1.msra.mxu0 %v3045
    %3080 = vmatprep.subr.mxu0 0.0
    %3081 = vmatpush1.msra.mxu0 %v3044
    %3082 = vmatprep.subr.mxu0 0.0
    %3083 = vmatpush1.msra.mxu0 %v3043
    %3084 = vmatprep.subr.mxu0 0.0
    %3085 = vmatpush1.msra.mxu0 %v3042
    %3086 = vmatprep.subr.mxu0 0.0
    %3087 = vmatpush1.msra.mxu0 %v3041
    %3088 = vmatprep.subr.mxu0 0.0
    %3089 = vmatpush1.msra.mxu0 %v3040
    %3090 = vmatprep.subr.mxu0 0.0
    %3091 = vmatpush1.msra.mxu0 %v3039
    %3092 = vmatprep.subr.mxu0 0.0
    %3093 = vmatpush1.msra.mxu0 %v3038
    %3094 = vmatprep.subr.mxu0 0.0
    %3095 = vmatpush2.msra.mxu0 0.0
    %3096 = vmatprep.subr.mxu0 0.0
    %3097 = vmatpush2.msra.mxu0 0.0
    %3098 = vmatprep.subr.mxu0 0.0
    %3099 = vmatpush2.msra.mxu0 0.0
    %3100 = vmatprep.subr.mxu0 0.0
    %3101 = vmatpush2.msra.mxu0 0.0
    %3102 = vmatprep.subr.mxu0 0.0
    %3103 = vmatpush2.msra.mxu0 0.0
    %3104 = vmatprep.subr.mxu0 0.0
    %3105 = vmatpush2.msra.mxu0 0.0
    %3106 = vmatprep.subr.mxu0 0.0
    %3107 = vmatpush2.msra.mxu0 0.0
    %3108 = vmatprep.subr.mxu0 0.0
    %3109 = vmatpush2.msra.mxu0 0.0
    %3110 = vmatprep.subr.mxu0 0.0
    %3111 = vmatpush2.msra.mxu0 0.0
    %3112 = vmatprep.subr.mxu0 0.0
    %3113 = vmatpush2.msra.mxu0 0.0
    %3114 = vmatprep.subr.mxu0 0.0
    %3115 = vmatpush2.msra.mxu0 0.0
    %3116 = vmatprep.subr.mxu0 0.0
    %3117 = vmatpush2.msra.mxu0 0.0
    %3118 = vmatprep.subr.mxu0 0.0
    %3119 = vmatpush2.msra.mxu0 0.0
    %3120 = vmatprep.subr.mxu0 0.0
    %3121 = vmatpush2.msra.mxu0 0.0
    %3122 = vmatprep.subr.mxu0 0.0
    %3123 = vmatpush2.msra.mxu0 0.0
    %3124 = vmatprep.subr.mxu0 0.0
    %3125 = vmatpush2.msra.mxu0 0.0
    %3126 = vmatprep.mubr.f32.mxu0 0.0
    %3127 = vmatmul.mubr.f32.gmra.mxu0 %v3035
    %v3128 = vpop.f32.mrf.mxu0
    %v3129 = vadd.f32 %v3060, %v3128
    %v3130 = vpop.f32.mrf.mxu0
    %3131 = vmatprep.mubr.f32.mxu0 0.0
    %3132 = vmatmul.mubr.f32.gmra.mxu0 %v3036
    %v3133 = vpop.f32.mrf.mxu0
    %v3134 = vadd.f32 %v3060, %v3133
    %v3135 = vpop.f32.mrf.mxu0
    %3136 = vdwg.mxu0
    %s3137 = scalar_lea.vmem [#allocation2], 2560
    %v3138 = vld [vmem:[%s3137] sm:$0xff]
    %v3139 = vld [vmem:[%s3137 + $0x8] sm:$0xff]
    %v3140 = vld [vmem:[%s3137 + $0x10] sm:$0xff]
    %v3141 = vld [vmem:[%s3137 + $0x18] sm:$0xff]
    %v3142 = vld [vmem:[%s3137 + $0x20] sm:$0xff]
    %v3143 = vld [vmem:[%s3137 + $0x28] sm:$0xff]
    %v3144 = vld [vmem:[%s3137 + $0x30] sm:$0xff]
    %v3145 = vld [vmem:[%s3137 + $0x38] sm:$0xff]
    %v3146 = vld [vmem:[%s3137 + $0x40] sm:$0xff]
    %v3147 = vld [vmem:[%s3137 + $0x48] sm:$0xff]
    %v3148 = vld [vmem:[%s3137 + $0x50] sm:$0xff]
    %v3149 = vld [vmem:[%s3137 + $0x58] sm:$0xff]
    %v3150 = vld [vmem:[%s3137 + $0x60] sm:$0xff]
    %v3151 = vld [vmem:[%s3137 + $0x68] sm:$0xff]
    %v3152 = vld [vmem:[%s3137 + $0x70] sm:$0xff]
    %v3153 = vld [vmem:[%s3137 + $0x78] sm:$0xff]
    %s3154 = scalar_lea.vmem [#allocation4], 16
    %v3155 = vld [vmem:[%s3154] sm:$0x1]
    %v3157 = vlaneseq
    %v3158 = vshrl.u32 %v3157, 7
    %v3159 = vsub.s32 0, %v3158
    %v3160 = vrot.slane %v3155, %v3159
    %3162 = vmatprep.subr.mxu0 0.0
    %3163 = vmatpush1.msra.mxu0 %v3153
    %3164 = vmatprep.subr.mxu0 0.0
    %3165 = vmatpush1.msra.mxu0 %v3152
    %3166 = vmatprep.subr.mxu0 0.0
    %3167 = vmatpush1.msra.mxu0 %v3151
    %3168 = vmatprep.subr.mxu0 0.0
    %3169 = vmatpush1.msra.mxu0 %v3150
    %3170 = vmatprep.subr.mxu0 0.0
    %3171 = vmatpush1.msra.mxu0 %v3149
    %3172 = vmatprep.subr.mxu0 0.0
    %3173 = vmatpush1.msra.mxu0 %v3148
    %3174 = vmatprep.subr.mxu0 0.0
    %3175 = vmatpush1.msra.mxu0 %v3147
    %3176 = vmatprep.subr.mxu0 0.0
    %3177 = vmatpush1.msra.mxu0 %v3146
    %3178 = vmatprep.subr.mxu0 0.0
    %3179 = vmatpush1.msra.mxu0 %v3145
    %3180 = vmatprep.subr.mxu0 0.0
    %3181 = vmatpush1.msra.mxu0 %v3144
    %3182 = vmatprep.subr.mxu0 0.0
    %3183 = vmatpush1.msra.mxu0 %v3143
    %3184 = vmatprep.subr.mxu0 0.0
    %3185 = vmatpush1.msra.mxu0 %v3142
    %3186 = vmatprep.subr.mxu0 0.0
    %3187 = vmatpush1.msra.mxu0 %v3141
    %3188 = vmatprep.subr.mxu0 0.0
    %3189 = vmatpush1.msra.mxu0 %v3140
    %3190 = vmatprep.subr.mxu0 0.0
    %3191 = vmatpush1.msra.mxu0 %v3139
    %3192 = vmatprep.subr.mxu0 0.0
    %3193 = vmatpush1.msra.mxu0 %v3138
    %3194 = vmatprep.subr.mxu0 0.0
    %3195 = vmatpush2.msra.mxu0 0.0
    %3196 = vmatprep.subr.mxu0 0.0
    %3197 = vmatpush2.msra.mxu0 0.0
    %3198 = vmatprep.subr.mxu0 0.0
    %3199 = vmatpush2.msra.mxu0 0.0
    %3200 = vmatprep.subr.mxu0 0.0
    %3201 = vmatpush2.msra.mxu0 0.0
    %3202 = vmatprep.subr.mxu0 0.0
    %3203 = vmatpush2.msra.mxu0 0.0
    %3204 = vmatprep.subr.mxu0 0.0
    %3205 = vmatpush2.msra.mxu0 0.0
    %3206 = vmatprep.subr.mxu0 0.0
    %3207 = vmatpush2.msra.mxu0 0.0
    %3208 = vmatprep.subr.mxu0 0.0
    %3209 = vmatpush2.msra.mxu0 0.0
    %3210 = vmatprep.subr.mxu0 0.0
    %3211 = vmatpush2.msra.mxu0 0.0
    %3212 = vmatprep.subr.mxu0 0.0
    %3213 = vmatpush2.msra.mxu0 0.0
    %3214 = vmatprep.subr.mxu0 0.0
    %3215 = vmatpush2.msra.mxu0 0.0
    %3216 = vmatprep.subr.mxu0 0.0
    %3217 = vmatpush2.msra.mxu0 0.0
    %3218 = vmatprep.subr.mxu0 0.0
    %3219 = vmatpush2.msra.mxu0 0.0
    %3220 = vmatprep.subr.mxu0 0.0
    %3221 = vmatpush2.msra.mxu0 0.0
    %3222 = vmatprep.subr.mxu0 0.0
    %3223 = vmatpush2.msra.mxu0 0.0
    %3224 = vmatprep.subr.mxu0 0.0
    %3225 = vmatpush2.msra.mxu0 0.0
    %3226 = vmatprep.mubr.f32.mxu0 0.0
    %3227 = vmatmul.mubr.f32.gmra.mxu0 %v3129
    %v3228 = vpop.f32.mrf.mxu0
    %v3229 = vadd.f32 %v3160, %v3228
    %v3230 = vpop.f32.mrf.mxu0
    %3231 = vmatprep.mubr.f32.mxu0 0.0
    %3232 = vmatmul.mubr.f32.gmra.mxu0 %v3134
    %v3233 = vpop.f32.mrf.mxu0
    %v3234 = vadd.f32 %v3160, %v3233
    %v3235 = vpop.f32.mrf.mxu0
    %3236 = vdwg.mxu0
    %v3237 = vmax.f32 %v3229, 0.0
    %v3238 = vmax.f32 %v3234, 0.0
    %s3239 = scalar_lea.vmem [#allocation2], 2688
    %v3240 = vld [vmem:[%s3239] sm:$0xff]
    %v3241 = vld [vmem:[%s3239 + $0x8] sm:$0xff]
    %v3242 = vld [vmem:[%s3239 + $0x10] sm:$0xff]
    %v3243 = vld [vmem:[%s3239 + $0x18] sm:$0xff]
    %v3244 = vld [vmem:[%s3239 + $0x20] sm:$0xff]
    %v3245 = vld [vmem:[%s3239 + $0x28] sm:$0xff]
    %v3246 = vld [vmem:[%s3239 + $0x30] sm:$0xff]
    %v3247 = vld [vmem:[%s3239 + $0x38] sm:$0xff]
    %v3248 = vld [vmem:[%s3239 + $0x40] sm:$0xff]
    %v3249 = vld [vmem:[%s3239 + $0x48] sm:$0xff]
    %v3250 = vld [vmem:[%s3239 + $0x50] sm:$0xff]
    %v3251 = vld [vmem:[%s3239 + $0x58] sm:$0xff]
    %v3252 = vld [vmem:[%s3239 + $0x60] sm:$0xff]
    %v3253 = vld [vmem:[%s3239 + $0x68] sm:$0xff]
    %v3254 = vld [vmem:[%s3239 + $0x70] sm:$0xff]
    %v3255 = vld [vmem:[%s3239 + $0x78] sm:$0xff]
    %s3256 = scalar_lea.vmem [#allocation4], 17
    %v3257 = vld [vmem:[%s3256] sm:$0x1]
    %v3259 = vlaneseq
    %v3260 = vshrl.u32 %v3259, 7
    %v3261 = vsub.s32 0, %v3260
    %v3262 = vrot.slane %v3257, %v3261
    %3264 = vmatprep.subr.mxu0 0.0
    %3265 = vmatpush1.msra.mxu0 %v3255
    %3266 = vmatprep.subr.mxu0 0.0
    %3267 = vmatpush1.msra.mxu0 %v3254
    %3268 = vmatprep.subr.mxu0 0.0
    %3269 = vmatpush1.msra.mxu0 %v3253
    %3270 = vmatprep.subr.mxu0 0.0
    %3271 = vmatpush1.msra.mxu0 %v3252
    %3272 = vmatprep.subr.mxu0 0.0
    %3273 = vmatpush1.msra.mxu0 %v3251
    %3274 = vmatprep.subr.mxu0 0.0
    %3275 = vmatpush1.msra.mxu0 %v3250
    %3276 = vmatprep.subr.mxu0 0.0
    %3277 = vmatpush1.msra.mxu0 %v3249
    %3278 = vmatprep.subr.mxu0 0.0
    %3279 = vmatpush1.msra.mxu0 %v3248
    %3280 = vmatprep.subr.mxu0 0.0
    %3281 = vmatpush1.msra.mxu0 %v3247
    %3282 = vmatprep.subr.mxu0 0.0
    %3283 = vmatpush1.msra.mxu0 %v3246
    %3284 = vmatprep.subr.mxu0 0.0
    %3285 = vmatpush1.msra.mxu0 %v3245
    %3286 = vmatprep.subr.mxu0 0.0
    %3287 = vmatpush1.msra.mxu0 %v3244
    %3288 = vmatprep.subr.mxu0 0.0
    %3289 = vmatpush1.msra.mxu0 %v3243
    %3290 = vmatprep.subr.mxu0 0.0
    %3291 = vmatpush1.msra.mxu0 %v3242
    %3292 = vmatprep.subr.mxu0 0.0
    %3293 = vmatpush1.msra.mxu0 %v3241
    %3294 = vmatprep.subr.mxu0 0.0
    %3295 = vmatpush1.msra.mxu0 %v3240
    %3296 = vmatprep.subr.mxu0 0.0
    %3297 = vmatpush2.msra.mxu0 0.0
    %3298 = vmatprep.subr.mxu0 0.0
    %3299 = vmatpush2.msra.mxu0 0.0
    %3300 = vmatprep.subr.mxu0 0.0
    %3301 = vmatpush2.msra.mxu0 0.0
    %3302 = vmatprep.subr.mxu0 0.0
    %3303 = vmatpush2.msra.mxu0 0.0
    %3304 = vmatprep.subr.mxu0 0.0
    %3305 = vmatpush2.msra.mxu0 0.0
    %3306 = vmatprep.subr.mxu0 0.0
    %3307 = vmatpush2.msra.mxu0 0.0
    %3308 = vmatprep.subr.mxu0 0.0
    %3309 = vmatpush2.msra.mxu0 0.0
    %3310 = vmatprep.subr.mxu0 0.0
    %3311 = vmatpush2.msra.mxu0 0.0
    %3312 = vmatprep.subr.mxu0 0.0
    %3313 = vmatpush2.msra.mxu0 0.0
    %3314 = vmatprep.subr.mxu0 0.0
    %3315 = vmatpush2.msra.mxu0 0.0
    %3316 = vmatprep.subr.mxu0 0.0
    %3317 = vmatpush2.msra.mxu0 0.0
    %3318 = vmatprep.subr.mxu0 0.0
    %3319 = vmatpush2.msra.mxu0 0.0
    %3320 = vmatprep.subr.mxu0 0.0
    %3321 = vmatpush2.msra.mxu0 0.0
    %3322 = vmatprep.subr.mxu0 0.0
    %3323 = vmatpush2.msra.mxu0 0.0
    %3324 = vmatprep.subr.mxu0 0.0
    %3325 = vmatpush2.msra.mxu0 0.0
    %3326 = vmatprep.subr.mxu0 0.0
    %3327 = vmatpush2.msra.mxu0 0.0
    %3328 = vmatprep.mubr.f32.mxu0 0.0
    %3329 = vmatmul.mubr.f32.gmra.mxu0 %v3237
    %v3330 = vpop.f32.mrf.mxu0
    %v3331 = vadd.f32 %v3262, %v3330
    %v3332 = vpop.f32.mrf.mxu0
    %3333 = vmatprep.mubr.f32.mxu0 0.0
    %3334 = vmatmul.mubr.f32.gmra.mxu0 %v3238
    %v3335 = vpop.f32.mrf.mxu0
    %v3336 = vadd.f32 %v3262, %v3335
    %v3337 = vpop.f32.mrf.mxu0
    %3338 = vdwg.mxu0
    %3339 = vst [vmem:[%s10] sm:$0xff] %v3331
    %3340 = vst [vmem:[%s10 + $0x8] sm:$0xff] %v3336
    // Predicated region
    $region46: #{ddpm_forward.21} parent=1 // pred_check
      _
    $region47: #{ddpm_forward.21} parent=1 // pred_check_branch
      %3342 = sbr.rel (0) target = $region49
    $region48: #{ddpm_forward.21} parent=1 // pred_region
      _
    $region49: #{ddpm_forward.21} parent=1 // pred_fallthru
      _
    // Predicated region
    $region50: #{ddpm_forward.21} parent=1 // pred_check
      _
    $region51: #{ddpm_forward.21} parent=1 // pred_check_branch
      %3344 = sbr.rel (0) target = $region53
    $region52: #{ddpm_forward.21} parent=1 // pred_region
      _
    $region53: #{ddpm_forward.21} parent=1 // pred_fallthru
      _
    // Predicated region
    $region54: #{ddpm_forward.21} parent=1 // pred_check
      _
    $region55: #{ddpm_forward.21} parent=1 // pred_check_branch
      %3346 = sbr.rel (0) target = $region57
    $region56: #{ddpm_forward.21} parent=1 // pred_region
      _
    $region57: #{ddpm_forward.21} parent=1 // pred_fallthru
      _
    // Predicated region
    $region58: #{ddpm_forward.21} parent=1 // pred_check
      _
    $region59: #{ddpm_forward.21} parent=1 // pred_check_branch
      %3348 = sbr.rel (0) target = $region61
    $region60: #{ddpm_forward.21} parent=1 // pred_region
      _
    $region61: #{ddpm_forward.21} parent=1 // pred_fallthru
      _
    %3349 = vsyncpa [#allocation3], 1
    %3350 = vsyncpa [#allocation5], 1

</llo_original>
